<compile_context>
chip_gen: v6e
topology: v6e:2x2x1
jax: 0.10.0
libtpu: 0.0.40
codegen_flags: <defaults>
</compile_context>

<pallas_src>
import functools
import math

import jax
import jax.numpy as jnp
from jax.experimental import pallas as pl
from jax.experimental.pallas import tpu as pltpu

VMEM = pl.BlockSpec(memory_space=pltpu.MemorySpace.VMEM)


def sagpool_readout_kernel(a_ref, x_ref, seg_ref, segt_ref, seg3_ref,
                           w1_ref, b1_ref, w2_ref, b2_ref, w3_ref, b3_ref,
                           ws_ref, bs_ref,
                           m1_ref, c1_ref, m2_ref, c2_ref, m3_ref, c3_ref,
                           scores_ref, mse_ref, *, k_keep):
    f32 = jnp.float32
    bf16 = jnp.bfloat16
    NEG = f32(-1e30)
    BIG = f32(1e9)

    a = a_ref[...]                                   # (N, N) bf16
    seg = seg_ref[...]                               # (N, G) f32 one-hot
    seg_t = segt_ref[...]                            # (G, N) bf16
    seg3 = seg3_ref[...]                             # (G, N, 1) f32
    n, g = seg.shape
    d = w1_ref.shape[1]                              # out_dim

    # ---- conv1/conv2/conv3: h_k = relu(A @ (h_{k-1} @ W_k) + b_k) ------------
    # bf16 MXU operands, f32 accumulation, f32 bias/relu.
    def gconv(x_bf, w_r, b_r):
        xw = jnp.dot(x_bf, w_r[...], preferred_element_type=f32)
        h = jnp.dot(a, xw.astype(bf16), preferred_element_type=f32) + b_r[...]
        return jnp.maximum(h, 0.0)

    h1 = gconv(x_ref[...], w1_ref, b1_ref)
    h1b = h1.astype(bf16)
    h2 = gconv(h1b, w2_ref, b2_ref)
    h2b = h2.astype(bf16)
    h3 = gconv(h2b, w3_ref, b3_ref)
    h3b = h3.astype(bf16)

    # ---- score GraphConv on concat([h1,h2,h3]) without building the concat:
    # score = A @ (h1@Ws[0:d] + h2@Ws[d:2d] + h3@Ws[2d:3d]) + bs
    ws = ws_ref[...]                                 # (3d, 1) bf16
    s_pre = (jnp.dot(h1b, ws[0:d, :], preferred_element_type=f32)
             + jnp.dot(h2b, ws[d:2 * d, :], preferred_element_type=f32)
             + jnp.dot(h3b, ws[2 * d:3 * d, :], preferred_element_type=f32))
    score = jnp.dot(a, s_pre.astype(bf16), preferred_element_type=f32) + bs_ref[...]  # (N,1)

    # ---- in-kernel per-graph top-k: k_keep rounds of masked max --------------
    # Tie-break by lowest node index (matches lax.top_k / torch.topk).
    # TODO(synk): exact `mytopk(score, smallratio, ratio, batch_id)` source is
    # unavailable; using the standard SAGPool per-graph top-ceil(ratio*n) rule.
    seg_pos = seg > 0.0
    idx = jax.lax.broadcasted_iota(jnp.int32, (n, 1), 0).astype(f32)

    def pick_one(_, selected):
        masked = jnp.where(selected > 0.0, NEG, score)                           # (N,1)
        gmax = jnp.max(jnp.where(seg_pos, masked, NEG), axis=0, keepdims=True)   # (1,G)
        thr = jnp.sum(seg * gmax, axis=1, keepdims=True)                         # (N,1)
        cand = jnp.logical_and(masked >= thr, selected < 0.5)
        cand_idx = jnp.where(cand, idx, BIG)
        gmin = jnp.min(jnp.where(seg_pos, cand_idx, BIG), axis=0, keepdims=True)  # (1,G)
        pick = jnp.sum(seg * gmin, axis=1, keepdims=True)                        # (N,1)
        newly = jnp.logical_and(cand, idx == pick)
        return jnp.where(newly, 1.0, selected)

    mask_dis = jax.lax.fori_loop(0, k_keep, pick_one,
                                 jnp.zeros((n, 1), f32), unroll=True)            # (N,1) 0/1
    mask_com = 1.0 - mask_dis
    # Note: softmax(score) in COMSAGPool_b does not feed the returned outputs.

    # ---- dis/com readouts: per-graph mean and max of tanh(score)-weighted feats
    gate = jnp.tanh(score)                                                       # (N,1) f32
    counts_dis = jnp.dot(seg_t, mask_dis.astype(bf16), preferred_element_type=f32)  # (G,1)
    counts_com = jnp.dot(seg_t, mask_com.astype(bf16), preferred_element_type=f32)
    inv_dis = pl.reciprocal(jnp.maximum(counts_dis, 1.0), approx=True)
    inv_com = pl.reciprocal(jnp.maximum(counts_com, 1.0), approx=True)
    # hoisted 3-D membership masks (no relayout: seg3 arrives pre-shaped (G,N,1))
    sel3_dis = (seg3 * mask_dis[None, :, :]) > 0.0                               # (G,N,1)
    sel3_com = (seg3 * mask_com[None, :, :]) > 0.0

    mean_dis, mean_com, max_dis, max_com = [], [], [], []
    for h in (h1, h2, h3):                       # static unroll over 3 feature chunks
        w = h * gate                                                             # (N,d) f32
        wd = (w * mask_dis).astype(bf16)
        wc = (w * mask_com).astype(bf16)
        mean_dis.append(jnp.dot(seg_t, wd, preferred_element_type=f32) * inv_dis)  # (G,d)
        mean_com.append(jnp.dot(seg_t, wc, preferred_element_type=f32) * inv_com)
        md = jnp.max(jnp.where(sel3_dis, w[None, :, :], NEG), axis=1)            # (G,d)
        mc = jnp.max(jnp.where(sel3_com, w[None, :, :], NEG), axis=1)
        max_dis.append(jnp.where(counts_dis > 0.0, md, 0.0))
        max_com.append(jnp.where(counts_com > 0.0, mc, 0.0))

    # ---- MLPReadout (L=2) on hg = [means || maxes] without the 96-lane concat:
    # layer-1 weight is consumed as six d-row chunks (slice matmuls, same MXU work)
    m1 = m1_ref[...]                                                             # (6d, 3d) bf16

    def mlp(chunks):
        acc = None
        for i, ch in enumerate(chunks):
            prt = jnp.dot(ch.astype(bf16), m1[i * d:(i + 1) * d, :],
                          preferred_element_type=f32)
            acc = prt if acc is None else acc + prt
        hh = jnp.maximum(acc + c1_ref[...], 0.0)
        hh = jnp.maximum(jnp.dot(hh.astype(bf16), m2_ref[...],
                                 preferred_element_type=f32) + c2_ref[...], 0.0)
        return jnp.dot(hh.astype(bf16), m3_ref[...],
                       preferred_element_type=f32) + c3_ref[...]

    logits_dis = mlp(mean_dis + max_dis)                                         # (G, C)
    logits_com = mlp(mean_com + max_com)                                         # (G, C)

    scores_ref[...] = logits_dis

    # center-MSE on the "com" MLP outputs: mean((row_mean - x)^2)
    center = jnp.mean(logits_com, axis=0, keepdims=True)                         # (1, C)
    diff = center - logits_com
    sq = jnp.sum(jnp.sum(diff * diff, axis=1, keepdims=True), axis=0, keepdims=True)
    mse_ref[...] = sq / f32(logits_com.shape[0] * logits_com.shape[1])


def sagpool_readout_b(a_norm, x, seg, params, *, k_keep):
    (W1, b1, W2, b2, W3, b3, Ws, bs, M1, c1, M2, c2, M3, c3) = params
    g = seg.shape[1]
    n_classes = M3.shape[1]
    bf = lambda t: t.astype(jnp.bfloat16)
    seg_t = jnp.transpose(seg)            # (G, N) — tiny, built host/XLA-side
    seg3 = seg_t[:, :, None]              # (G, N, 1) — pre-shaped for the 3-D max mask

    kern = functools.partial(sagpool_readout_kernel, k_keep=k_keep)
    scores, mse = pl.pallas_call(
        kern,
        out_shape=(jax.ShapeDtypeStruct((g, n_classes), jnp.float32),
                   jax.ShapeDtypeStruct((1, 1), jnp.float32)),
        in_specs=[VMEM] * 19,
        out_specs=(VMEM, VMEM),
        compiler_params=pltpu.CompilerParams(vmem_limit_bytes=32 * 1024 * 1024),
    )(bf(a_norm), bf(x), seg, bf(seg_t), seg3,
      bf(W1), b1, bf(W2), b2, bf(W3), b3, bf(Ws), bs,
      bf(M1), c1, bf(M2), c2, bf(M3), c3)
    return scores, mse[0, 0]


# ------------------------------- main -------------------------------------- #

if __name__ == "__main__":
    key = jax.random.PRNGKey(0)

    in_dim, out_dim, n_classes = 16, 16, 3
    pool_ratio, smallratio = 0.5, 0.25
    nodes_per_graph = [8, 8]                    # uniform graph sizes
    G = len(nodes_per_graph)
    n_per = nodes_per_graph[0]
    N = G * n_per
    feat_dim = 3 * out_dim                      # 48

    # --- synthetic batched graph: two 8-node bidirectional rings ---
    adj = [[0.0] * N for _ in range(N)]
    start = 0
    for n_g in nodes_per_graph:
        for i in range(n_g):
            a = start + i
            b = start + (i + 1) % n_g
            adj[a][b] = 1.0
            adj[b][a] = 1.0
        start += n_g
    A = jnp.array(adj, jnp.float32)
    deg = jnp.sum(A, axis=1)
    dinv = 1.0 / jnp.sqrt(jnp.maximum(deg, 1.0))
    A_norm = A * dinv[:, None] * dinv[None, :]                 # D^-1/2 A D^-1/2

    batch_id = jnp.array(sum(([gg] * n for gg, n in enumerate(nodes_per_graph)), []))
    seg_onehot = jax.nn.one_hot(batch_id, G, dtype=jnp.float32)  # (N, G)

    # --- deterministic parameter init (glorot uniform, zero bias) ---
    def glorot(k, shape):
        lim = math.sqrt(6.0 / (shape[0] + shape[1]))
        return jax.random.uniform(k, shape, jnp.float32, -lim, lim)

    ks = jax.random.split(key, 9)
    W1, b1 = glorot(ks[0], (in_dim, out_dim)), jnp.zeros((1, out_dim), jnp.float32)
    W2, b2 = glorot(ks[1], (out_dim, out_dim)), jnp.zeros((1, out_dim), jnp.float32)
    W3, b3 = glorot(ks[2], (out_dim, out_dim)), jnp.zeros((1, out_dim), jnp.float32)
    Ws = glorot(ks[3], (feat_dim, 1))                           # score GraphConv weight
    bs = jnp.zeros((1, 1), jnp.float32)                         # real (zero-init) bias param

    d0 = 6 * out_dim                                            # 96
    M1, c1 = glorot(ks[4], (d0, d0 // 2)), jnp.zeros((1, d0 // 2), jnp.float32)
    M2, c2 = glorot(ks[5], (d0 // 2, d0 // 4)), jnp.zeros((1, d0 // 4), jnp.float32)
    M3, c3 = glorot(ks[6], (d0 // 4, n_classes)), jnp.zeros((1, n_classes), jnp.float32)
    X = jax.random.normal(ks[7], (N, in_dim), jnp.float32)

    k_g = max(1, int(math.ceil(pool_ratio * n_per)))            # per-graph keep count

    params = (W1, b1, W2, b2, W3, b3, Ws, bs, M1, c1, M2, c2, M3, c3)
    forward = jax.jit(functools.partial(sagpool_readout_b, k_keep=k_g))

    scores, mse_loss = forward(A_norm, X, seg_onehot, params)
    jax.block_until_ready((scores, mse_loss))
    print("KERNEL_OK")
</pallas_src>

<mosaic_0001>
module attributes {stable_mosaic.version = 11 : i64} {
  func.func @sagpool_readout_kernel(%arg0: memref<16x16xbf16, #tpu.memory_space<vmem>>, %arg1: memref<16x16xbf16, #tpu.memory_space<vmem>>, %arg2: memref<16x2xf32, #tpu.memory_space<vmem>>, %arg3: memref<2x16xbf16, #tpu.memory_space<vmem>>, %arg4: memref<2x16x1xf32, #tpu.memory_space<vmem>>, %arg5: memref<16x16xbf16, #tpu.memory_space<vmem>>, %arg6: memref<1x16xf32, #tpu.memory_space<vmem>>, %arg7: memref<16x16xbf16, #tpu.memory_space<vmem>>, %arg8: memref<1x16xf32, #tpu.memory_space<vmem>>, %arg9: memref<16x16xbf16, #tpu.memory_space<vmem>>, %arg10: memref<1x16xf32, #tpu.memory_space<vmem>>, %arg11: memref<48x1xbf16, #tpu.memory_space<vmem>>, %arg12: memref<1x1xf32, #tpu.memory_space<vmem>>, %arg13: memref<96x48xbf16, #tpu.memory_space<vmem>>, %arg14: memref<1x48xf32, #tpu.memory_space<vmem>>, %arg15: memref<48x24xbf16, #tpu.memory_space<vmem>>, %arg16: memref<1x24xf32, #tpu.memory_space<vmem>>, %arg17: memref<24x3xbf16, #tpu.memory_space<vmem>>, %arg18: memref<1x3xf32, #tpu.memory_space<vmem>>, %arg19: memref<2x3xf32, #tpu.memory_space<vmem>>, %arg20: memref<1x1xf32, #tpu.memory_space<vmem>>) attributes {dimension_semantics = [], scalar_prefetch = 0 : i64, scratch_operands = 0 : i64, tpu.core_type = #tpu.core_type<tc>} {
    %c0 = arith.constant 0 : index
    %c0_0 = arith.constant 0 : index
    %0 = vector.load %arg0[%c0, %c0_0] : memref<16x16xbf16, #tpu.memory_space<vmem>>, vector<16x16xbf16>
    %c0_1 = arith.constant 0 : index
    %c0_2 = arith.constant 0 : index
    %1 = vector.load %arg2[%c0_1, %c0_2] : memref<16x2xf32, #tpu.memory_space<vmem>>, vector<16x2xf32>
    %c0_3 = arith.constant 0 : index
    %c0_4 = arith.constant 0 : index
    %2 = vector.load %arg3[%c0_3, %c0_4] : memref<2x16xbf16, #tpu.memory_space<vmem>>, vector<2x16xbf16>
    %c0_5 = arith.constant 0 : index
    %c0_6 = arith.constant 0 : index
    %c0_7 = arith.constant 0 : index
    %3 = vector.load %arg4[%c0_5, %c0_6, %c0_7] : memref<2x16x1xf32, #tpu.memory_space<vmem>>, vector<2x16x1xf32>
    %c0_8 = arith.constant 0 : index
    %c0_9 = arith.constant 0 : index
    %4 = vector.load %arg1[%c0_8, %c0_9] : memref<16x16xbf16, #tpu.memory_space<vmem>>, vector<16x16xbf16>
    %c0_10 = arith.constant 0 : index
    %c0_11 = arith.constant 0 : index
    %5 = vector.load %arg5[%c0_10, %c0_11] : memref<16x16xbf16, #tpu.memory_space<vmem>>, vector<16x16xbf16>
    %cst = arith.constant dense<0.000000e+00> : vector<16x16xf32>
    %6 = tpu.matmul %4, %5, %cst {dimension_numbers = #tpu.dot_dimension_numbers<[1], [0], [0], [1], [0, 0, 1, 1], [], []>} : vector<16x16xbf16>, vector<16x16xbf16>, vector<16x16xf32> -> vector<16x16xf32>
    %7 = arith.truncf %6 : vector<16x16xf32> to vector<16x16xbf16>
    %cst_12 = arith.constant dense<0.000000e+00> : vector<16x16xf32>
    %8 = tpu.matmul %0, %7, %cst_12 {dimension_numbers = #tpu.dot_dimension_numbers<[1], [0], [0], [1], [0, 0, 1, 1], [], []>} : vector<16x16xbf16>, vector<16x16xbf16>, vector<16x16xf32> -> vector<16x16xf32>
    %c0_13 = arith.constant 0 : index
    %c0_14 = arith.constant 0 : index
    %9 = vector.load %arg6[%c0_13, %c0_14] : memref<1x16xf32, #tpu.memory_space<vmem>>, vector<1x16xf32>
    %10 = vector.broadcast %9 : vector<1x16xf32> to vector<16x16xf32>
    %11 = arith.addf %8, %10 : vector<16x16xf32>
    %cst_15 = arith.constant 0.000000e+00 : f32
    %12 = vector.broadcast %cst_15 : f32 to vector<16x16xf32>
    %13 = arith.maximumf %11, %12 : vector<16x16xf32>
    %14 = arith.truncf %13 : vector<16x16xf32> to vector<16x16xbf16>
    %c0_16 = arith.constant 0 : index
    %c0_17 = arith.constant 0 : index
    %15 = vector.load %arg7[%c0_16, %c0_17] : memref<16x16xbf16, #tpu.memory_space<vmem>>, vector<16x16xbf16>
    %cst_18 = arith.constant dense<0.000000e+00> : vector<16x16xf32>
    %16 = tpu.matmul %14, %15, %cst_18 {dimension_numbers = #tpu.dot_dimension_numbers<[1], [0], [0], [1], [0, 0, 1, 1], [], []>} : vector<16x16xbf16>, vector<16x16xbf16>, vector<16x16xf32> -> vector<16x16xf32>
    %17 = arith.truncf %16 : vector<16x16xf32> to vector<16x16xbf16>
    %cst_19 = arith.constant dense<0.000000e+00> : vector<16x16xf32>
    %18 = tpu.matmul %0, %17, %cst_19 {dimension_numbers = #tpu.dot_dimension_numbers<[1], [0], [0], [1], [0, 0, 1, 1], [], []>} : vector<16x16xbf16>, vector<16x16xbf16>, vector<16x16xf32> -> vector<16x16xf32>
    %c0_20 = arith.constant 0 : index
    %c0_21 = arith.constant 0 : index
    %19 = vector.load %arg8[%c0_20, %c0_21] : memref<1x16xf32, #tpu.memory_space<vmem>>, vector<1x16xf32>
    %20 = vector.broadcast %19 : vector<1x16xf32> to vector<16x16xf32>
    %21 = arith.addf %18, %20 : vector<16x16xf32>
    %cst_22 = arith.constant 0.000000e+00 : f32
    %22 = vector.broadcast %cst_22 : f32 to vector<16x16xf32>
    %23 = arith.maximumf %21, %22 : vector<16x16xf32>
    %24 = arith.truncf %23 : vector<16x16xf32> to vector<16x16xbf16>
    %c0_23 = arith.constant 0 : index
    %c0_24 = arith.constant 0 : index
    %25 = vector.load %arg9[%c0_23, %c0_24] : memref<16x16xbf16, #tpu.memory_space<vmem>>, vector<16x16xbf16>
    %cst_25 = arith.constant dense<0.000000e+00> : vector<16x16xf32>
    %26 = tpu.matmul %24, %25, %cst_25 {dimension_numbers = #tpu.dot_dimension_numbers<[1], [0], [0], [1], [0, 0, 1, 1], [], []>} : vector<16x16xbf16>, vector<16x16xbf16>, vector<16x16xf32> -> vector<16x16xf32>
    %27 = arith.truncf %26 : vector<16x16xf32> to vector<16x16xbf16>
    %cst_26 = arith.constant dense<0.000000e+00> : vector<16x16xf32>
    %28 = tpu.matmul %0, %27, %cst_26 {dimension_numbers = #tpu.dot_dimension_numbers<[1], [0], [0], [1], [0, 0, 1, 1], [], []>} : vector<16x16xbf16>, vector<16x16xbf16>, vector<16x16xf32> -> vector<16x16xf32>
    %c0_27 = arith.constant 0 : index
    %c0_28 = arith.constant 0 : index
    %29 = vector.load %arg10[%c0_27, %c0_28] : memref<1x16xf32, #tpu.memory_space<vmem>>, vector<1x16xf32>
    %30 = vector.broadcast %29 : vector<1x16xf32> to vector<16x16xf32>
    %31 = arith.addf %28, %30 : vector<16x16xf32>
    %cst_29 = arith.constant 0.000000e+00 : f32
    %32 = vector.broadcast %cst_29 : f32 to vector<16x16xf32>
    %33 = arith.maximumf %31, %32 : vector<16x16xf32>
    %34 = arith.truncf %33 : vector<16x16xf32> to vector<16x16xbf16>
    %c0_30 = arith.constant 0 : index
    %c0_31 = arith.constant 0 : index
    %35 = vector.load %arg11[%c0_30, %c0_31] : memref<48x1xbf16, #tpu.memory_space<vmem>>, vector<48x1xbf16>
    %36 = vector.extract_strided_slice %35 {offsets = [0, 0], sizes = [16, 1], strides = [1, 1]} : vector<48x1xbf16> to vector<16x1xbf16>
    %cst_32 = arith.constant dense<0.000000e+00> : vector<16x1xf32>
    %37 = tpu.matmul %14, %36, %cst_32 {dimension_numbers = #tpu.dot_dimension_numbers<[1], [0], [0], [1], [0, 0, 1, 1], [], []>} : vector<16x16xbf16>, vector<16x1xbf16>, vector<16x1xf32> -> vector<16x1xf32>
    %38 = vector.extract_strided_slice %35 {offsets = [16, 0], sizes = [16, 1], strides = [1, 1]} : vector<48x1xbf16> to vector<16x1xbf16>
    %cst_33 = arith.constant dense<0.000000e+00> : vector<16x1xf32>
    %39 = tpu.matmul %24, %38, %cst_33 {dimension_numbers = #tpu.dot_dimension_numbers<[1], [0], [0], [1], [0, 0, 1, 1], [], []>} : vector<16x16xbf16>, vector<16x1xbf16>, vector<16x1xf32> -> vector<16x1xf32>
    %40 = arith.addf %37, %39 : vector<16x1xf32>
    %41 = vector.extract_strided_slice %35 {offsets = [32, 0], sizes = [16, 1], strides = [1, 1]} : vector<48x1xbf16> to vector<16x1xbf16>
    %cst_34 = arith.constant dense<0.000000e+00> : vector<16x1xf32>
    %42 = tpu.matmul %34, %41, %cst_34 {dimension_numbers = #tpu.dot_dimension_numbers<[1], [0], [0], [1], [0, 0, 1, 1], [], []>} : vector<16x16xbf16>, vector<16x1xbf16>, vector<16x1xf32> -> vector<16x1xf32>
    %43 = arith.addf %40, %42 : vector<16x1xf32>
    %44 = arith.truncf %43 : vector<16x1xf32> to vector<16x1xbf16>
    %cst_35 = arith.constant dense<0.000000e+00> : vector<16x1xf32>
    %45 = tpu.matmul %0, %44, %cst_35 {dimension_numbers = #tpu.dot_dimension_numbers<[1], [0], [0], [1], [0, 0, 1, 1], [], []>} : vector<16x16xbf16>, vector<16x1xbf16>, vector<16x1xf32> -> vector<16x1xf32>
    %c0_36 = arith.constant 0 : index
    %c0_37 = arith.constant 0 : index
    %46 = vector.load %arg12[%c0_36, %c0_37] : memref<1x1xf32, #tpu.memory_space<vmem>>, vector<1x1xf32>
    %47 = vector.broadcast %46 : vector<1x1xf32> to vector<16x1xf32>
    %48 = arith.addf %45, %47 : vector<16x1xf32>
    %cst_38 = arith.constant 0.000000e+00 : f32
    %49 = vector.broadcast %cst_38 : f32 to vector<16x2xf32>
    %50 = arith.cmpf ogt, %1, %49 : vector<16x2xf32>
    %51 = tpu.iota {dimensions = array<i32: 0>} : vector<16x1xi32>
    %52 = arith.sitofp %51 : vector<16x1xi32> to vector<16x1xf32>
    %cst_39 = arith.constant 0.000000e+00 : f32
    %53 = vector.broadcast %cst_39 : f32 to vector<16x1xf32>
    %cst_40 = arith.constant -1.000000e+30 : f32
    %cst_41 = arith.constant 1.000000e+09 : f32
    %c0_i32 = arith.constant 0 : i32
    %cst_42 = arith.constant 0.000000e+00 : f32
    %54 = vector.broadcast %cst_42 : f32 to vector<16x1xf32>
    %55 = arith.cmpf ogt, %53, %54 : vector<16x1xf32>
    %56 = vector.broadcast %cst_40 : f32 to vector<16x1xf32>
    %57 = arith.select %55, %56, %48 : vector<16x1xi1>, vector<16x1xf32>
    %58 = vector.shape_cast %57 : vector<16x1xf32> to vector<16x1xf32>
    %59 = vector.broadcast %58 : vector<16x1xf32> to vector<16x2xf32>
    %60 = vector.broadcast %cst_40 : f32 to vector<16x2xf32>
    %61 = arith.select %50, %59, %60 : vector<16x2xi1>, vector<16x2xf32>
    %cst_43 = arith.constant dense<0xFF800000> : vector<2xf32>
    %62 = vector.multi_reduction <maximumf>, %61, %cst_43 [0] : vector<16x2xf32> to vector<2xf32>
    %63 = vector.shape_cast %62 : vector<2xf32> to vector<1x2xf32>
    %64 = vector.broadcast %63 : vector<1x2xf32> to vector<16x2xf32>
    %65 = arith.mulf %1, %64 : vector<16x2xf32>
    %cst_44 = arith.constant dense<0.000000e+00> : vector<16xf32>
    %66 = vector.multi_reduction <add>, %65, %cst_44 [1] : vector<16x2xf32> to vector<16xf32>
    %67 = vector.shape_cast %66 : vector<16xf32> to vector<16x1xf32>
    %68 = arith.cmpf oge, %57, %67 : vector<16x1xf32>
    %cst_45 = arith.constant 5.000000e-01 : f32
    %69 = vector.broadcast %cst_45 : f32 to vector<16x1xf32>
    %70 = arith.cmpf olt, %53, %69 : vector<16x1xf32>
    %71 = arith.andi %68, %70 : vector<16x1xi1>
    %72 = vector.broadcast %cst_41 : f32 to vector<16x1xf32>
    %73 = arith.select %71, %52, %72 : vector<16x1xi1>, vector<16x1xf32>
    %74 = vector.shape_cast %73 : vector<16x1xf32> to vector<16x1xf32>
    %75 = vector.broadcast %74 : vector<16x1xf32> to vector<16x2xf32>
    %76 = vector.broadcast %cst_41 : f32 to vector<16x2xf32>
    %77 = arith.select %50, %75, %76 : vector<16x2xi1>, vector<16x2xf32>
    %cst_46 = arith.constant dense<0x7F800000> : vector<2xf32>
    %78 = vector.multi_reduction <minimumf>, %77, %cst_46 [0] : vector<16x2xf32> to vector<2xf32>
    %79 = vector.shape_cast %78 : vector<2xf32> to vector<1x2xf32>
    %80 = vector.broadcast %79 : vector<1x2xf32> to vector<16x2xf32>
    %81 = arith.mulf %1, %80 : vector<16x2xf32>
    %cst_47 = arith.constant dense<0.000000e+00> : vector<16xf32>
    %82 = vector.multi_reduction <add>, %81, %cst_47 [1] : vector<16x2xf32> to vector<16xf32>
    %83 = vector.shape_cast %82 : vector<16xf32> to vector<16x1xf32>
    %84 = arith.cmpf oeq, %52, %83 : vector<16x1xf32>
    %85 = arith.andi %71, %84 : vector<16x1xi1>
    %cst_48 = arith.constant 1.000000e+00 : f32
    %86 = vector.broadcast %cst_48 : f32 to vector<16x1xf32>
    %87 = arith.select %85, %86, %53 : vector<16x1xi1>, vector<16x1xf32>
    %c1_i32 = arith.constant 1 : i32
    %cst_49 = arith.constant 0.000000e+00 : f32
    %88 = vector.broadcast %cst_49 : f32 to vector<16x1xf32>
    %89 = arith.cmpf ogt, %87, %88 : vector<16x1xf32>
    %90 = vector.broadcast %cst_40 : f32 to vector<16x1xf32>
    %91 = arith.select %89, %90, %48 : vector<16x1xi1>, vector<16x1xf32>
    %92 = vector.shape_cast %91 : vector<16x1xf32> to vector<16x1xf32>
    %93 = vector.broadcast %92 : vector<16x1xf32> to vector<16x2xf32>
    %94 = vector.broadcast %cst_40 : f32 to vector<16x2xf32>
    %95 = arith.select %50, %93, %94 : vector<16x2xi1>, vector<16x2xf32>
    %cst_50 = arith.constant dense<0xFF800000> : vector<2xf32>
    %96 = vector.multi_reduction <maximumf>, %95, %cst_50 [0] : vector<16x2xf32> to vector<2xf32>
    %97 = vector.shape_cast %96 : vector<2xf32> to vector<1x2xf32>
    %98 = vector.broadcast %97 : vector<1x2xf32> to vector<16x2xf32>
    %99 = arith.mulf %1, %98 : vector<16x2xf32>
    %cst_51 = arith.constant dense<0.000000e+00> : vector<16xf32>
    %100 = vector.multi_reduction <add>, %99, %cst_51 [1] : vector<16x2xf32> to vector<16xf32>
    %101 = vector.shape_cast %100 : vector<16xf32> to vector<16x1xf32>
    %102 = arith.cmpf oge, %91, %101 : vector<16x1xf32>
    %cst_52 = arith.constant 5.000000e-01 : f32
    %103 = vector.broadcast %cst_52 : f32 to vector<16x1xf32>
    %104 = arith.cmpf olt, %87, %103 : vector<16x1xf32>
    %105 = arith.andi %102, %104 : vector<16x1xi1>
    %106 = vector.broadcast %cst_41 : f32 to vector<16x1xf32>
    %107 = arith.select %105, %52, %106 : vector<16x1xi1>, vector<16x1xf32>
    %108 = vector.shape_cast %107 : vector<16x1xf32> to vector<16x1xf32>
    %109 = vector.broadcast %108 : vector<16x1xf32> to vector<16x2xf32>
    %110 = vector.broadcast %cst_41 : f32 to vector<16x2xf32>
    %111 = arith.select %50, %109, %110 : vector<16x2xi1>, vector<16x2xf32>
    %cst_53 = arith.constant dense<0x7F800000> : vector<2xf32>
    %112 = vector.multi_reduction <minimumf>, %111, %cst_53 [0] : vector<16x2xf32> to vector<2xf32>
    %113 = vector.shape_cast %112 : vector<2xf32> to vector<1x2xf32>
    %114 = vector.broadcast %113 : vector<1x2xf32> to vector<16x2xf32>
    %115 = arith.mulf %1, %114 : vector<16x2xf32>
    %cst_54 = arith.constant dense<0.000000e+00> : vector<16xf32>
    %116 = vector.multi_reduction <add>, %115, %cst_54 [1] : vector<16x2xf32> to vector<16xf32>
    %117 = vector.shape_cast %116 : vector<16xf32> to vector<16x1xf32>
    %118 = arith.cmpf oeq, %52, %117 : vector<16x1xf32>
    %119 = arith.andi %105, %118 : vector<16x1xi1>
    %cst_55 = arith.constant 1.000000e+00 : f32
    %120 = vector.broadcast %cst_55 : f32 to vector<16x1xf32>
    %121 = arith.select %119, %120, %87 : vector<16x1xi1>, vector<16x1xf32>
    %c2_i32 = arith.constant 2 : i32
    %cst_56 = arith.constant 0.000000e+00 : f32
    %122 = vector.broadcast %cst_56 : f32 to vector<16x1xf32>
    %123 = arith.cmpf ogt, %121, %122 : vector<16x1xf32>
    %124 = vector.broadcast %cst_40 : f32 to vector<16x1xf32>
    %125 = arith.select %123, %124, %48 : vector<16x1xi1>, vector<16x1xf32>
    %126 = vector.shape_cast %125 : vector<16x1xf32> to vector<16x1xf32>
    %127 = vector.broadcast %126 : vector<16x1xf32> to vector<16x2xf32>
    %128 = vector.broadcast %cst_40 : f32 to vector<16x2xf32>
    %129 = arith.select %50, %127, %128 : vector<16x2xi1>, vector<16x2xf32>
    %cst_57 = arith.constant dense<0xFF800000> : vector<2xf32>
    %130 = vector.multi_reduction <maximumf>, %129, %cst_57 [0] : vector<16x2xf32> to vector<2xf32>
    %131 = vector.shape_cast %130 : vector<2xf32> to vector<1x2xf32>
    %132 = vector.broadcast %131 : vector<1x2xf32> to vector<16x2xf32>
    %133 = arith.mulf %1, %132 : vector<16x2xf32>
    %cst_58 = arith.constant dense<0.000000e+00> : vector<16xf32>
    %134 = vector.multi_reduction <add>, %133, %cst_58 [1] : vector<16x2xf32> to vector<16xf32>
    %135 = vector.shape_cast %134 : vector<16xf32> to vector<16x1xf32>
    %136 = arith.cmpf oge, %125, %135 : vector<16x1xf32>
    %cst_59 = arith.constant 5.000000e-01 : f32
    %137 = vector.broadcast %cst_59 : f32 to vector<16x1xf32>
    %138 = arith.cmpf olt, %121, %137 : vector<16x1xf32>
    %139 = arith.andi %136, %138 : vector<16x1xi1>
    %140 = vector.broadcast %cst_41 : f32 to vector<16x1xf32>
    %141 = arith.select %139, %52, %140 : vector<16x1xi1>, vector<16x1xf32>
    %142 = vector.shape_cast %141 : vector<16x1xf32> to vector<16x1xf32>
    %143 = vector.broadcast %142 : vector<16x1xf32> to vector<16x2xf32>
    %144 = vector.broadcast %cst_41 : f32 to vector<16x2xf32>
    %145 = arith.select %50, %143, %144 : vector<16x2xi1>, vector<16x2xf32>
    %cst_60 = arith.constant dense<0x7F800000> : vector<2xf32>
    %146 = vector.multi_reduction <minimumf>, %145, %cst_60 [0] : vector<16x2xf32> to vector<2xf32>
    %147 = vector.shape_cast %146 : vector<2xf32> to vector<1x2xf32>
    %148 = vector.broadcast %147 : vector<1x2xf32> to vector<16x2xf32>
    %149 = arith.mulf %1, %148 : vector<16x2xf32>
    %cst_61 = arith.constant dense<0.000000e+00> : vector<16xf32>
    %150 = vector.multi_reduction <add>, %149, %cst_61 [1] : vector<16x2xf32> to vector<16xf32>
    %151 = vector.shape_cast %150 : vector<16xf32> to vector<16x1xf32>
    %152 = arith.cmpf oeq, %52, %151 : vector<16x1xf32>
    %153 = arith.andi %139, %152 : vector<16x1xi1>
    %cst_62 = arith.constant 1.000000e+00 : f32
    %154 = vector.broadcast %cst_62 : f32 to vector<16x1xf32>
    %155 = arith.select %153, %154, %121 : vector<16x1xi1>, vector<16x1xf32>
    %c3_i32 = arith.constant 3 : i32
    %cst_63 = arith.constant 0.000000e+00 : f32
    %156 = vector.broadcast %cst_63 : f32 to vector<16x1xf32>
    %157 = arith.cmpf ogt, %155, %156 : vector<16x1xf32>
    %158 = vector.broadcast %cst_40 : f32 to vector<16x1xf32>
    %159 = arith.select %157, %158, %48 : vector<16x1xi1>, vector<16x1xf32>
    %160 = vector.shape_cast %159 : vector<16x1xf32> to vector<16x1xf32>
    %161 = vector.broadcast %160 : vector<16x1xf32> to vector<16x2xf32>
    %162 = vector.broadcast %cst_40 : f32 to vector<16x2xf32>
    %163 = arith.select %50, %161, %162 : vector<16x2xi1>, vector<16x2xf32>
    %cst_64 = arith.constant dense<0xFF800000> : vector<2xf32>
    %164 = vector.multi_reduction <maximumf>, %163, %cst_64 [0] : vector<16x2xf32> to vector<2xf32>
    %165 = vector.shape_cast %164 : vector<2xf32> to vector<1x2xf32>
    %166 = vector.broadcast %165 : vector<1x2xf32> to vector<16x2xf32>
    %167 = arith.mulf %1, %166 : vector<16x2xf32>
    %cst_65 = arith.constant dense<0.000000e+00> : vector<16xf32>
    %168 = vector.multi_reduction <add>, %167, %cst_65 [1] : vector<16x2xf32> to vector<16xf32>
    %169 = vector.shape_cast %168 : vector<16xf32> to vector<16x1xf32>
    %170 = arith.cmpf oge, %159, %169 : vector<16x1xf32>
    %cst_66 = arith.constant 5.000000e-01 : f32
    %171 = vector.broadcast %cst_66 : f32 to vector<16x1xf32>
    %172 = arith.cmpf olt, %155, %171 : vector<16x1xf32>
    %173 = arith.andi %170, %172 : vector<16x1xi1>
    %174 = vector.broadcast %cst_41 : f32 to vector<16x1xf32>
    %175 = arith.select %173, %52, %174 : vector<16x1xi1>, vector<16x1xf32>
    %176 = vector.shape_cast %175 : vector<16x1xf32> to vector<16x1xf32>
    %177 = vector.broadcast %176 : vector<16x1xf32> to vector<16x2xf32>
    %178 = vector.broadcast %cst_41 : f32 to vector<16x2xf32>
    %179 = arith.select %50, %177, %178 : vector<16x2xi1>, vector<16x2xf32>
    %cst_67 = arith.constant dense<0x7F800000> : vector<2xf32>
    %180 = vector.multi_reduction <minimumf>, %179, %cst_67 [0] : vector<16x2xf32> to vector<2xf32>
    %181 = vector.shape_cast %180 : vector<2xf32> to vector<1x2xf32>
    %182 = vector.broadcast %181 : vector<1x2xf32> to vector<16x2xf32>
    %183 = arith.mulf %1, %182 : vector<16x2xf32>
    %cst_68 = arith.constant dense<0.000000e+00> : vector<16xf32>
    %184 = vector.multi_reduction <add>, %183, %cst_68 [1] : vector<16x2xf32> to vector<16xf32>
    %185 = vector.shape_cast %184 : vector<16xf32> to vector<16x1xf32>
    %186 = arith.cmpf oeq, %52, %185 : vector<16x1xf32>
    %187 = arith.andi %173, %186 : vector<16x1xi1>
    %cst_69 = arith.constant 1.000000e+00 : f32
    %188 = vector.broadcast %cst_69 : f32 to vector<16x1xf32>
    %189 = arith.select %187, %188, %155 : vector<16x1xi1>, vector<16x1xf32>
    %cst_70 = arith.constant 1.000000e+00 : f32
    %190 = vector.broadcast %cst_70 : f32 to vector<16x1xf32>
    %191 = arith.subf %190, %189 : vector<16x1xf32>
    %192 = math.tanh %48 : vector<16x1xf32>
    %193 = arith.truncf %189 : vector<16x1xf32> to vector<16x1xbf16>
    %cst_71 = arith.constant dense<0.000000e+00> : vector<2x1xf32>
    %194 = tpu.matmul %2, %193, %cst_71 {dimension_numbers = #tpu.dot_dimension_numbers<[1], [0], [0], [1], [0, 0, 1, 1], [], []>} : vector<2x16xbf16>, vector<16x1xbf16>, vector<2x1xf32> -> vector<2x1xf32>
    %195 = arith.truncf %191 : vector<16x1xf32> to vector<16x1xbf16>
    %cst_72 = arith.constant dense<0.000000e+00> : vector<2x1xf32>
    %196 = tpu.matmul %2, %195, %cst_72 {dimension_numbers = #tpu.dot_dimension_numbers<[1], [0], [0], [1], [0, 0, 1, 1], [], []>} : vector<2x16xbf16>, vector<16x1xbf16>, vector<2x1xf32> -> vector<2x1xf32>
    %cst_73 = arith.constant 1.000000e+00 : f32
    %197 = vector.broadcast %cst_73 : f32 to vector<2x1xf32>
    %198 = arith.maximumf %194, %197 : vector<2x1xf32>
    %199 = tpu.reciprocal %198 {approx = true} : vector<2x1xf32> -> vector<2x1xf32>
    %cst_74 = arith.constant 1.000000e+00 : f32
    %200 = vector.broadcast %cst_74 : f32 to vector<2x1xf32>
    %201 = arith.maximumf %196, %200 : vector<2x1xf32>
    %202 = tpu.reciprocal %201 {approx = true} : vector<2x1xf32> -> vector<2x1xf32>
    %203 = vector.shape_cast %189 : vector<16x1xf32> to vector<1x16x1xf32>
    %204 = vector.broadcast %203 : vector<1x16x1xf32> to vector<2x16x1xf32>
    %205 = arith.mulf %3, %204 : vector<2x16x1xf32>
    %cst_75 = arith.constant 0.000000e+00 : f32
    %206 = vector.broadcast %cst_75 : f32 to vector<2x16x1xf32>
    %207 = arith.cmpf ogt, %205, %206 : vector<2x16x1xf32>
    %208 = vector.shape_cast %191 : vector<16x1xf32> to vector<1x16x1xf32>
    %209 = vector.broadcast %208 : vector<1x16x1xf32> to vector<2x16x1xf32>
    %210 = arith.mulf %3, %209 : vector<2x16x1xf32>
    %cst_76 = arith.constant 0.000000e+00 : f32
    %211 = vector.broadcast %cst_76 : f32 to vector<2x16x1xf32>
    %212 = arith.cmpf ogt, %210, %211 : vector<2x16x1xf32>
    %213 = vector.broadcast %192 : vector<16x1xf32> to vector<16x16xf32>
    %214 = arith.mulf %13, %213 : vector<16x16xf32>
    %215 = vector.broadcast %189 : vector<16x1xf32> to vector<16x16xf32>
    %216 = arith.mulf %214, %215 : vector<16x16xf32>
    %217 = arith.truncf %216 : vector<16x16xf32> to vector<16x16xbf16>
    %218 = vector.broadcast %191 : vector<16x1xf32> to vector<16x16xf32>
    %219 = arith.mulf %214, %218 : vector<16x16xf32>
    %220 = arith.truncf %219 : vector<16x16xf32> to vector<16x16xbf16>
    %cst_77 = arith.constant dense<0.000000e+00> : vector<2x16xf32>
    %221 = tpu.matmul %2, %217, %cst_77 {dimension_numbers = #tpu.dot_dimension_numbers<[1], [0], [0], [1], [0, 0, 1, 1], [], []>} : vector<2x16xbf16>, vector<16x16xbf16>, vector<2x16xf32> -> vector<2x16xf32>
    %222 = vector.broadcast %199 : vector<2x1xf32> to vector<2x16xf32>
    %223 = arith.mulf %221, %222 : vector<2x16xf32>
    %cst_78 = arith.constant dense<0.000000e+00> : vector<2x16xf32>
    %224 = tpu.matmul %2, %220, %cst_78 {dimension_numbers = #tpu.dot_dimension_numbers<[1], [0], [0], [1], [0, 0, 1, 1], [], []>} : vector<2x16xbf16>, vector<16x16xbf16>, vector<2x16xf32> -> vector<2x16xf32>
    %225 = vector.broadcast %202 : vector<2x1xf32> to vector<2x16xf32>
    %226 = arith.mulf %224, %225 : vector<2x16xf32>
    %227 = vector.shape_cast %214 : vector<16x16xf32> to vector<1x16x16xf32>
    %cst_79 = arith.constant -1.000000e+30 : f32
    %228 = vector.shape_cast %207 : vector<2x16x1xi1> to vector<2x16x1xi1>
    %229 = vector.broadcast %228 : vector<2x16x1xi1> to vector<2x16x16xi1>
    %230 = vector.shape_cast %227 : vector<1x16x16xf32> to vector<1x16x16xf32>
    %231 = vector.broadcast %230 : vector<1x16x16xf32> to vector<2x16x16xf32>
    %232 = vector.broadcast %cst_79 : f32 to vector<2x16x16xf32>
    %233 = arith.select %229, %231, %232 : vector<2x16x16xi1>, vector<2x16x16xf32>
    %cst_80 = arith.constant dense<0xFF800000> : vector<2x16xf32>
    %234 = vector.multi_reduction <maximumf>, %233, %cst_80 [1] : vector<2x16x16xf32> to vector<2x16xf32>
    %235 = vector.shape_cast %214 : vector<16x16xf32> to vector<1x16x16xf32>
    %cst_81 = arith.constant -1.000000e+30 : f32
    %236 = vector.shape_cast %212 : vector<2x16x1xi1> to vector<2x16x1xi1>
    %237 = vector.broadcast %236 : vector<2x16x1xi1> to vector<2x16x16xi1>
    %238 = vector.shape_cast %235 : vector<1x16x16xf32> to vector<1x16x16xf32>
    %239 = vector.broadcast %238 : vector<1x16x16xf32> to vector<2x16x16xf32>
    %240 = vector.broadcast %cst_81 : f32 to vector<2x16x16xf32>
    %241 = arith.select %237, %239, %240 : vector<2x16x16xi1>, vector<2x16x16xf32>
    %cst_82 = arith.constant dense<0xFF800000> : vector<2x16xf32>
    %242 = vector.multi_reduction <maximumf>, %241, %cst_82 [1] : vector<2x16x16xf32> to vector<2x16xf32>
    %cst_83 = arith.constant 0.000000e+00 : f32
    %243 = vector.broadcast %cst_83 : f32 to vector<2x1xf32>
    %244 = arith.cmpf ogt, %194, %243 : vector<2x1xf32>
    %cst_84 = arith.constant 0.000000e+00 : f32
    %245 = vector.shape_cast %244 : vector<2x1xi1> to vector<2x1xi1>
    %246 = vector.broadcast %245 : vector<2x1xi1> to vector<2x16xi1>
    %247 = vector.broadcast %cst_84 : f32 to vector<2x16xf32>
    %248 = arith.select %246, %234, %247 : vector<2x16xi1>, vector<2x16xf32>
    %cst_85 = arith.constant 0.000000e+00 : f32
    %249 = vector.broadcast %cst_85 : f32 to vector<2x1xf32>
    %250 = arith.cmpf ogt, %196, %249 : vector<2x1xf32>
    %cst_86 = arith.constant 0.000000e+00 : f32
    %251 = vector.shape_cast %250 : vector<2x1xi1> to vector<2x1xi1>
    %252 = vector.broadcast %251 : vector<2x1xi1> to vector<2x16xi1>
    %253 = vector.broadcast %cst_86 : f32 to vector<2x16xf32>
    %254 = arith.select %252, %242, %253 : vector<2x16xi1>, vector<2x16xf32>
    %255 = vector.broadcast %192 : vector<16x1xf32> to vector<16x16xf32>
    %256 = arith.mulf %23, %255 : vector<16x16xf32>
    %257 = vector.broadcast %189 : vector<16x1xf32> to vector<16x16xf32>
    %258 = arith.mulf %256, %257 : vector<16x16xf32>
    %259 = arith.truncf %258 : vector<16x16xf32> to vector<16x16xbf16>
    %260 = vector.broadcast %191 : vector<16x1xf32> to vector<16x16xf32>
    %261 = arith.mulf %256, %260 : vector<16x16xf32>
    %262 = arith.truncf %261 : vector<16x16xf32> to vector<16x16xbf16>
    %cst_87 = arith.constant dense<0.000000e+00> : vector<2x16xf32>
    %263 = tpu.matmul %2, %259, %cst_87 {dimension_numbers = #tpu.dot_dimension_numbers<[1], [0], [0], [1], [0, 0, 1, 1], [], []>} : vector<2x16xbf16>, vector<16x16xbf16>, vector<2x16xf32> -> vector<2x16xf32>
    %264 = vector.broadcast %199 : vector<2x1xf32> to vector<2x16xf32>
    %265 = arith.mulf %263, %264 : vector<2x16xf32>
    %cst_88 = arith.constant dense<0.000000e+00> : vector<2x16xf32>
    %266 = tpu.matmul %2, %262, %cst_88 {dimension_numbers = #tpu.dot_dimension_numbers<[1], [0], [0], [1], [0, 0, 1, 1], [], []>} : vector<2x16xbf16>, vector<16x16xbf16>, vector<2x16xf32> -> vector<2x16xf32>
    %267 = vector.broadcast %202 : vector<2x1xf32> to vector<2x16xf32>
    %268 = arith.mulf %266, %267 : vector<2x16xf32>
    %269 = vector.shape_cast %256 : vector<16x16xf32> to vector<1x16x16xf32>
    %cst_89 = arith.constant -1.000000e+30 : f32
    %270 = vector.shape_cast %207 : vector<2x16x1xi1> to vector<2x16x1xi1>
    %271 = vector.broadcast %270 : vector<2x16x1xi1> to vector<2x16x16xi1>
    %272 = vector.shape_cast %269 : vector<1x16x16xf32> to vector<1x16x16xf32>
    %273 = vector.broadcast %272 : vector<1x16x16xf32> to vector<2x16x16xf32>
    %274 = vector.broadcast %cst_89 : f32 to vector<2x16x16xf32>
    %275 = arith.select %271, %273, %274 : vector<2x16x16xi1>, vector<2x16x16xf32>
    %cst_90 = arith.constant dense<0xFF800000> : vector<2x16xf32>
    %276 = vector.multi_reduction <maximumf>, %275, %cst_90 [1] : vector<2x16x16xf32> to vector<2x16xf32>
    %277 = vector.shape_cast %256 : vector<16x16xf32> to vector<1x16x16xf32>
    %cst_91 = arith.constant -1.000000e+30 : f32
    %278 = vector.shape_cast %212 : vector<2x16x1xi1> to vector<2x16x1xi1>
    %279 = vector.broadcast %278 : vector<2x16x1xi1> to vector<2x16x16xi1>
    %280 = vector.shape_cast %277 : vector<1x16x16xf32> to vector<1x16x16xf32>
    %281 = vector.broadcast %280 : vector<1x16x16xf32> to vector<2x16x16xf32>
    %282 = vector.broadcast %cst_91 : f32 to vector<2x16x16xf32>
    %283 = arith.select %279, %281, %282 : vector<2x16x16xi1>, vector<2x16x16xf32>
    %cst_92 = arith.constant dense<0xFF800000> : vector<2x16xf32>
    %284 = vector.multi_reduction <maximumf>, %283, %cst_92 [1] : vector<2x16x16xf32> to vector<2x16xf32>
    %cst_93 = arith.constant 0.000000e+00 : f32
    %285 = vector.broadcast %cst_93 : f32 to vector<2x1xf32>
    %286 = arith.cmpf ogt, %194, %285 : vector<2x1xf32>
    %cst_94 = arith.constant 0.000000e+00 : f32
    %287 = vector.shape_cast %286 : vector<2x1xi1> to vector<2x1xi1>
    %288 = vector.broadcast %287 : vector<2x1xi1> to vector<2x16xi1>
    %289 = vector.broadcast %cst_94 : f32 to vector<2x16xf32>
    %290 = arith.select %288, %276, %289 : vector<2x16xi1>, vector<2x16xf32>
    %cst_95 = arith.constant 0.000000e+00 : f32
    %291 = vector.broadcast %cst_95 : f32 to vector<2x1xf32>
    %292 = arith.cmpf ogt, %196, %291 : vector<2x1xf32>
    %cst_96 = arith.constant 0.000000e+00 : f32
    %293 = vector.shape_cast %292 : vector<2x1xi1> to vector<2x1xi1>
    %294 = vector.broadcast %293 : vector<2x1xi1> to vector<2x16xi1>
    %295 = vector.broadcast %cst_96 : f32 to vector<2x16xf32>
    %296 = arith.select %294, %284, %295 : vector<2x16xi1>, vector<2x16xf32>
    %297 = vector.broadcast %192 : vector<16x1xf32> to vector<16x16xf32>
    %298 = arith.mulf %33, %297 : vector<16x16xf32>
    %299 = vector.broadcast %189 : vector<16x1xf32> to vector<16x16xf32>
    %300 = arith.mulf %298, %299 : vector<16x16xf32>
    %301 = arith.truncf %300 : vector<16x16xf32> to vector<16x16xbf16>
    %302 = vector.broadcast %191 : vector<16x1xf32> to vector<16x16xf32>
    %303 = arith.mulf %298, %302 : vector<16x16xf32>
    %304 = arith.truncf %303 : vector<16x16xf32> to vector<16x16xbf16>
    %cst_97 = arith.constant dense<0.000000e+00> : vector<2x16xf32>
    %305 = tpu.matmul %2, %301, %cst_97 {dimension_numbers = #tpu.dot_dimension_numbers<[1], [0], [0], [1], [0, 0, 1, 1], [], []>} : vector<2x16xbf16>, vector<16x16xbf16>, vector<2x16xf32> -> vector<2x16xf32>
    %306 = vector.broadcast %199 : vector<2x1xf32> to vector<2x16xf32>
    %307 = arith.mulf %305, %306 : vector<2x16xf32>
    %cst_98 = arith.constant dense<0.000000e+00> : vector<2x16xf32>
    %308 = tpu.matmul %2, %304, %cst_98 {dimension_numbers = #tpu.dot_dimension_numbers<[1], [0], [0], [1], [0, 0, 1, 1], [], []>} : vector<2x16xbf16>, vector<16x16xbf16>, vector<2x16xf32> -> vector<2x16xf32>
    %309 = vector.broadcast %202 : vector<2x1xf32> to vector<2x16xf32>
    %310 = arith.mulf %308, %309 : vector<2x16xf32>
    %311 = vector.shape_cast %298 : vector<16x16xf32> to vector<1x16x16xf32>
    %cst_99 = arith.constant -1.000000e+30 : f32
    %312 = vector.shape_cast %207 : vector<2x16x1xi1> to vector<2x16x1xi1>
    %313 = vector.broadcast %312 : vector<2x16x1xi1> to vector<2x16x16xi1>
    %314 = vector.shape_cast %311 : vector<1x16x16xf32> to vector<1x16x16xf32>
    %315 = vector.broadcast %314 : vector<1x16x16xf32> to vector<2x16x16xf32>
    %316 = vector.broadcast %cst_99 : f32 to vector<2x16x16xf32>
    %317 = arith.select %313, %315, %316 : vector<2x16x16xi1>, vector<2x16x16xf32>
    %cst_100 = arith.constant dense<0xFF800000> : vector<2x16xf32>
    %318 = vector.multi_reduction <maximumf>, %317, %cst_100 [1] : vector<2x16x16xf32> to vector<2x16xf32>
    %319 = vector.shape_cast %298 : vector<16x16xf32> to vector<1x16x16xf32>
    %cst_101 = arith.constant -1.000000e+30 : f32
    %320 = vector.shape_cast %212 : vector<2x16x1xi1> to vector<2x16x1xi1>
    %321 = vector.broadcast %320 : vector<2x16x1xi1> to vector<2x16x16xi1>
    %322 = vector.shape_cast %319 : vector<1x16x16xf32> to vector<1x16x16xf32>
    %323 = vector.broadcast %322 : vector<1x16x16xf32> to vector<2x16x16xf32>
    %324 = vector.broadcast %cst_101 : f32 to vector<2x16x16xf32>
    %325 = arith.select %321, %323, %324 : vector<2x16x16xi1>, vector<2x16x16xf32>
    %cst_102 = arith.constant dense<0xFF800000> : vector<2x16xf32>
    %326 = vector.multi_reduction <maximumf>, %325, %cst_102 [1] : vector<2x16x16xf32> to vector<2x16xf32>
    %cst_103 = arith.constant 0.000000e+00 : f32
    %327 = vector.broadcast %cst_103 : f32 to vector<2x1xf32>
    %328 = arith.cmpf ogt, %194, %327 : vector<2x1xf32>
    %cst_104 = arith.constant 0.000000e+00 : f32
    %329 = vector.shape_cast %328 : vector<2x1xi1> to vector<2x1xi1>
    %330 = vector.broadcast %329 : vector<2x1xi1> to vector<2x16xi1>
    %331 = vector.broadcast %cst_104 : f32 to vector<2x16xf32>
    %332 = arith.select %330, %318, %331 : vector<2x16xi1>, vector<2x16xf32>
    %cst_105 = arith.constant 0.000000e+00 : f32
    %333 = vector.broadcast %cst_105 : f32 to vector<2x1xf32>
    %334 = arith.cmpf ogt, %196, %333 : vector<2x1xf32>
    %cst_106 = arith.constant 0.000000e+00 : f32
    %335 = vector.shape_cast %334 : vector<2x1xi1> to vector<2x1xi1>
    %336 = vector.broadcast %335 : vector<2x1xi1> to vector<2x16xi1>
    %337 = vector.broadcast %cst_106 : f32 to vector<2x16xf32>
    %338 = arith.select %336, %326, %337 : vector<2x16xi1>, vector<2x16xf32>
    %c0_107 = arith.constant 0 : index
    %c0_108 = arith.constant 0 : index
    %339 = vector.load %arg13[%c0_107, %c0_108] : memref<96x48xbf16, #tpu.memory_space<vmem>>, vector<96x48xbf16>
    %340 = arith.truncf %223 : vector<2x16xf32> to vector<2x16xbf16>
    %341 = vector.extract_strided_slice %339 {offsets = [0, 0], sizes = [16, 48], strides = [1, 1]} : vector<96x48xbf16> to vector<16x48xbf16>
    %cst_109 = arith.constant dense<0.000000e+00> : vector<2x48xf32>
    %342 = tpu.matmul %340, %341, %cst_109 {dimension_numbers = #tpu.dot_dimension_numbers<[1], [0], [0], [1], [0, 0, 1, 1], [], []>} : vector<2x16xbf16>, vector<16x48xbf16>, vector<2x48xf32> -> vector<2x48xf32>
    %343 = arith.truncf %265 : vector<2x16xf32> to vector<2x16xbf16>
    %344 = vector.extract_strided_slice %339 {offsets = [16, 0], sizes = [16, 48], strides = [1, 1]} : vector<96x48xbf16> to vector<16x48xbf16>
    %cst_110 = arith.constant dense<0.000000e+00> : vector<2x48xf32>
    %345 = tpu.matmul %343, %344, %cst_110 {dimension_numbers = #tpu.dot_dimension_numbers<[1], [0], [0], [1], [0, 0, 1, 1], [], []>} : vector<2x16xbf16>, vector<16x48xbf16>, vector<2x48xf32> -> vector<2x48xf32>
    %346 = arith.addf %342, %345 : vector<2x48xf32>
    %347 = arith.truncf %307 : vector<2x16xf32> to vector<2x16xbf16>
    %348 = vector.extract_strided_slice %339 {offsets = [32, 0], sizes = [16, 48], strides = [1, 1]} : vector<96x48xbf16> to vector<16x48xbf16>
    %cst_111 = arith.constant dense<0.000000e+00> : vector<2x48xf32>
    %349 = tpu.matmul %347, %348, %cst_111 {dimension_numbers = #tpu.dot_dimension_numbers<[1], [0], [0], [1], [0, 0, 1, 1], [], []>} : vector<2x16xbf16>, vector<16x48xbf16>, vector<2x48xf32> -> vector<2x48xf32>
    %350 = arith.addf %346, %349 : vector<2x48xf32>
    %351 = arith.truncf %248 : vector<2x16xf32> to vector<2x16xbf16>
    %352 = vector.extract_strided_slice %339 {offsets = [48, 0], sizes = [16, 48], strides = [1, 1]} : vector<96x48xbf16> to vector<16x48xbf16>
    %cst_112 = arith.constant dense<0.000000e+00> : vector<2x48xf32>
    %353 = tpu.matmul %351, %352, %cst_112 {dimension_numbers = #tpu.dot_dimension_numbers<[1], [0], [0], [1], [0, 0, 1, 1], [], []>} : vector<2x16xbf16>, vector<16x48xbf16>, vector<2x48xf32> -> vector<2x48xf32>
    %354 = arith.addf %350, %353 : vector<2x48xf32>
    %355 = arith.truncf %290 : vector<2x16xf32> to vector<2x16xbf16>
    %356 = vector.extract_strided_slice %339 {offsets = [64, 0], sizes = [16, 48], strides = [1, 1]} : vector<96x48xbf16> to vector<16x48xbf16>
    %cst_113 = arith.constant dense<0.000000e+00> : vector<2x48xf32>
    %357 = tpu.matmul %355, %356, %cst_113 {dimension_numbers = #tpu.dot_dimension_numbers<[1], [0], [0], [1], [0, 0, 1, 1], [], []>} : vector<2x16xbf16>, vector<16x48xbf16>, vector<2x48xf32> -> vector<2x48xf32>
    %358 = arith.addf %354, %357 : vector<2x48xf32>
    %359 = arith.truncf %332 : vector<2x16xf32> to vector<2x16xbf16>
    %360 = vector.extract_strided_slice %339 {offsets = [80, 0], sizes = [16, 48], strides = [1, 1]} : vector<96x48xbf16> to vector<16x48xbf16>
    %cst_114 = arith.constant dense<0.000000e+00> : vector<2x48xf32>
    %361 = tpu.matmul %359, %360, %cst_114 {dimension_numbers = #tpu.dot_dimension_numbers<[1], [0], [0], [1], [0, 0, 1, 1], [], []>} : vector<2x16xbf16>, vector<16x48xbf16>, vector<2x48xf32> -> vector<2x48xf32>
    %362 = arith.addf %358, %361 : vector<2x48xf32>
    %c0_115 = arith.constant 0 : index
    %c0_116 = arith.constant 0 : index
    %363 = vector.load %arg14[%c0_115, %c0_116] : memref<1x48xf32, #tpu.memory_space<vmem>>, vector<1x48xf32>
    %364 = vector.broadcast %363 : vector<1x48xf32> to vector<2x48xf32>
    %365 = arith.addf %362, %364 : vector<2x48xf32>
    %cst_117 = arith.constant 0.000000e+00 : f32
    %366 = vector.broadcast %cst_117 : f32 to vector<2x48xf32>
    %367 = arith.maximumf %365, %366 : vector<2x48xf32>
    %368 = arith.truncf %367 : vector<2x48xf32> to vector<2x48xbf16>
    %c0_118 = arith.constant 0 : index
    %c0_119 = arith.constant 0 : index
    %369 = vector.load %arg15[%c0_118, %c0_119] : memref<48x24xbf16, #tpu.memory_space<vmem>>, vector<48x24xbf16>
    %cst_120 = arith.constant dense<0.000000e+00> : vector<2x24xf32>
    %370 = tpu.matmul %368, %369, %cst_120 {dimension_numbers = #tpu.dot_dimension_numbers<[1], [0], [0], [1], [0, 0, 1, 1], [], []>} : vector<2x48xbf16>, vector<48x24xbf16>, vector<2x24xf32> -> vector<2x24xf32>
    %c0_121 = arith.constant 0 : index
    %c0_122 = arith.constant 0 : index
    %371 = vector.load %arg16[%c0_121, %c0_122] : memref<1x24xf32, #tpu.memory_space<vmem>>, vector<1x24xf32>
    %372 = vector.broadcast %371 : vector<1x24xf32> to vector<2x24xf32>
    %373 = arith.addf %370, %372 : vector<2x24xf32>
    %cst_123 = arith.constant 0.000000e+00 : f32
    %374 = vector.broadcast %cst_123 : f32 to vector<2x24xf32>
    %375 = arith.maximumf %373, %374 : vector<2x24xf32>
    %376 = arith.truncf %375 : vector<2x24xf32> to vector<2x24xbf16>
    %c0_124 = arith.constant 0 : index
    %c0_125 = arith.constant 0 : index
    %377 = vector.load %arg17[%c0_124, %c0_125] : memref<24x3xbf16, #tpu.memory_space<vmem>>, vector<24x3xbf16>
    %cst_126 = arith.constant dense<0.000000e+00> : vector<2x3xf32>
    %378 = tpu.matmul %376, %377, %cst_126 {dimension_numbers = #tpu.dot_dimension_numbers<[1], [0], [0], [1], [0, 0, 1, 1], [], []>} : vector<2x24xbf16>, vector<24x3xbf16>, vector<2x3xf32> -> vector<2x3xf32>
    %c0_127 = arith.constant 0 : index
    %c0_128 = arith.constant 0 : index
    %379 = vector.load %arg18[%c0_127, %c0_128] : memref<1x3xf32, #tpu.memory_space<vmem>>, vector<1x3xf32>
    %380 = vector.broadcast %379 : vector<1x3xf32> to vector<2x3xf32>
    %381 = arith.addf %378, %380 : vector<2x3xf32>
    %382 = arith.truncf %226 : vector<2x16xf32> to vector<2x16xbf16>
    %383 = vector.extract_strided_slice %339 {offsets = [0, 0], sizes = [16, 48], strides = [1, 1]} : vector<96x48xbf16> to vector<16x48xbf16>
    %cst_129 = arith.constant dense<0.000000e+00> : vector<2x48xf32>
    %384 = tpu.matmul %382, %383, %cst_129 {dimension_numbers = #tpu.dot_dimension_numbers<[1], [0], [0], [1], [0, 0, 1, 1], [], []>} : vector<2x16xbf16>, vector<16x48xbf16>, vector<2x48xf32> -> vector<2x48xf32>
    %385 = arith.truncf %268 : vector<2x16xf32> to vector<2x16xbf16>
    %386 = vector.extract_strided_slice %339 {offsets = [16, 0], sizes = [16, 48], strides = [1, 1]} : vector<96x48xbf16> to vector<16x48xbf16>
    %cst_130 = arith.constant dense<0.000000e+00> : vector<2x48xf32>
    %387 = tpu.matmul %385, %386, %cst_130 {dimension_numbers = #tpu.dot_dimension_numbers<[1], [0], [0], [1], [0, 0, 1, 1], [], []>} : vector<2x16xbf16>, vector<16x48xbf16>, vector<2x48xf32> -> vector<2x48xf32>
    %388 = arith.addf %384, %387 : vector<2x48xf32>
    %389 = arith.truncf %310 : vector<2x16xf32> to vector<2x16xbf16>
    %390 = vector.extract_strided_slice %339 {offsets = [32, 0], sizes = [16, 48], strides = [1, 1]} : vector<96x48xbf16> to vector<16x48xbf16>
    %cst_131 = arith.constant dense<0.000000e+00> : vector<2x48xf32>
    %391 = tpu.matmul %389, %390, %cst_131 {dimension_numbers = #tpu.dot_dimension_numbers<[1], [0], [0], [1], [0, 0, 1, 1], [], []>} : vector<2x16xbf16>, vector<16x48xbf16>, vector<2x48xf32> -> vector<2x48xf32>
    %392 = arith.addf %388, %391 : vector<2x48xf32>
    %393 = arith.truncf %254 : vector<2x16xf32> to vector<2x16xbf16>
    %394 = vector.extract_strided_slice %339 {offsets = [48, 0], sizes = [16, 48], strides = [1, 1]} : vector<96x48xbf16> to vector<16x48xbf16>
    %cst_132 = arith.constant dense<0.000000e+00> : vector<2x48xf32>
    %395 = tpu.matmul %393, %394, %cst_132 {dimension_numbers = #tpu.dot_dimension_numbers<[1], [0], [0], [1], [0, 0, 1, 1], [], []>} : vector<2x16xbf16>, vector<16x48xbf16>, vector<2x48xf32> -> vector<2x48xf32>
    %396 = arith.addf %392, %395 : vector<2x48xf32>
    %397 = arith.truncf %296 : vector<2x16xf32> to vector<2x16xbf16>
    %398 = vector.extract_strided_slice %339 {offsets = [64, 0], sizes = [16, 48], strides = [1, 1]} : vector<96x48xbf16> to vector<16x48xbf16>
    %cst_133 = arith.constant dense<0.000000e+00> : vector<2x48xf32>
    %399 = tpu.matmul %397, %398, %cst_133 {dimension_numbers = #tpu.dot_dimension_numbers<[1], [0], [0], [1], [0, 0, 1, 1], [], []>} : vector<2x16xbf16>, vector<16x48xbf16>, vector<2x48xf32> -> vector<2x48xf32>
    %400 = arith.addf %396, %399 : vector<2x48xf32>
    %401 = arith.truncf %338 : vector<2x16xf32> to vector<2x16xbf16>
    %402 = vector.extract_strided_slice %339 {offsets = [80, 0], sizes = [16, 48], strides = [1, 1]} : vector<96x48xbf16> to vector<16x48xbf16>
    %cst_134 = arith.constant dense<0.000000e+00> : vector<2x48xf32>
    %403 = tpu.matmul %401, %402, %cst_134 {dimension_numbers = #tpu.dot_dimension_numbers<[1], [0], [0], [1], [0, 0, 1, 1], [], []>} : vector<2x16xbf16>, vector<16x48xbf16>, vector<2x48xf32> -> vector<2x48xf32>
    %404 = arith.addf %400, %403 : vector<2x48xf32>
    %c0_135 = arith.constant 0 : index
    %c0_136 = arith.constant 0 : index
    %405 = vector.load %arg14[%c0_135, %c0_136] : memref<1x48xf32, #tpu.memory_space<vmem>>, vector<1x48xf32>
    %406 = vector.broadcast %405 : vector<1x48xf32> to vector<2x48xf32>
    %407 = arith.addf %404, %406 : vector<2x48xf32>
    %cst_137 = arith.constant 0.000000e+00 : f32
    %408 = vector.broadcast %cst_137 : f32 to vector<2x48xf32>
    %409 = arith.maximumf %407, %408 : vector<2x48xf32>
    %410 = arith.truncf %409 : vector<2x48xf32> to vector<2x48xbf16>
    %c0_138 = arith.constant 0 : index
    %c0_139 = arith.constant 0 : index
    %411 = vector.load %arg15[%c0_138, %c0_139] : memref<48x24xbf16, #tpu.memory_space<vmem>>, vector<48x24xbf16>
    %cst_140 = arith.constant dense<0.000000e+00> : vector<2x24xf32>
    %412 = tpu.matmul %410, %411, %cst_140 {dimension_numbers = #tpu.dot_dimension_numbers<[1], [0], [0], [1], [0, 0, 1, 1], [], []>} : vector<2x48xbf16>, vector<48x24xbf16>, vector<2x24xf32> -> vector<2x24xf32>
    %c0_141 = arith.constant 0 : index
    %c0_142 = arith.constant 0 : index
    %413 = vector.load %arg16[%c0_141, %c0_142] : memref<1x24xf32, #tpu.memory_space<vmem>>, vector<1x24xf32>
    %414 = vector.broadcast %413 : vector<1x24xf32> to vector<2x24xf32>
    %415 = arith.addf %412, %414 : vector<2x24xf32>
    %cst_143 = arith.constant 0.000000e+00 : f32
    %416 = vector.broadcast %cst_143 : f32 to vector<2x24xf32>
    %417 = arith.maximumf %415, %416 : vector<2x24xf32>
    %418 = arith.truncf %417 : vector<2x24xf32> to vector<2x24xbf16>
    %c0_144 = arith.constant 0 : index
    %c0_145 = arith.constant 0 : index
    %419 = vector.load %arg17[%c0_144, %c0_145] : memref<24x3xbf16, #tpu.memory_space<vmem>>, vector<24x3xbf16>
    %cst_146 = arith.constant dense<0.000000e+00> : vector<2x3xf32>
    %420 = tpu.matmul %418, %419, %cst_146 {dimension_numbers = #tpu.dot_dimension_numbers<[1], [0], [0], [1], [0, 0, 1, 1], [], []>} : vector<2x24xbf16>, vector<24x3xbf16>, vector<2x3xf32> -> vector<2x3xf32>
    %c0_147 = arith.constant 0 : index
    %c0_148 = arith.constant 0 : index
    %421 = vector.load %arg18[%c0_147, %c0_148] : memref<1x3xf32, #tpu.memory_space<vmem>>, vector<1x3xf32>
    %422 = vector.broadcast %421 : vector<1x3xf32> to vector<2x3xf32>
    %423 = arith.addf %420, %422 : vector<2x3xf32>
    %c0_149 = arith.constant 0 : index
    %c0_150 = arith.constant 0 : index
    %424 = vector.load %arg19[%c0_149, %c0_150] : memref<2x3xf32, #tpu.memory_space<vmem>>, vector<2x3xf32>
    tpu.vector_store %arg19[%c0_149, %c0_150], %381 {strides = array<i32>} : memref<2x3xf32, #tpu.memory_space<vmem>>, vector<2x3xf32>,
    %cst_151 = arith.constant dense<0.000000e+00> : vector<3xf32>
    %425 = vector.multi_reduction <add>, %423, %cst_151 [0] : vector<2x3xf32> to vector<3xf32>
    %426 = vector.shape_cast %425 : vector<3xf32> to vector<1x3xf32>
    %cst_152 = arith.constant 2.000000e+00 : f32
    %427 = vector.broadcast %cst_152 : f32 to vector<1x3xf32>
    %428 = arith.divf %426, %427 : vector<1x3xf32>
    %429 = vector.broadcast %428 : vector<1x3xf32> to vector<2x3xf32>
    %430 = arith.subf %429, %423 : vector<2x3xf32>
    %431 = arith.mulf %430, %430 : vector<2x3xf32>
    %cst_153 = arith.constant dense<0.000000e+00> : vector<2xf32>
    %432 = vector.multi_reduction <add>, %431, %cst_153 [1] : vector<2x3xf32> to vector<2xf32>
    %433 = vector.shape_cast %432 : vector<2xf32> to vector<2x1xf32>
    %cst_154 = arith.constant dense<0.000000e+00> : vector<1xf32>
    %434 = vector.multi_reduction <add>, %433, %cst_154 [0] : vector<2x1xf32> to vector<1xf32>
    %435 = vector.shape_cast %434 : vector<1xf32> to vector<1x1xf32>
    %cst_155 = arith.constant 6.000000e+00 : f32
    %436 = vector.broadcast %cst_155 : f32 to vector<1x1xf32>
    %437 = arith.divf %435, %436 : vector<1x1xf32>
    %c0_156 = arith.constant 0 : index
    %c0_157 = arith.constant 0 : index
    %438 = vector.load %arg20[%c0_156, %c0_157] : memref<1x1xf32, #tpu.memory_space<vmem>>, vector<1x1xf32>
    tpu.vector_store %arg20[%c0_156, %c0_157], %437 {strides = array<i32>} : memref<1x1xf32, #tpu.memory_space<vmem>>, vector<1x1xf32>,
    return
  }
}

</mosaic_0001>

<llo_original>
// kernel: sagpool_readout_b.1
$region0: #{sagpool_readout_b.1}
  #allocation0 [shape = 'u32[]', space=smem, size = 0x4, offset = 0x4, fixed_abs, tag = 'smem constant byte address 0x4 - core index']
  #allocation1 [shape = 'u32[144,128]{1,0:T(1,128)}', space=vmem, size = 0x12000, scoped, tag = 'internal scratch']
  #allocation2 [shape = 'f32[1,1]{1,0:T(1,128)S(1)}', space=vmem, size = 0x200, scoped, tag = 'scoped memory for sagpool_readout_b.1']
  %s0 = inlined_call_operand.vmem [shape: bf16[16,16], index: 0, kind: input, shape index: {}]
  %s1 = inlined_call_operand.vmem [shape: bf16[16,16], index: 1, kind: input, shape index: {}]
  %s2 = inlined_call_operand.vmem [shape: f32[16,2], index: 2, kind: input, shape index: {}]
  %s3 = inlined_call_operand.vmem [shape: bf16[2,16], index: 3, kind: input, shape index: {}]
  %s4 = inlined_call_operand.vmem [shape: f32[2,16,1], index: 4, kind: input, shape index: {}]
  %s5 = inlined_call_operand.vmem [shape: bf16[16,16], index: 5, kind: input, shape index: {}]
  %s6 = inlined_call_operand.vmem [shape: f32[1,16], index: 6, kind: input, shape index: {}]
  %s7 = inlined_call_operand.vmem [shape: bf16[16,16], index: 7, kind: input, shape index: {}]
  %s8 = inlined_call_operand.vmem [shape: f32[1,16], index: 8, kind: input, shape index: {}]
  %s9 = inlined_call_operand.vmem [shape: bf16[16,16], index: 9, kind: input, shape index: {}]
  %s10 = inlined_call_operand.vmem [shape: f32[1,16], index: 10, kind: input, shape index: {}]
  %s11 = inlined_call_operand.vmem [shape: bf16[48,1], index: 11, kind: input, shape index: {}]
  %s12 = inlined_call_operand.<no memory space> [shape: f32[1,1], index: 12, kind: input, shape index: {}]
  %s13 = inlined_call_operand.vmem [shape: bf16[96,48], index: 13, kind: input, shape index: {}]
  %s14 = inlined_call_operand.vmem [shape: f32[1,48], index: 14, kind: input, shape index: {}]
  %s15 = inlined_call_operand.vmem [shape: bf16[48,24], index: 15, kind: input, shape index: {}]
  %s16 = inlined_call_operand.vmem [shape: f32[1,24], index: 16, kind: input, shape index: {}]
  %s17 = inlined_call_operand.vmem [shape: bf16[24,3], index: 17, kind: input, shape index: {}]
  %s18 = inlined_call_operand.vmem [shape: f32[1,3], index: 18, kind: input, shape index: {}]
  %s19 = inlined_call_operand.hbm [shape: f32[2,3], index: 19, kind: output, shape index: {0}]
  %s20 = inlined_call_operand.hbm [shape: f32[1,1], index: 20, kind: output, shape index: {1}]
  %21 = xla_tuple %s19, %s20
  %s22 = sld [smem:[#allocation0]]
  $region94: #{sagpool_readout_b.1} parent=0
    _
  %s24 = ssub.s32 1, %s22
  %s25 = scalar_select 0, %s24, %s22
  %v26 = vstv %s12
  %27 = vst [vmem:[#allocation2] sm:$0x1] %v26
  $region1: #{sagpool_readout_b.1} parent=0
    #allocation3 [shape = 'u8[1024]{0}', space=vmem, size = 0x400, scoped, tag = 'output window, operand 0, single buffered']
    #allocation4 [shape = 's32[1]{0}', space=sflag, size = 0x4, scoped, tag = 'scoped memory for sagpool_readout_b.1']
    #allocation5 [shape = 'u8[512]{0}', space=vmem, size = 0x400, scoped, tag = 'output window, operand 1, single buffered']
    #allocation6 [shape = 's32[1]{0}', space=sflag, size = 0x4, scoped, tag = 'scoped memory for sagpool_readout_b.1']
    %28 = vsyncpa [#allocation4], 0
    %29 = vsyncpa [#allocation6], 0
    // Predicated region
    $region2: #{sagpool_readout_b.1} parent=1 // pred_check
      _
    $region3: #{sagpool_readout_b.1} parent=1 // pred_check_branch
      %31 = sbr.rel (0) target = $region5
    $region4: #{sagpool_readout_b.1} parent=1 // pred_region
      _
    $region5: #{sagpool_readout_b.1} parent=1 // pred_fallthru
      _
    // Predicated region
    $region6: #{sagpool_readout_b.1} parent=1 // pred_check
      _
    $region7: #{sagpool_readout_b.1} parent=1 // pred_check_branch
      %33 = sbr.rel (0) target = $region9
    $region8: #{sagpool_readout_b.1} parent=1 // pred_region
      _
    $region9: #{sagpool_readout_b.1} parent=1 // pred_fallthru
      _
    // Predicated region
    $region10: #{sagpool_readout_b.1} parent=1 // pred_check
      _
    $region11: #{sagpool_readout_b.1} parent=1 // pred_check_branch
      %35 = sbr.rel (0) target = $region13
    $region12: #{sagpool_readout_b.1} parent=1 // pred_region
      _
    $region13: #{sagpool_readout_b.1} parent=1 // pred_fallthru
      _
    // Predicated region
    $region14: #{sagpool_readout_b.1} parent=1 // pred_check
      _
    $region15: #{sagpool_readout_b.1} parent=1 // pred_check_branch
      %37 = sbr.rel (0) target = $region17
    $region16: #{sagpool_readout_b.1} parent=1 // pred_region
      _
    $region17: #{sagpool_readout_b.1} parent=1 // pred_fallthru
      _
    // Predicated region
    $region18: #{sagpool_readout_b.1} parent=1 // pred_check
      _
    $region19: #{sagpool_readout_b.1} parent=1 // pred_check_branch
      %39 = sbr.rel (0) target = $region21
    $region20: #{sagpool_readout_b.1} parent=1 // pred_region
      _
    $region21: #{sagpool_readout_b.1} parent=1 // pred_fallthru
      _
    // Predicated region
    $region22: #{sagpool_readout_b.1} parent=1 // pred_check
      _
    $region23: #{sagpool_readout_b.1} parent=1 // pred_check_branch
      %41 = sbr.rel (0) target = $region25
    $region24: #{sagpool_readout_b.1} parent=1 // pred_region
      _
    $region25: #{sagpool_readout_b.1} parent=1 // pred_fallthru
      _
    // Predicated region
    $region26: #{sagpool_readout_b.1} parent=1 // pred_check
      _
    $region27: #{sagpool_readout_b.1} parent=1 // pred_check_branch
      %43 = sbr.rel (0) target = $region29
    $region28: #{sagpool_readout_b.1} parent=1 // pred_region
      _
    $region29: #{sagpool_readout_b.1} parent=1 // pred_fallthru
      _
    // Predicated region
    $region30: #{sagpool_readout_b.1} parent=1 // pred_check
      _
    $region31: #{sagpool_readout_b.1} parent=1 // pred_check_branch
      %45 = sbr.rel (0) target = $region33
    $region32: #{sagpool_readout_b.1} parent=1 // pred_region
      _
    $region33: #{sagpool_readout_b.1} parent=1 // pred_fallthru
      _
    // Predicated region
    $region34: #{sagpool_readout_b.1} parent=1 // pred_check
      _
    $region35: #{sagpool_readout_b.1} parent=1 // pred_check_branch
      %47 = sbr.rel (0) target = $region37
    $region36: #{sagpool_readout_b.1} parent=1 // pred_region
      _
    $region37: #{sagpool_readout_b.1} parent=1 // pred_fallthru
      _
    // Predicated region
    $region38: #{sagpool_readout_b.1} parent=1 // pred_check
      _
    $region39: #{sagpool_readout_b.1} parent=1 // pred_check_branch
      %49 = sbr.rel (0) target = $region41
    $region40: #{sagpool_readout_b.1} parent=1 // pred_region
      _
    $region41: #{sagpool_readout_b.1} parent=1 // pred_fallthru
      _
    // Predicated region
    $region42: #{sagpool_readout_b.1} parent=1 // pred_check
      _
    $region43: #{sagpool_readout_b.1} parent=1 // pred_check_branch
      %51 = sbr.rel (0) target = $region45
    $region44: #{sagpool_readout_b.1} parent=1 // pred_region
      _
    $region45: #{sagpool_readout_b.1} parent=1 // pred_fallthru
      _
    // Predicated region
    $region46: #{sagpool_readout_b.1} parent=1 // pred_check
      _
    $region47: #{sagpool_readout_b.1} parent=1 // pred_check_branch
      %53 = sbr.rel (0) target = $region49
    $region48: #{sagpool_readout_b.1} parent=1 // pred_region
      _
    $region49: #{sagpool_readout_b.1} parent=1 // pred_fallthru
      _
    // Predicated region
    $region50: #{sagpool_readout_b.1} parent=1 // pred_check
      _
    $region51: #{sagpool_readout_b.1} parent=1 // pred_check_branch
      %55 = sbr.rel (0) target = $region53
    $region52: #{sagpool_readout_b.1} parent=1 // pred_region
      _
    $region53: #{sagpool_readout_b.1} parent=1 // pred_fallthru
      _
    // Predicated region
    $region54: #{sagpool_readout_b.1} parent=1 // pred_check
      _
    $region55: #{sagpool_readout_b.1} parent=1 // pred_check_branch
      %57 = sbr.rel (0) target = $region57
    $region56: #{sagpool_readout_b.1} parent=1 // pred_region
      _
    $region57: #{sagpool_readout_b.1} parent=1 // pred_fallthru
      _
    // Predicated region
    $region58: #{sagpool_readout_b.1} parent=1 // pred_check
      _
    $region59: #{sagpool_readout_b.1} parent=1 // pred_check_branch
      %59 = sbr.rel (0) target = $region61
    $region60: #{sagpool_readout_b.1} parent=1 // pred_region
      _
    $region61: #{sagpool_readout_b.1} parent=1 // pred_fallthru
      _
    // Predicated region
    $region62: #{sagpool_readout_b.1} parent=1 // pred_check
      _
    $region63: #{sagpool_readout_b.1} parent=1 // pred_check_branch
      %61 = sbr.rel (0) target = $region65
    $region64: #{sagpool_readout_b.1} parent=1 // pred_region
      _
    $region65: #{sagpool_readout_b.1} parent=1 // pred_fallthru
      _
    // Predicated region
    $region66: #{sagpool_readout_b.1} parent=1 // pred_check
      _
    $region67: #{sagpool_readout_b.1} parent=1 // pred_check_branch
      %63 = sbr.rel (0) target = $region69
    $region68: #{sagpool_readout_b.1} parent=1 // pred_region
      _
    $region69: #{sagpool_readout_b.1} parent=1 // pred_fallthru
      _
    // Predicated region
    $region70: #{sagpool_readout_b.1} parent=1 // pred_check
      _
    $region71: #{sagpool_readout_b.1} parent=1 // pred_check_branch
      %65 = sbr.rel (0) target = $region73
    $region72: #{sagpool_readout_b.1} parent=1 // pred_region
      _
    $region73: #{sagpool_readout_b.1} parent=1 // pred_fallthru
      _
    // Predicated region
    $region74: #{sagpool_readout_b.1} parent=1 // pred_check
      _
    $region75: #{sagpool_readout_b.1} parent=1 // pred_check_branch
      %67 = sbr.rel (0) target = $region77
    $region76: #{sagpool_readout_b.1} parent=1 // pred_region
      _
    $region77: #{sagpool_readout_b.1} parent=1 // pred_fallthru
      _
    %v69 = vld [vmem:[%s0] sm:$0xf]
    %v70 = vld [vmem:[%s0 + $0x4] sm:$0xf]
    %v71 = vld [vmem:[%s2] sm:$0xff]
    %v72 = vld [vmem:[%s2 + $0x8] sm:$0xff]
    %v73 = vld [vmem:[%s3] sm:$0x1]
    %v74 = vld [vmem:[%s4] sm:$0xff]
    %v75 = vld [vmem:[%s4 + $0x8] sm:$0xff]
    %v76 = vld [vmem:[%s4 + $0x10] sm:$0xff]
    %v77 = vld [vmem:[%s4 + $0x18] sm:$0xff]
    %v78 = vld [vmem:[%s1] sm:$0xf]
    %v79 = vld [vmem:[%s1 + $0x4] sm:$0xf]
    %v80 = vld [vmem:[%s5] sm:$0xf]
    %v81 = vld [vmem:[%s5 + $0x4] sm:$0xf]
    %v84 = vunpack.c.l.b16 %v78
    %v85 = vunpack.c.l.b16 %v79
    %v86 = vpack.c.b16 %v85, %v84
    %v89 = vunpack.c.l.b16 %v80
    %v90 = vunpack.c.l.b16 %v81
    %v91 = vpack.c.b16 %v90, %v89
    %vm93 = vcmask 130048
    %v95 = vsel %vm93, %v86, 0
    %97 = vmatprep.subr.bf16.mxu0 0
    %98 = vmatpush1.bf16.msra.mxu0 0
    %99 = vmatprep.subr.bf16.mxu0 0
    %100 = vmatpush1.bf16.msra.mxu0 0
    %101 = vmatprep.subr.bf16.mxu0 0
    %102 = vmatpush1.bf16.msra.mxu0 0
    %103 = vmatprep.subr.bf16.mxu0 0
    %104 = vmatpush1.bf16.msra.mxu0 0
    %105 = vmatprep.subr.bf16.mxu0 0
    %106 = vmatpush1.bf16.msra.mxu0 0
    %107 = vmatprep.subr.bf16.mxu0 0
    %108 = vmatpush1.bf16.msra.mxu0 0
    %109 = vmatprep.subr.bf16.mxu0 0
    %110 = vmatpush1.bf16.msra.mxu0 0
    %111 = vmatprep.subr.bf16.mxu0 0
    %112 = vmatpush1.bf16.msra.mxu0 %v91
    %113 = vmatprep.subr.bf16.mxu0 0
    %114 = vmatpush2.bf16.msra.mxu0 0
    %115 = vmatprep.subr.bf16.mxu0 0
    %116 = vmatpush2.bf16.msra.mxu0 0
    %117 = vmatprep.subr.bf16.mxu0 0
    %118 = vmatpush2.bf16.msra.mxu0 0
    %119 = vmatprep.subr.bf16.mxu0 0
    %120 = vmatpush2.bf16.msra.mxu0 0
    %121 = vmatprep.subr.bf16.mxu0 0
    %122 = vmatpush2.bf16.msra.mxu0 0
    %123 = vmatprep.subr.bf16.mxu0 0
    %124 = vmatpush2.bf16.msra.mxu0 0
    %125 = vmatprep.subr.bf16.mxu0 0
    %126 = vmatpush2.bf16.msra.mxu0 0
    %127 = vmatprep.subr.bf16.mxu0 0
    %128 = vmatpush2.bf16.msra.mxu0 0
    %129 = vmatprep.mubr.bf16.mxu0 0
    %130 = vmatmul.mubr.bf16.gmra.mxu0 %v95
    %v131 = vpop.f32.mrf.mxu0
    %v132 = vadd.f32 0.0, %v131
    %v133 = vpop.f32.mrf.mxu0
    %v134 = vpop.f32.mrf.mxu0
    %v135 = vadd.f32 0.0, %v134
    %v136 = vpop.f32.mrf.mxu0
    %137 = vdwg.mxu0
    %v138 = vpack.c.bf16 %v135, %v132
    %v139 = vld [vmem:[%s6] sm:$0x1]
    %v141 = vlaneseq
    %v142 = vshrl.u32 %v141, 7
    %v143 = vsub.s32 0, %v142
    %v144 = vrot.slane %v139, %v143
    %v148 = vunpack.c.l.b16 %v69
    %v149 = vunpack.c.l.b16 %v70
    %v150 = vpack.c.b16 %v149, %v148
    %v152 = vsel %vm93, %v150, 0
    %154 = vmatprep.subr.bf16.mxu0 0
    %155 = vmatpush1.bf16.msra.mxu0 0
    %156 = vmatprep.subr.bf16.mxu0 0
    %157 = vmatpush1.bf16.msra.mxu0 0
    %158 = vmatprep.subr.bf16.mxu0 0
    %159 = vmatpush1.bf16.msra.mxu0 0
    %160 = vmatprep.subr.bf16.mxu0 0
    %161 = vmatpush1.bf16.msra.mxu0 0
    %162 = vmatprep.subr.bf16.mxu0 0
    %163 = vmatpush1.bf16.msra.mxu0 0
    %164 = vmatprep.subr.bf16.mxu0 0
    %165 = vmatpush1.bf16.msra.mxu0 0
    %166 = vmatprep.subr.bf16.mxu0 0
    %167 = vmatpush1.bf16.msra.mxu0 0
    %168 = vmatprep.subr.bf16.mxu0 0
    %169 = vmatpush1.bf16.msra.mxu0 %v138
    %170 = vmatprep.subr.bf16.mxu0 0
    %171 = vmatpush2.bf16.msra.mxu0 0
    %172 = vmatprep.subr.bf16.mxu0 0
    %173 = vmatpush2.bf16.msra.mxu0 0
    %174 = vmatprep.subr.bf16.mxu0 0
    %175 = vmatpush2.bf16.msra.mxu0 0
    %176 = vmatprep.subr.bf16.mxu0 0
    %177 = vmatpush2.bf16.msra.mxu0 0
    %178 = vmatprep.subr.bf16.mxu0 0
    %179 = vmatpush2.bf16.msra.mxu0 0
    %180 = vmatprep.subr.bf16.mxu0 0
    %181 = vmatpush2.bf16.msra.mxu0 0
    %182 = vmatprep.subr.bf16.mxu0 0
    %183 = vmatpush2.bf16.msra.mxu0 0
    %184 = vmatprep.subr.bf16.mxu0 0
    %185 = vmatpush2.bf16.msra.mxu0 0
    %186 = vmatprep.mubr.bf16.mxu0 0
    %187 = vmatmul.mubr.bf16.gmra.mxu0 %v152
    %v188 = vpop.f32.mrf.mxu0
    %v189 = vadd.f32 %v144, %v188
    %v190 = vpop.f32.mrf.mxu0
    %v191 = vpop.f32.mrf.mxu0
    %v192 = vadd.f32 %v144, %v191
    %v193 = vpop.f32.mrf.mxu0
    %194 = vdwg.mxu0
    %v195 = vmax.f32 %v189, 0.0
    %v196 = vmax.f32 %v192, 0.0
    %v197 = vpack.c.bf16 %v196, %v195
    %v198 = vld [vmem:[%s7] sm:$0xf]
    %v199 = vld [vmem:[%s7 + $0x4] sm:$0xf]
    %v202 = vunpack.c.l.b16 %v198
    %v203 = vunpack.c.l.b16 %v199
    %v204 = vpack.c.b16 %v203, %v202
    %v207 = vsel %vm93, %v197, 0
    %209 = vmatprep.subr.bf16.mxu0 0
    %210 = vmatpush1.bf16.msra.mxu0 0
    %211 = vmatprep.subr.bf16.mxu0 0
    %212 = vmatpush1.bf16.msra.mxu0 0
    %213 = vmatprep.subr.bf16.mxu0 0
    %214 = vmatpush1.bf16.msra.mxu0 0
    %215 = vmatprep.subr.bf16.mxu0 0
    %216 = vmatpush1.bf16.msra.mxu0 0
    %217 = vmatprep.subr.bf16.mxu0 0
    %218 = vmatpush1.bf16.msra.mxu0 0
    %219 = vmatprep.subr.bf16.mxu0 0
    %220 = vmatpush1.bf16.msra.mxu0 0
    %221 = vmatprep.subr.bf16.mxu0 0
    %222 = vmatpush1.bf16.msra.mxu0 0
    %223 = vmatprep.subr.bf16.mxu0 0
    %224 = vmatpush1.bf16.msra.mxu0 %v204
    %225 = vmatprep.subr.bf16.mxu0 0
    %226 = vmatpush2.bf16.msra.mxu0 0
    %227 = vmatprep.subr.bf16.mxu0 0
    %228 = vmatpush2.bf16.msra.mxu0 0
    %229 = vmatprep.subr.bf16.mxu0 0
    %230 = vmatpush2.bf16.msra.mxu0 0
    %231 = vmatprep.subr.bf16.mxu0 0
    %232 = vmatpush2.bf16.msra.mxu0 0
    %233 = vmatprep.subr.bf16.mxu0 0
    %234 = vmatpush2.bf16.msra.mxu0 0
    %235 = vmatprep.subr.bf16.mxu0 0
    %236 = vmatpush2.bf16.msra.mxu0 0
    %237 = vmatprep.subr.bf16.mxu0 0
    %238 = vmatpush2.bf16.msra.mxu0 0
    %239 = vmatprep.subr.bf16.mxu0 0
    %240 = vmatpush2.bf16.msra.mxu0 0
    %241 = vmatprep.mubr.bf16.mxu0 0
    %242 = vmatmul.mubr.bf16.gmra.mxu0 %v207
    %v243 = vpop.f32.mrf.mxu0
    %v244 = vadd.f32 0.0, %v243
    %v245 = vpop.f32.mrf.mxu0
    %v246 = vpop.f32.mrf.mxu0
    %v247 = vadd.f32 0.0, %v246
    %v248 = vpop.f32.mrf.mxu0
    %249 = vdwg.mxu0
    %v250 = vpack.c.bf16 %v247, %v244
    %v251 = vld [vmem:[%s8] sm:$0x1]
    %v253 = vlaneseq
    %v254 = vshrl.u32 %v253, 7
    %v255 = vsub.s32 0, %v254
    %v256 = vrot.slane %v251, %v255
    %258 = vmatprep.subr.bf16.mxu0 0
    %259 = vmatpush1.bf16.msra.mxu0 0
    %260 = vmatprep.subr.bf16.mxu0 0
    %261 = vmatpush1.bf16.msra.mxu0 0
    %262 = vmatprep.subr.bf16.mxu0 0
    %263 = vmatpush1.bf16.msra.mxu0 0
    %264 = vmatprep.subr.bf16.mxu0 0
    %265 = vmatpush1.bf16.msra.mxu0 0
    %266 = vmatprep.subr.bf16.mxu0 0
    %267 = vmatpush1.bf16.msra.mxu0 0
    %268 = vmatprep.subr.bf16.mxu0 0
    %269 = vmatpush1.bf16.msra.mxu0 0
    %270 = vmatprep.subr.bf16.mxu0 0
    %271 = vmatpush1.bf16.msra.mxu0 0
    %272 = vmatprep.subr.bf16.mxu0 0
    %273 = vmatpush1.bf16.msra.mxu0 %v250
    %274 = vmatprep.subr.bf16.mxu0 0
    %275 = vmatpush2.bf16.msra.mxu0 0
    %276 = vmatprep.subr.bf16.mxu0 0
    %277 = vmatpush2.bf16.msra.mxu0 0
    %278 = vmatprep.subr.bf16.mxu0 0
    %279 = vmatpush2.bf16.msra.mxu0 0
    %280 = vmatprep.subr.bf16.mxu0 0
    %281 = vmatpush2.bf16.msra.mxu0 0
    %282 = vmatprep.subr.bf16.mxu0 0
    %283 = vmatpush2.bf16.msra.mxu0 0
    %284 = vmatprep.subr.bf16.mxu0 0
    %285 = vmatpush2.bf16.msra.mxu0 0
    %286 = vmatprep.subr.bf16.mxu0 0
    %287 = vmatpush2.bf16.msra.mxu0 0
    %288 = vmatprep.subr.bf16.mxu0 0
    %289 = vmatpush2.bf16.msra.mxu0 0
    %290 = vmatprep.mubr.bf16.mxu0 0
    %291 = vmatmul.mubr.bf16.gmra.mxu0 %v152
    %v292 = vpop.f32.mrf.mxu0
    %v293 = vadd.f32 %v256, %v292
    %v294 = vpop.f32.mrf.mxu0
    %v295 = vpop.f32.mrf.mxu0
    %v296 = vadd.f32 %v256, %v295
    %v297 = vpop.f32.mrf.mxu0
    %298 = vdwg.mxu0
    %v299 = vmax.f32 %v293, 0.0
    %v300 = vmax.f32 %v296, 0.0
    %v301 = vpack.c.bf16 %v300, %v299
    %v302 = vld [vmem:[%s9] sm:$0xf]
    %v303 = vld [vmem:[%s9 + $0x4] sm:$0xf]
    %v306 = vunpack.c.l.b16 %v302
    %v307 = vunpack.c.l.b16 %v303
    %v308 = vpack.c.b16 %v307, %v306
    %v311 = vsel %vm93, %v301, 0
    %313 = vmatprep.subr.bf16.mxu0 0
    %314 = vmatpush1.bf16.msra.mxu0 0
    %315 = vmatprep.subr.bf16.mxu0 0
    %316 = vmatpush1.bf16.msra.mxu0 0
    %317 = vmatprep.subr.bf16.mxu0 0
    %318 = vmatpush1.bf16.msra.mxu0 0
    %319 = vmatprep.subr.bf16.mxu0 0
    %320 = vmatpush1.bf16.msra.mxu0 0
    %321 = vmatprep.subr.bf16.mxu0 0
    %322 = vmatpush1.bf16.msra.mxu0 0
    %323 = vmatprep.subr.bf16.mxu0 0
    %324 = vmatpush1.bf16.msra.mxu0 0
    %325 = vmatprep.subr.bf16.mxu0 0
    %326 = vmatpush1.bf16.msra.mxu0 0
    %327 = vmatprep.subr.bf16.mxu0 0
    %328 = vmatpush1.bf16.msra.mxu0 %v308
    %329 = vmatprep.subr.bf16.mxu0 0
    %330 = vmatpush2.bf16.msra.mxu0 0
    %331 = vmatprep.subr.bf16.mxu0 0
    %332 = vmatpush2.bf16.msra.mxu0 0
    %333 = vmatprep.subr.bf16.mxu0 0
    %334 = vmatpush2.bf16.msra.mxu0 0
    %335 = vmatprep.subr.bf16.mxu0 0
    %336 = vmatpush2.bf16.msra.mxu0 0
    %337 = vmatprep.subr.bf16.mxu0 0
    %338 = vmatpush2.bf16.msra.mxu0 0
    %339 = vmatprep.subr.bf16.mxu0 0
    %340 = vmatpush2.bf16.msra.mxu0 0
    %341 = vmatprep.subr.bf16.mxu0 0
    %342 = vmatpush2.bf16.msra.mxu0 0
    %343 = vmatprep.subr.bf16.mxu0 0
    %344 = vmatpush2.bf16.msra.mxu0 0
    %345 = vmatprep.mubr.bf16.mxu0 0
    %346 = vmatmul.mubr.bf16.gmra.mxu0 %v311
    %v347 = vpop.f32.mrf.mxu0
    %v348 = vadd.f32 0.0, %v347
    %v349 = vpop.f32.mrf.mxu0
    %v350 = vpop.f32.mrf.mxu0
    %v351 = vadd.f32 0.0, %v350
    %v352 = vpop.f32.mrf.mxu0
    %353 = vdwg.mxu0
    %v354 = vpack.c.bf16 %v351, %v348
    %v355 = vld [vmem:[%s10] sm:$0x1]
    %v357 = vlaneseq
    %v358 = vshrl.u32 %v357, 7
    %v359 = vsub.s32 0, %v358
    %v360 = vrot.slane %v355, %v359
    %362 = vmatprep.subr.bf16.mxu0 0
    %363 = vmatpush1.bf16.msra.mxu0 0
    %364 = vmatprep.subr.bf16.mxu0 0
    %365 = vmatpush1.bf16.msra.mxu0 0
    %366 = vmatprep.subr.bf16.mxu0 0
    %367 = vmatpush1.bf16.msra.mxu0 0
    %368 = vmatprep.subr.bf16.mxu0 0
    %369 = vmatpush1.bf16.msra.mxu0 0
    %370 = vmatprep.subr.bf16.mxu0 0
    %371 = vmatpush1.bf16.msra.mxu0 0
    %372 = vmatprep.subr.bf16.mxu0 0
    %373 = vmatpush1.bf16.msra.mxu0 0
    %374 = vmatprep.subr.bf16.mxu0 0
    %375 = vmatpush1.bf16.msra.mxu0 0
    %376 = vmatprep.subr.bf16.mxu0 0
    %377 = vmatpush1.bf16.msra.mxu0 %v354
    %378 = vmatprep.subr.bf16.mxu0 0
    %379 = vmatpush2.bf16.msra.mxu0 0
    %380 = vmatprep.subr.bf16.mxu0 0
    %381 = vmatpush2.bf16.msra.mxu0 0
    %382 = vmatprep.subr.bf16.mxu0 0
    %383 = vmatpush2.bf16.msra.mxu0 0
    %384 = vmatprep.subr.bf16.mxu0 0
    %385 = vmatpush2.bf16.msra.mxu0 0
    %386 = vmatprep.subr.bf16.mxu0 0
    %387 = vmatpush2.bf16.msra.mxu0 0
    %388 = vmatprep.subr.bf16.mxu0 0
    %389 = vmatpush2.bf16.msra.mxu0 0
    %390 = vmatprep.subr.bf16.mxu0 0
    %391 = vmatpush2.bf16.msra.mxu0 0
    %392 = vmatprep.subr.bf16.mxu0 0
    %393 = vmatpush2.bf16.msra.mxu0 0
    %394 = vmatprep.mubr.bf16.mxu0 0
    %395 = vmatmul.mubr.bf16.gmra.mxu0 %v152
    %v396 = vpop.f32.mrf.mxu0
    %v397 = vadd.f32 %v360, %v396
    %v398 = vpop.f32.mrf.mxu0
    %v399 = vpop.f32.mrf.mxu0
    %v400 = vadd.f32 %v360, %v399
    %v401 = vpop.f32.mrf.mxu0
    %402 = vdwg.mxu0
    %v403 = vmax.f32 %v397, 0.0
    %v404 = vmax.f32 %v400, 0.0
    %v405 = vpack.c.bf16 %v404, %v403
    %v406 = vld [vmem:[%s11] sm:$0xf]
    %v407 = vld [vmem:[%s11 + $0x4] sm:$0xf]
    %v408 = vld [vmem:[%s11 + $0x8] sm:$0xf]
    %v409 = vld [vmem:[%s11 + $0xc] sm:$0xf]
    %v410 = vld [vmem:[%s11 + $0x10] sm:$0xf]
    %v411 = vld [vmem:[%s11 + $0x14] sm:$0xf]
    %v414 = vunpack.c.l.b16 %v408
    %v415 = vunpack.c.l.b16 %v409
    %v416 = vpack.c.b16 %v415, %v414
    %418 = vmatprep.subr.bf16.mxu0 0
    %419 = vmatpush1.bf16.msra.mxu0 0
    %420 = vmatprep.subr.bf16.mxu0 0
    %421 = vmatpush1.bf16.msra.mxu0 0
    %422 = vmatprep.subr.bf16.mxu0 0
    %423 = vmatpush1.bf16.msra.mxu0 0
    %424 = vmatprep.subr.bf16.mxu0 0
    %425 = vmatpush1.bf16.msra.mxu0 0
    %426 = vmatprep.subr.bf16.mxu0 0
    %427 = vmatpush1.bf16.msra.mxu0 0
    %428 = vmatprep.subr.bf16.mxu0 0
    %429 = vmatpush1.bf16.msra.mxu0 0
    %430 = vmatprep.subr.bf16.mxu0 0
    %431 = vmatpush1.bf16.msra.mxu0 0
    %432 = vmatprep.subr.bf16.mxu0 0
    %433 = vmatpush1.bf16.msra.mxu0 %v416
    %434 = vmatprep.subr.bf16.mxu0 0
    %435 = vmatpush2.bf16.msra.mxu0 0
    %436 = vmatprep.subr.bf16.mxu0 0
    %437 = vmatpush2.bf16.msra.mxu0 0
    %438 = vmatprep.subr.bf16.mxu0 0
    %439 = vmatpush2.bf16.msra.mxu0 0
    %440 = vmatprep.subr.bf16.mxu0 0
    %441 = vmatpush2.bf16.msra.mxu0 0
    %442 = vmatprep.subr.bf16.mxu0 0
    %443 = vmatpush2.bf16.msra.mxu0 0
    %444 = vmatprep.subr.bf16.mxu0 0
    %445 = vmatpush2.bf16.msra.mxu0 0
    %446 = vmatprep.subr.bf16.mxu0 0
    %447 = vmatpush2.bf16.msra.mxu0 0
    %448 = vmatprep.subr.bf16.mxu0 0
    %449 = vmatpush2.bf16.msra.mxu0 0
    %450 = vmatprep.mubr.bf16.mxu0 0
    %451 = vmatmul.mubr.bf16.gmra.mxu0 %v311
    %v452 = vpop.f32.mrf.mxu0
    %v453 = vadd.f32 0.0, %v452
    %v454 = vpop.f32.mrf.mxu0
    %v455 = vpop.f32.mrf.mxu0
    %v456 = vadd.f32 0.0, %v455
    %v457 = vpop.f32.mrf.mxu0
    %458 = vdwg.mxu0
    %v461 = vunpack.c.l.b16 %v406
    %v462 = vunpack.c.l.b16 %v407
    %v463 = vpack.c.b16 %v462, %v461
    %465 = vmatprep.subr.bf16.mxu0 0
    %466 = vmatpush1.bf16.msra.mxu0 0
    %467 = vmatprep.subr.bf16.mxu0 0
    %468 = vmatpush1.bf16.msra.mxu0 0
    %469 = vmatprep.subr.bf16.mxu0 0
    %470 = vmatpush1.bf16.msra.mxu0 0
    %471 = vmatprep.subr.bf16.mxu0 0
    %472 = vmatpush1.bf16.msra.mxu0 0
    %473 = vmatprep.subr.bf16.mxu0 0
    %474 = vmatpush1.bf16.msra.mxu0 0
    %475 = vmatprep.subr.bf16.mxu0 0
    %476 = vmatpush1.bf16.msra.mxu0 0
    %477 = vmatprep.subr.bf16.mxu0 0
    %478 = vmatpush1.bf16.msra.mxu0 0
    %479 = vmatprep.subr.bf16.mxu0 0
    %480 = vmatpush1.bf16.msra.mxu0 %v463
    %481 = vmatprep.subr.bf16.mxu0 0
    %482 = vmatpush2.bf16.msra.mxu0 0
    %483 = vmatprep.subr.bf16.mxu0 0
    %484 = vmatpush2.bf16.msra.mxu0 0
    %485 = vmatprep.subr.bf16.mxu0 0
    %486 = vmatpush2.bf16.msra.mxu0 0
    %487 = vmatprep.subr.bf16.mxu0 0
    %488 = vmatpush2.bf16.msra.mxu0 0
    %489 = vmatprep.subr.bf16.mxu0 0
    %490 = vmatpush2.bf16.msra.mxu0 0
    %491 = vmatprep.subr.bf16.mxu0 0
    %492 = vmatpush2.bf16.msra.mxu0 0
    %493 = vmatprep.subr.bf16.mxu0 0
    %494 = vmatpush2.bf16.msra.mxu0 0
    %495 = vmatprep.subr.bf16.mxu0 0
    %496 = vmatpush2.bf16.msra.mxu0 0
    %497 = vmatprep.mubr.bf16.mxu0 0
    %498 = vmatmul.mubr.bf16.gmra.mxu0 %v207
    %v499 = vpop.f32.mrf.mxu0
    %v500 = vadd.f32 %v453, %v499
    %v501 = vpop.f32.mrf.mxu0
    %v502 = vpop.f32.mrf.mxu0
    %v503 = vadd.f32 %v456, %v502
    %v504 = vpop.f32.mrf.mxu0
    %505 = vdwg.mxu0
    %v508 = vunpack.c.l.b16 %v410
    %v509 = vunpack.c.l.b16 %v411
    %v510 = vpack.c.b16 %v509, %v508
    %v513 = vsel %vm93, %v405, 0
    %515 = vmatprep.subr.bf16.mxu0 0
    %516 = vmatpush1.bf16.msra.mxu0 0
    %517 = vmatprep.subr.bf16.mxu0 0
    %518 = vmatpush1.bf16.msra.mxu0 0
    %519 = vmatprep.subr.bf16.mxu0 0
    %520 = vmatpush1.bf16.msra.mxu0 0
    %521 = vmatprep.subr.bf16.mxu0 0
    %522 = vmatpush1.bf16.msra.mxu0 0
    %523 = vmatprep.subr.bf16.mxu0 0
    %524 = vmatpush1.bf16.msra.mxu0 0
    %525 = vmatprep.subr.bf16.mxu0 0
    %526 = vmatpush1.bf16.msra.mxu0 0
    %527 = vmatprep.subr.bf16.mxu0 0
    %528 = vmatpush1.bf16.msra.mxu0 0
    %529 = vmatprep.subr.bf16.mxu0 0
    %530 = vmatpush1.bf16.msra.mxu0 %v510
    %531 = vmatprep.subr.bf16.mxu0 0
    %532 = vmatpush2.bf16.msra.mxu0 0
    %533 = vmatprep.subr.bf16.mxu0 0
    %534 = vmatpush2.bf16.msra.mxu0 0
    %535 = vmatprep.subr.bf16.mxu0 0
    %536 = vmatpush2.bf16.msra.mxu0 0
    %537 = vmatprep.subr.bf16.mxu0 0
    %538 = vmatpush2.bf16.msra.mxu0 0
    %539 = vmatprep.subr.bf16.mxu0 0
    %540 = vmatpush2.bf16.msra.mxu0 0
    %541 = vmatprep.subr.bf16.mxu0 0
    %542 = vmatpush2.bf16.msra.mxu0 0
    %543 = vmatprep.subr.bf16.mxu0 0
    %544 = vmatpush2.bf16.msra.mxu0 0
    %545 = vmatprep.subr.bf16.mxu0 0
    %546 = vmatpush2.bf16.msra.mxu0 0
    %547 = vmatprep.mubr.bf16.mxu0 0
    %548 = vmatmul.mubr.bf16.gmra.mxu0 %v513
    %v549 = vpop.f32.mrf.mxu0
    %v550 = vadd.f32 0.0, %v549
    %v551 = vpop.f32.mrf.mxu0
    %v552 = vpop.f32.mrf.mxu0
    %v553 = vadd.f32 0.0, %v552
    %v554 = vpop.f32.mrf.mxu0
    %555 = vdwg.mxu0
    %v556 = vadd.f32 %v500, %v550
    %v557 = vadd.f32 %v503, %v553
    %v558 = vpack.c.bf16 %v557, %v556
    %v559 = vld [vmem:[#allocation2] sm:$0x1]
    %v561 = vlaneseq
    %v562 = vshrl.u32 %v561, 7
    %v563 = vsub.s32 0, %v562
    %v564 = vrot.slane %v559, %v563
    %566 = vmatprep.subr.bf16.mxu0 0
    %567 = vmatpush1.bf16.msra.mxu0 0
    %568 = vmatprep.subr.bf16.mxu0 0
    %569 = vmatpush1.bf16.msra.mxu0 0
    %570 = vmatprep.subr.bf16.mxu0 0
    %571 = vmatpush1.bf16.msra.mxu0 0
    %572 = vmatprep.subr.bf16.mxu0 0
    %573 = vmatpush1.bf16.msra.mxu0 0
    %574 = vmatprep.subr.bf16.mxu0 0
    %575 = vmatpush1.bf16.msra.mxu0 0
    %576 = vmatprep.subr.bf16.mxu0 0
    %577 = vmatpush1.bf16.msra.mxu0 0
    %578 = vmatprep.subr.bf16.mxu0 0
    %579 = vmatpush1.bf16.msra.mxu0 0
    %580 = vmatprep.subr.bf16.mxu0 0
    %581 = vmatpush1.bf16.msra.mxu0 %v558
    %582 = vmatprep.subr.bf16.mxu0 0
    %583 = vmatpush2.bf16.msra.mxu0 0
    %584 = vmatprep.subr.bf16.mxu0 0
    %585 = vmatpush2.bf16.msra.mxu0 0
    %586 = vmatprep.subr.bf16.mxu0 0
    %587 = vmatpush2.bf16.msra.mxu0 0
    %588 = vmatprep.subr.bf16.mxu0 0
    %589 = vmatpush2.bf16.msra.mxu0 0
    %590 = vmatprep.subr.bf16.mxu0 0
    %591 = vmatpush2.bf16.msra.mxu0 0
    %592 = vmatprep.subr.bf16.mxu0 0
    %593 = vmatpush2.bf16.msra.mxu0 0
    %594 = vmatprep.subr.bf16.mxu0 0
    %595 = vmatpush2.bf16.msra.mxu0 0
    %596 = vmatprep.subr.bf16.mxu0 0
    %597 = vmatpush2.bf16.msra.mxu0 0
    %598 = vmatprep.mubr.bf16.mxu0 0
    %599 = vmatmul.mubr.bf16.gmra.mxu0 %v152
    %v600 = vpop.f32.mrf.mxu0
    %v601 = vadd.f32 %v564, %v600
    %v602 = vpop.f32.mrf.mxu0
    %v603 = vpop.f32.mrf.mxu0
    %v604 = vadd.f32 %v564, %v603
    %v605 = vpop.f32.mrf.mxu0
    %606 = vdwg.mxu0
    %vm607 = vcmp.gt.f32.partialorder %v71, 0.0
    %vm608 = vcmp.gt.f32.partialorder %v72, 0.0
    %v609 = vlaneseq
    %v610 = vshrl.u32 %v609, 7
    %v611 = vadd.s32 %v610, 8
    %v612 = vcvt.s32.f32 %v610
    %v613 = vcvt.s32.f32 %v611
    %vm614 = vcmp.gt.f32.partialorder 0.0, 0.0
    %v615 = vsel %vm614, -1e+30, %v601
    %v616 = vsel %vm614, -1e+30, %v604
    %618 = vset.pattern.permute.xlu0 0
    %619 = vperm.xlu0 %618, %v615
    %v620 = vpop.permute.xlu0 %619
    %623 = vset.pattern.permute.xlu0 0
    %624 = vperm.xlu0 %623, %v616
    %v625 = vpop.permute.xlu0 %624
    %v627 = vsel %vm607, %v620, -1e+30
    %v628 = vsel %vm608, %v625, -1e+30
    %vm629 = vcmask 15360
    %v630 = vsel %vm629, %v627, -inf
    %v631 = vsel %vm629, %v628, -inf
    %v632 = vmax.f32 %v630, %v631
    %v633 = vrot.slane %v632, 4
    %v634 = vmax.f32 %v632, %v633
    %v635 = vrot.slane %v634, 2
    %v636 = vmax.f32 %v634, %v635
    %v637 = vrot.slane %v636, 1
    %v638 = vmax.f32 %v636, %v637
    %v639 = vmul.f32 %v71, %v638
    %v640 = vmul.f32 %v72, %v638
    %v641 = vsel %vm629, %v639, 0.0
    %642 = vadd.xlane.f32.xlu0 %v641
    %v643 = vpop.xlane.xlu0 %642
    %v644 = vsel %vm629, %v640, 0.0
    %645 = vadd.xlane.f32.xlu0 %v644
    %v646 = vpop.xlane.xlu0 %645
    %vm647 = vcmp.ge.f32.partialorder %v615, %v643
    %vm648 = vcmp.ge.f32.partialorder %v616, %v646
    %vm649 = vcmp.lt.f32.partialorder 0.0, 0.5
    %vm650 = vmand %vm647, %vm649
    %vm651 = vmand %vm648, %vm649
    %v652 = vsel %vm650, %v612, 1e+09
    %v653 = vsel %vm651, %v613, 1e+09
    %655 = vset.pattern.permute.xlu0 0
    %656 = vperm.xlu0 %655, %v652
    %v657 = vpop.permute.xlu0 %656
    %660 = vset.pattern.permute.xlu0 0
    %661 = vperm.xlu0 %660, %v653
    %v662 = vpop.permute.xlu0 %661
    %v664 = vsel %vm607, %v657, 1e+09
    %v665 = vsel %vm608, %v662, 1e+09
    %v666 = vsel %vm629, %v664, inf
    %v667 = vsel %vm629, %v665, inf
    %v668 = vmin.f32 %v666, %v667
    %v669 = vrot.slane %v668, 4
    %v670 = vmin.f32 %v668, %v669
    %v671 = vrot.slane %v670, 2
    %v672 = vmin.f32 %v670, %v671
    %v673 = vrot.slane %v672, 1
    %v674 = vmin.f32 %v672, %v673
    %v675 = vmul.f32 %v71, %v674
    %v676 = vmul.f32 %v72, %v674
    %v677 = vsel %vm629, %v675, 0.0
    %678 = vadd.xlane.f32.xlu0 %v677
    %v679 = vpop.xlane.xlu0 %678
    %v680 = vsel %vm629, %v676, 0.0
    %681 = vadd.xlane.f32.xlu0 %v680
    %v682 = vpop.xlane.xlu0 %681
    %vm683 = vcmp.eq.f32.partialorder %v612, %v679
    %vm684 = vcmp.eq.f32.partialorder %v613, %v682
    %vm685 = vmand %vm650, %vm683
    %vm686 = vmand %vm651, %vm684
    %v687 = vsel %vm685, 1.0, 0.0
    %v688 = vsel %vm686, 1.0, 0.0
    %vm689 = vcmp.gt.f32.partialorder %v687, 0.0
    %vm690 = vcmp.gt.f32.partialorder %v688, 0.0
    %v691 = vsel %vm689, -1e+30, %v601
    %v692 = vsel %vm690, -1e+30, %v604
    %694 = vset.pattern.permute.xlu0 0
    %695 = vperm.xlu0 %694, %v691
    %v696 = vpop.permute.xlu0 %695
    %699 = vset.pattern.permute.xlu0 0
    %700 = vperm.xlu0 %699, %v692
    %v701 = vpop.permute.xlu0 %700
    %v703 = vsel %vm607, %v696, -1e+30
    %v704 = vsel %vm608, %v701, -1e+30
    %v705 = vsel %vm629, %v703, -inf
    %v706 = vsel %vm629, %v704, -inf
    %v707 = vmax.f32 %v705, %v706
    %v708 = vrot.slane %v707, 4
    %v709 = vmax.f32 %v707, %v708
    %v710 = vrot.slane %v709, 2
    %v711 = vmax.f32 %v709, %v710
    %v712 = vrot.slane %v711, 1
    %v713 = vmax.f32 %v711, %v712
    %v714 = vmul.f32 %v71, %v713
    %v715 = vmul.f32 %v72, %v713
    %v716 = vsel %vm629, %v714, 0.0
    %717 = vadd.xlane.f32.xlu0 %v716
    %v718 = vpop.xlane.xlu0 %717
    %v719 = vsel %vm629, %v715, 0.0
    %720 = vadd.xlane.f32.xlu0 %v719
    %v721 = vpop.xlane.xlu0 %720
    %vm722 = vcmp.ge.f32.partialorder %v691, %v718
    %vm723 = vcmp.ge.f32.partialorder %v692, %v721
    %vm724 = vcmp.lt.f32.partialorder %v687, 0.5
    %vm725 = vcmp.lt.f32.partialorder %v688, 0.5
    %vm726 = vmand %vm722, %vm724
    %vm727 = vmand %vm723, %vm725
    %v728 = vsel %vm726, %v612, 1e+09
    %v729 = vsel %vm727, %v613, 1e+09
    %731 = vset.pattern.permute.xlu0 0
    %732 = vperm.xlu0 %731, %v728
    %v733 = vpop.permute.xlu0 %732
    %736 = vset.pattern.permute.xlu0 0
    %737 = vperm.xlu0 %736, %v729
    %v738 = vpop.permute.xlu0 %737
    %v740 = vsel %vm607, %v733, 1e+09
    %v741 = vsel %vm608, %v738, 1e+09
    %v742 = vsel %vm629, %v740, inf
    %v743 = vsel %vm629, %v741, inf
    %v744 = vmin.f32 %v742, %v743
    %v745 = vrot.slane %v744, 4
    %v746 = vmin.f32 %v744, %v745
    %v747 = vrot.slane %v746, 2
    %v748 = vmin.f32 %v746, %v747
    %v749 = vrot.slane %v748, 1
    %v750 = vmin.f32 %v748, %v749
    %v751 = vmul.f32 %v71, %v750
    %v752 = vmul.f32 %v72, %v750
    %v753 = vsel %vm629, %v751, 0.0
    %754 = vadd.xlane.f32.xlu0 %v753
    %v755 = vpop.xlane.xlu0 %754
    %v756 = vsel %vm629, %v752, 0.0
    %757 = vadd.xlane.f32.xlu0 %v756
    %v758 = vpop.xlane.xlu0 %757
    %vm759 = vcmp.eq.f32.partialorder %v612, %v755
    %vm760 = vcmp.eq.f32.partialorder %v613, %v758
    %vm761 = vmand %vm726, %vm759
    %vm762 = vmand %vm727, %vm760
    %v763 = vsel %vm761, 1.0, %v687
    %v764 = vsel %vm762, 1.0, %v688
    %vm765 = vcmp.gt.f32.partialorder %v763, 0.0
    %vm766 = vcmp.gt.f32.partialorder %v764, 0.0
    %v767 = vsel %vm765, -1e+30, %v601
    %v768 = vsel %vm766, -1e+30, %v604
    %770 = vset.pattern.permute.xlu0 0
    %771 = vperm.xlu0 %770, %v767
    %v772 = vpop.permute.xlu0 %771
    %775 = vset.pattern.permute.xlu0 0
    %776 = vperm.xlu0 %775, %v768
    %v777 = vpop.permute.xlu0 %776
    %v779 = vsel %vm607, %v772, -1e+30
    %v780 = vsel %vm608, %v777, -1e+30
    %v781 = vsel %vm629, %v779, -inf
    %v782 = vsel %vm629, %v780, -inf
    %v783 = vmax.f32 %v781, %v782
    %v784 = vrot.slane %v783, 4
    %v785 = vmax.f32 %v783, %v784
    %v786 = vrot.slane %v785, 2
    %v787 = vmax.f32 %v785, %v786
    %v788 = vrot.slane %v787, 1
    %v789 = vmax.f32 %v787, %v788
    %v790 = vmul.f32 %v71, %v789
    %v791 = vmul.f32 %v72, %v789
    %v792 = vsel %vm629, %v790, 0.0
    %793 = vadd.xlane.f32.xlu0 %v792
    %v794 = vpop.xlane.xlu0 %793
    %v795 = vsel %vm629, %v791, 0.0
    %796 = vadd.xlane.f32.xlu0 %v795
    %v797 = vpop.xlane.xlu0 %796
    %vm798 = vcmp.ge.f32.partialorder %v767, %v794
    %vm799 = vcmp.ge.f32.partialorder %v768, %v797
    %vm800 = vcmp.lt.f32.partialorder %v763, 0.5
    %vm801 = vcmp.lt.f32.partialorder %v764, 0.5
    %vm802 = vmand %vm798, %vm800
    %vm803 = vmand %vm799, %vm801
    %v804 = vsel %vm802, %v612, 1e+09
    %v805 = vsel %vm803, %v613, 1e+09
    %807 = vset.pattern.permute.xlu0 0
    %808 = vperm.xlu0 %807, %v804
    %v809 = vpop.permute.xlu0 %808
    %812 = vset.pattern.permute.xlu0 0
    %813 = vperm.xlu0 %812, %v805
    %v814 = vpop.permute.xlu0 %813
    %v816 = vsel %vm607, %v809, 1e+09
    %v817 = vsel %vm608, %v814, 1e+09
    %v818 = vsel %vm629, %v816, inf
    %v819 = vsel %vm629, %v817, inf
    %v820 = vmin.f32 %v818, %v819
    %v821 = vrot.slane %v820, 4
    %v822 = vmin.f32 %v820, %v821
    %v823 = vrot.slane %v822, 2
    %v824 = vmin.f32 %v822, %v823
    %v825 = vrot.slane %v824, 1
    %v826 = vmin.f32 %v824, %v825
    %v827 = vmul.f32 %v71, %v826
    %v828 = vmul.f32 %v72, %v826
    %v829 = vsel %vm629, %v827, 0.0
    %830 = vadd.xlane.f32.xlu0 %v829
    %v831 = vpop.xlane.xlu0 %830
    %v832 = vsel %vm629, %v828, 0.0
    %833 = vadd.xlane.f32.xlu0 %v832
    %v834 = vpop.xlane.xlu0 %833
    %vm835 = vcmp.eq.f32.partialorder %v612, %v831
    %vm836 = vcmp.eq.f32.partialorder %v613, %v834
    %vm837 = vmand %vm802, %vm835
    %vm838 = vmand %vm803, %vm836
    %v839 = vsel %vm837, 1.0, %v763
    %v840 = vsel %vm838, 1.0, %v764
    %vm841 = vcmp.gt.f32.partialorder %v839, 0.0
    %vm842 = vcmp.gt.f32.partialorder %v840, 0.0
    %v843 = vsel %vm841, -1e+30, %v601
    %v844 = vsel %vm842, -1e+30, %v604
    %846 = vset.pattern.permute.xlu0 0
    %847 = vperm.xlu0 %846, %v843
    %v848 = vpop.permute.xlu0 %847
    %851 = vset.pattern.permute.xlu0 0
    %852 = vperm.xlu0 %851, %v844
    %v853 = vpop.permute.xlu0 %852
    %v855 = vsel %vm607, %v848, -1e+30
    %v856 = vsel %vm608, %v853, -1e+30
    %v857 = vsel %vm629, %v855, -inf
    %v858 = vsel %vm629, %v856, -inf
    %v859 = vmax.f32 %v857, %v858
    %v860 = vrot.slane %v859, 4
    %v861 = vmax.f32 %v859, %v860
    %v862 = vrot.slane %v861, 2
    %v863 = vmax.f32 %v861, %v862
    %v864 = vrot.slane %v863, 1
    %v865 = vmax.f32 %v863, %v864
    %v866 = vmul.f32 %v71, %v865
    %v867 = vmul.f32 %v72, %v865
    %v868 = vsel %vm629, %v866, 0.0
    %869 = vadd.xlane.f32.xlu0 %v868
    %v870 = vpop.xlane.xlu0 %869
    %v871 = vsel %vm629, %v867, 0.0
    %872 = vadd.xlane.f32.xlu0 %v871
    %v873 = vpop.xlane.xlu0 %872
    %vm874 = vcmp.ge.f32.partialorder %v843, %v870
    %vm875 = vcmp.ge.f32.partialorder %v844, %v873
    %vm876 = vcmp.lt.f32.partialorder %v839, 0.5
    %vm877 = vcmp.lt.f32.partialorder %v840, 0.5
    %vm878 = vmand %vm874, %vm876
    %vm879 = vmand %vm875, %vm877
    %v880 = vsel %vm878, %v612, 1e+09
    %v881 = vsel %vm879, %v613, 1e+09
    %883 = vset.pattern.permute.xlu0 0
    %884 = vperm.xlu0 %883, %v880
    %v885 = vpop.permute.xlu0 %884
    %888 = vset.pattern.permute.xlu0 0
    %889 = vperm.xlu0 %888, %v881
    %v890 = vpop.permute.xlu0 %889
    %v892 = vsel %vm607, %v885, 1e+09
    %v893 = vsel %vm608, %v890, 1e+09
    %v894 = vsel %vm629, %v892, inf
    %v895 = vsel %vm629, %v893, inf
    %v896 = vmin.f32 %v894, %v895
    %v897 = vrot.slane %v896, 4
    %v898 = vmin.f32 %v896, %v897
    %v899 = vrot.slane %v898, 2
    %v900 = vmin.f32 %v898, %v899
    %v901 = vrot.slane %v900, 1
    %v902 = vmin.f32 %v900, %v901
    %v903 = vmul.f32 %v71, %v902
    %v904 = vmul.f32 %v72, %v902
    %v905 = vsel %vm629, %v903, 0.0
    %906 = vadd.xlane.f32.xlu0 %v905
    %v907 = vpop.xlane.xlu0 %906
    %v908 = vsel %vm629, %v904, 0.0
    %909 = vadd.xlane.f32.xlu0 %v908
    %v910 = vpop.xlane.xlu0 %909
    %vm911 = vcmp.eq.f32.partialorder %v612, %v907
    %vm912 = vcmp.eq.f32.partialorder %v613, %v910
    %vm913 = vmand %vm878, %vm911
    %vm914 = vmand %vm879, %vm912
    %v915 = vsel %vm913, 1.0, %v839
    %v916 = vsel %vm914, 1.0, %v840
    %v917 = vsub.f32 1.0, %v915
    %v918 = vsub.f32 1.0, %v916
    %v919 = vtanh.pop %v601
    %v920 = vtanh.pop %v604
    %v921 = vpack.c.bf16 %v916, %v915
    %v923 = vsel %vm93, %v73, 0
    %925 = vmatprep.subr.bf16.mxu0 0
    %926 = vmatpush1.bf16.msra.mxu0 0
    %927 = vmatprep.subr.bf16.mxu0 0
    %928 = vmatpush1.bf16.msra.mxu0 0
    %929 = vmatprep.subr.bf16.mxu0 0
    %930 = vmatpush1.bf16.msra.mxu0 0
    %931 = vmatprep.subr.bf16.mxu0 0
    %932 = vmatpush1.bf16.msra.mxu0 0
    %933 = vmatprep.subr.bf16.mxu0 0
    %934 = vmatpush1.bf16.msra.mxu0 0
    %935 = vmatprep.subr.bf16.mxu0 0
    %936 = vmatpush1.bf16.msra.mxu0 0
    %937 = vmatprep.subr.bf16.mxu0 0
    %938 = vmatpush1.bf16.msra.mxu0 0
    %939 = vmatprep.subr.bf16.mxu0 0
    %940 = vmatpush1.bf16.msra.mxu0 %v921
    %941 = vmatprep.subr.bf16.mxu0 0
    %942 = vmatpush2.bf16.msra.mxu0 0
    %943 = vmatprep.subr.bf16.mxu0 0
    %944 = vmatpush2.bf16.msra.mxu0 0
    %945 = vmatprep.subr.bf16.mxu0 0
    %946 = vmatpush2.bf16.msra.mxu0 0
    %947 = vmatprep.subr.bf16.mxu0 0
    %948 = vmatpush2.bf16.msra.mxu0 0
    %949 = vmatprep.subr.bf16.mxu0 0
    %950 = vmatpush2.bf16.msra.mxu0 0
    %951 = vmatprep.subr.bf16.mxu0 0
    %952 = vmatpush2.bf16.msra.mxu0 0
    %953 = vmatprep.subr.bf16.mxu0 0
    %954 = vmatpush2.bf16.msra.mxu0 0
    %955 = vmatprep.subr.bf16.mxu0 0
    %956 = vmatpush2.bf16.msra.mxu0 0
    %957 = vmatprep.mubr.bf16.mxu0 0
    %958 = vmatmul.mubr.bf16.gmra.mxu0 %v923
    %v959 = vpop.f32.mrf.mxu0
    %v960 = vadd.f32 0.0, %v959
    %v961 = vpop.f32.mrf.mxu0
    %v962 = vpop.f32.mrf.mxu0
    %v963 = vpop.f32.mrf.mxu0
    %964 = vdwg.mxu0
    %v965 = vpack.c.bf16 %v918, %v917
    %966 = vmatprep.subr.bf16.mxu0 0
    %967 = vmatpush1.bf16.msra.mxu0 0
    %968 = vmatprep.subr.bf16.mxu0 0
    %969 = vmatpush1.bf16.msra.mxu0 0
    %970 = vmatprep.subr.bf16.mxu0 0
    %971 = vmatpush1.bf16.msra.mxu0 0
    %972 = vmatprep.subr.bf16.mxu0 0
    %973 = vmatpush1.bf16.msra.mxu0 0
    %974 = vmatprep.subr.bf16.mxu0 0
    %975 = vmatpush1.bf16.msra.mxu0 0
    %976 = vmatprep.subr.bf16.mxu0 0
    %977 = vmatpush1.bf16.msra.mxu0 0
    %978 = vmatprep.subr.bf16.mxu0 0
    %979 = vmatpush1.bf16.msra.mxu0 0
    %980 = vmatprep.subr.bf16.mxu0 0
    %981 = vmatpush1.bf16.msra.mxu0 %v965
    %982 = vmatprep.subr.bf16.mxu0 0
    %983 = vmatpush2.bf16.msra.mxu0 0
    %984 = vmatprep.subr.bf16.mxu0 0
    %985 = vmatpush2.bf16.msra.mxu0 0
    %986 = vmatprep.subr.bf16.mxu0 0
    %987 = vmatpush2.bf16.msra.mxu0 0
    %988 = vmatprep.subr.bf16.mxu0 0
    %989 = vmatpush2.bf16.msra.mxu0 0
    %990 = vmatprep.subr.bf16.mxu0 0
    %991 = vmatpush2.bf16.msra.mxu0 0
    %992 = vmatprep.subr.bf16.mxu0 0
    %993 = vmatpush2.bf16.msra.mxu0 0
    %994 = vmatprep.subr.bf16.mxu0 0
    %995 = vmatpush2.bf16.msra.mxu0 0
    %996 = vmatprep.subr.bf16.mxu0 0
    %997 = vmatpush2.bf16.msra.mxu0 0
    %998 = vmatprep.mubr.bf16.mxu0 0
    %999 = vmatmul.mubr.bf16.gmra.mxu0 %v923
    %v1000 = vpop.f32.mrf.mxu0
    %v1001 = vadd.f32 0.0, %v1000
    %v1002 = vpop.f32.mrf.mxu0
    %v1003 = vpop.f32.mrf.mxu0
    %v1004 = vpop.f32.mrf.mxu0
    %1005 = vdwg.mxu0
    %v1006 = vmax.f32 %v960, 1.0
    %v1007 = vrcp.pop %v1006
    %v1008 = vmax.f32 %v1001, 1.0
    %v1009 = vrcp.pop %v1008
    %v1010 = vmul.f32 %v74, %v915
    %v1011 = vmul.f32 %v75, %v916
    %v1012 = vmul.f32 %v76, %v915
    %v1013 = vmul.f32 %v77, %v916
    %vm1014 = vcmp.gt.f32.partialorder %v1010, 0.0
    %vm1015 = vcmp.gt.f32.partialorder %v1011, 0.0
    %vm1016 = vcmp.gt.f32.partialorder %v1012, 0.0
    %vm1017 = vcmp.gt.f32.partialorder %v1013, 0.0
    %v1018 = vmul.f32 %v74, %v917
    %v1019 = vmul.f32 %v75, %v918
    %v1020 = vmul.f32 %v76, %v917
    %v1021 = vmul.f32 %v77, %v918
    %vm1022 = vcmp.gt.f32.partialorder %v1018, 0.0
    %vm1023 = vcmp.gt.f32.partialorder %v1019, 0.0
    %vm1024 = vcmp.gt.f32.partialorder %v1020, 0.0
    %vm1025 = vcmp.gt.f32.partialorder %v1021, 0.0
    %1027 = vset.pattern.permute.xlu0 0
    %1028 = vperm.xlu0 %1027, %v919
    %v1029 = vpop.permute.xlu0 %1028
    %1032 = vset.pattern.permute.xlu0 0
    %1033 = vperm.xlu0 %1032, %v920
    %v1034 = vpop.permute.xlu0 %1033
    %v1036 = vmul.f32 %v195, %v1029
    %v1037 = vmul.f32 %v196, %v1034
    %1039 = vset.pattern.permute.xlu0 0
    %1040 = vperm.xlu0 %1039, %v915
    %v1041 = vpop.permute.xlu0 %1040
    %1044 = vset.pattern.permute.xlu0 0
    %1045 = vperm.xlu0 %1044, %v916
    %v1046 = vpop.permute.xlu0 %1045
    %v1048 = vmul.f32 %v1036, %v1041
    %v1049 = vmul.f32 %v1037, %v1046
    %v1050 = vpack.c.bf16 %v1049, %v1048
    %1052 = vset.pattern.permute.xlu0 0
    %1053 = vperm.xlu0 %1052, %v917
    %v1054 = vpop.permute.xlu0 %1053
    %1057 = vset.pattern.permute.xlu0 0
    %1058 = vperm.xlu0 %1057, %v918
    %v1059 = vpop.permute.xlu0 %1058
    %v1061 = vmul.f32 %v1036, %v1054
    %v1062 = vmul.f32 %v1037, %v1059
    %v1063 = vpack.c.bf16 %v1062, %v1061
    %1064 = vmatprep.subr.bf16.mxu0 0
    %1065 = vmatpush1.bf16.msra.mxu0 0
    %1066 = vmatprep.subr.bf16.mxu0 0
    %1067 = vmatpush1.bf16.msra.mxu0 0
    %1068 = vmatprep.subr.bf16.mxu0 0
    %1069 = vmatpush1.bf16.msra.mxu0 0
    %1070 = vmatprep.subr.bf16.mxu0 0
    %1071 = vmatpush1.bf16.msra.mxu0 0
    %1072 = vmatprep.subr.bf16.mxu0 0
    %1073 = vmatpush1.bf16.msra.mxu0 0
    %1074 = vmatprep.subr.bf16.mxu0 0
    %1075 = vmatpush1.bf16.msra.mxu0 0
    %1076 = vmatprep.subr.bf16.mxu0 0
    %1077 = vmatpush1.bf16.msra.mxu0 0
    %1078 = vmatprep.subr.bf16.mxu0 0
    %1079 = vmatpush1.bf16.msra.mxu0 %v1050
    %1080 = vmatprep.subr.bf16.mxu0 0
    %1081 = vmatpush2.bf16.msra.mxu0 0
    %1082 = vmatprep.subr.bf16.mxu0 0
    %1083 = vmatpush2.bf16.msra.mxu0 0
    %1084 = vmatprep.subr.bf16.mxu0 0
    %1085 = vmatpush2.bf16.msra.mxu0 0
    %1086 = vmatprep.subr.bf16.mxu0 0
    %1087 = vmatpush2.bf16.msra.mxu0 0
    %1088 = vmatprep.subr.bf16.mxu0 0
    %1089 = vmatpush2.bf16.msra.mxu0 0
    %1090 = vmatprep.subr.bf16.mxu0 0
    %1091 = vmatpush2.bf16.msra.mxu0 0
    %1092 = vmatprep.subr.bf16.mxu0 0
    %1093 = vmatpush2.bf16.msra.mxu0 0
    %1094 = vmatprep.subr.bf16.mxu0 0
    %1095 = vmatpush2.bf16.msra.mxu0 0
    %1096 = vmatprep.mubr.bf16.mxu0 0
    %1097 = vmatmul.mubr.bf16.gmra.mxu0 %v923
    %v1098 = vpop.f32.mrf.mxu0
    %v1099 = vadd.f32 0.0, %v1098
    %v1100 = vpop.f32.mrf.mxu0
    %v1101 = vpop.f32.mrf.mxu0
    %v1102 = vpop.f32.mrf.mxu0
    %1103 = vdwg.mxu0
    %1105 = vset.pattern.permute.xlu0 0
    %1106 = vperm.xlu0 %1105, %v1007
    %v1107 = vpop.permute.xlu0 %1106
    %v1109 = vmul.f32 %v1099, %v1107
    %1110 = vmatprep.subr.bf16.mxu0 0
    %1111 = vmatpush1.bf16.msra.mxu0 0
    %1112 = vmatprep.subr.bf16.mxu0 0
    %1113 = vmatpush1.bf16.msra.mxu0 0
    %1114 = vmatprep.subr.bf16.mxu0 0
    %1115 = vmatpush1.bf16.msra.mxu0 0
    %1116 = vmatprep.subr.bf16.mxu0 0
    %1117 = vmatpush1.bf16.msra.mxu0 0
    %1118 = vmatprep.subr.bf16.mxu0 0
    %1119 = vmatpush1.bf16.msra.mxu0 0
    %1120 = vmatprep.subr.bf16.mxu0 0
    %1121 = vmatpush1.bf16.msra.mxu0 0
    %1122 = vmatprep.subr.bf16.mxu0 0
    %1123 = vmatpush1.bf16.msra.mxu0 0
    %1124 = vmatprep.subr.bf16.mxu0 0
    %1125 = vmatpush1.bf16.msra.mxu0 %v1063
    %1126 = vmatprep.subr.bf16.mxu0 0
    %1127 = vmatpush2.bf16.msra.mxu0 0
    %1128 = vmatprep.subr.bf16.mxu0 0
    %1129 = vmatpush2.bf16.msra.mxu0 0
    %1130 = vmatprep.subr.bf16.mxu0 0
    %1131 = vmatpush2.bf16.msra.mxu0 0
    %1132 = vmatprep.subr.bf16.mxu0 0
    %1133 = vmatpush2.bf16.msra.mxu0 0
    %1134 = vmatprep.subr.bf16.mxu0 0
    %1135 = vmatpush2.bf16.msra.mxu0 0
    %1136 = vmatprep.subr.bf16.mxu0 0
    %1137 = vmatpush2.bf16.msra.mxu0 0
    %1138 = vmatprep.subr.bf16.mxu0 0
    %1139 = vmatpush2.bf16.msra.mxu0 0
    %1140 = vmatprep.subr.bf16.mxu0 0
    %1141 = vmatpush2.bf16.msra.mxu0 0
    %1142 = vmatprep.mubr.bf16.mxu0 0
    %1143 = vmatmul.mubr.bf16.gmra.mxu0 %v923
    %v1144 = vpop.f32.mrf.mxu0
    %v1145 = vadd.f32 0.0, %v1144
    %v1146 = vpop.f32.mrf.mxu0
    %v1147 = vpop.f32.mrf.mxu0
    %v1148 = vpop.f32.mrf.mxu0
    %1149 = vdwg.mxu0
    %1151 = vset.pattern.permute.xlu0 0
    %1152 = vperm.xlu0 %1151, %v1009
    %v1153 = vpop.permute.xlu0 %1152
    %v1155 = vmul.f32 %v1145, %v1153
    %v1156 = vsel %vm1014, 1, 0
    %v1157 = vsel %vm1015, 1, 0
    %v1158 = vsel %vm1016, 1, 0
    %v1159 = vsel %vm1017, 1, 0
    %1160 = vset.pattern.permute.xlu0 0
    %1161 = vperm.xlu0 %1160, %v1156
    %v1162 = vpop.permute.xlu0 %1161
    %1163 = vset.pattern.permute.xlu0 0
    %1164 = vperm.xlu0 %1163, %v1157
    %v1165 = vpop.permute.xlu0 %1164
    %1166 = vset.pattern.permute.xlu0 0
    %1167 = vperm.xlu0 %1166, %v1158
    %v1168 = vpop.permute.xlu0 %1167
    %1169 = vset.pattern.permute.xlu0 0
    %1170 = vperm.xlu0 %1169, %v1159
    %v1171 = vpop.permute.xlu0 %1170
    %vm1172 = vcmp.eq.s32.totalorder %v1162, 1
    %vm1173 = vcmp.eq.s32.totalorder %v1165, 1
    %vm1174 = vcmp.eq.s32.totalorder %v1168, 1
    %vm1175 = vcmp.eq.s32.totalorder %v1171, 1
    %v1176 = vsel %vm1172, %v1036, -1e+30
    %v1177 = vsel %vm1173, %v1037, -1e+30
    %v1178 = vsel %vm1174, %v1036, -1e+30
    %v1179 = vsel %vm1175, %v1037, -1e+30
    %v1180 = vsel %vm93, %v1176, -inf
    %v1181 = vsel %vm93, %v1177, -inf
    %v1182 = vmax.f32 %v1180, %v1181
    %v1183 = vrot.slane %v1182, 4
    %v1184 = vmax.f32 %v1182, %v1183
    %v1185 = vrot.slane %v1184, 2
    %v1186 = vmax.f32 %v1184, %v1185
    %v1187 = vrot.slane %v1186, 1
    %v1188 = vmax.f32 %v1186, %v1187
    %v1189 = vsel %vm93, %v1178, -inf
    %v1190 = vsel %vm93, %v1179, -inf
    %v1191 = vmax.f32 %v1189, %v1190
    %v1192 = vrot.slane %v1191, 4
    %v1193 = vmax.f32 %v1191, %v1192
    %v1194 = vrot.slane %v1193, 2
    %v1195 = vmax.f32 %v1193, %v1194
    %v1196 = vrot.slane %v1195, 1
    %v1197 = vmax.f32 %v1195, %v1196
    %v1198 = vsel %vm1022, 1, 0
    %v1199 = vsel %vm1023, 1, 0
    %v1200 = vsel %vm1024, 1, 0
    %v1201 = vsel %vm1025, 1, 0
    %1202 = vset.pattern.permute.xlu0 0
    %1203 = vperm.xlu0 %1202, %v1198
    %v1204 = vpop.permute.xlu0 %1203
    %1205 = vset.pattern.permute.xlu0 0
    %1206 = vperm.xlu0 %1205, %v1199
    %v1207 = vpop.permute.xlu0 %1206
    %1208 = vset.pattern.permute.xlu0 0
    %1209 = vperm.xlu0 %1208, %v1200
    %v1210 = vpop.permute.xlu0 %1209
    %1211 = vset.pattern.permute.xlu0 0
    %1212 = vperm.xlu0 %1211, %v1201
    %v1213 = vpop.permute.xlu0 %1212
    %vm1214 = vcmp.eq.s32.totalorder %v1204, 1
    %vm1215 = vcmp.eq.s32.totalorder %v1207, 1
    %vm1216 = vcmp.eq.s32.totalorder %v1210, 1
    %vm1217 = vcmp.eq.s32.totalorder %v1213, 1
    %v1218 = vsel %vm1214, %v1036, -1e+30
    %v1219 = vsel %vm1215, %v1037, -1e+30
    %v1220 = vsel %vm1216, %v1036, -1e+30
    %v1221 = vsel %vm1217, %v1037, -1e+30
    %v1222 = vsel %vm93, %v1218, -inf
    %v1223 = vsel %vm93, %v1219, -inf
    %v1224 = vmax.f32 %v1222, %v1223
    %v1225 = vrot.slane %v1224, 4
    %v1226 = vmax.f32 %v1224, %v1225
    %v1227 = vrot.slane %v1226, 2
    %v1228 = vmax.f32 %v1226, %v1227
    %v1229 = vrot.slane %v1228, 1
    %v1230 = vmax.f32 %v1228, %v1229
    %v1231 = vsel %vm93, %v1220, -inf
    %v1232 = vsel %vm93, %v1221, -inf
    %v1233 = vmax.f32 %v1231, %v1232
    %v1234 = vrot.slane %v1233, 4
    %v1235 = vmax.f32 %v1233, %v1234
    %v1236 = vrot.slane %v1235, 2
    %v1237 = vmax.f32 %v1235, %v1236
    %v1238 = vrot.slane %v1237, 1
    %v1239 = vmax.f32 %v1237, %v1238
    %vm1240 = vcmp.gt.f32.partialorder %v960, 0.0
    %v1241 = vsel %vm1240, 1, 0
    %1242 = vset.pattern.permute.xlu0 0
    %1243 = vperm.xlu0 %1242, %v1241
    %v1244 = vpop.permute.xlu0 %1243
    %vm1245 = vcmp.eq.s32.totalorder %v1244, 1
    %vm1248 = vcmask 1041409
    %v1249 = vsel %vm1248, %v1197, %v1188
    %v1251 = vsel %vm1245, %v1249, 0.0
    %vm1252 = vcmp.gt.f32.partialorder %v1001, 0.0
    %v1253 = vsel %vm1252, 1, 0
    %1254 = vset.pattern.permute.xlu0 0
    %1255 = vperm.xlu0 %1254, %v1253
    %v1256 = vpop.permute.xlu0 %1255
    %vm1257 = vcmp.eq.s32.totalorder %v1256, 1
    %v1260 = vsel %vm1248, %v1239, %v1230
    %v1262 = vsel %vm1257, %v1260, 0.0
    %v1263 = vmul.f32 %v299, %v1029
    %v1264 = vmul.f32 %v300, %v1034
    %v1265 = vmul.f32 %v1263, %v1041
    %v1266 = vmul.f32 %v1264, %v1046
    %v1267 = vpack.c.bf16 %v1266, %v1265
    %v1268 = vmul.f32 %v1263, %v1054
    %v1269 = vmul.f32 %v1264, %v1059
    %v1270 = vpack.c.bf16 %v1269, %v1268
    %1271 = vmatprep.subr.bf16.mxu0 0
    %1272 = vmatpush1.bf16.msra.mxu0 0
    %1273 = vmatprep.subr.bf16.mxu0 0
    %1274 = vmatpush1.bf16.msra.mxu0 0
    %1275 = vmatprep.subr.bf16.mxu0 0
    %1276 = vmatpush1.bf16.msra.mxu0 0
    %1277 = vmatprep.subr.bf16.mxu0 0
    %1278 = vmatpush1.bf16.msra.mxu0 0
    %1279 = vmatprep.subr.bf16.mxu0 0
    %1280 = vmatpush1.bf16.msra.mxu0 0
    %1281 = vmatprep.subr.bf16.mxu0 0
    %1282 = vmatpush1.bf16.msra.mxu0 0
    %1283 = vmatprep.subr.bf16.mxu0 0
    %1284 = vmatpush1.bf16.msra.mxu0 0
    %1285 = vmatprep.subr.bf16.mxu0 0
    %1286 = vmatpush1.bf16.msra.mxu0 %v1267
    %1287 = vmatprep.subr.bf16.mxu0 0
    %1288 = vmatpush2.bf16.msra.mxu0 0
    %1289 = vmatprep.subr.bf16.mxu0 0
    %1290 = vmatpush2.bf16.msra.mxu0 0
    %1291 = vmatprep.subr.bf16.mxu0 0
    %1292 = vmatpush2.bf16.msra.mxu0 0
    %1293 = vmatprep.subr.bf16.mxu0 0
    %1294 = vmatpush2.bf16.msra.mxu0 0
    %1295 = vmatprep.subr.bf16.mxu0 0
    %1296 = vmatpush2.bf16.msra.mxu0 0
    %1297 = vmatprep.subr.bf16.mxu0 0
    %1298 = vmatpush2.bf16.msra.mxu0 0
    %1299 = vmatprep.subr.bf16.mxu0 0
    %1300 = vmatpush2.bf16.msra.mxu0 0
    %1301 = vmatprep.subr.bf16.mxu0 0
    %1302 = vmatpush2.bf16.msra.mxu0 0
    %1303 = vmatprep.mubr.bf16.mxu0 0
    %1304 = vmatmul.mubr.bf16.gmra.mxu0 %v923
    %v1305 = vpop.f32.mrf.mxu0
    %v1306 = vadd.f32 0.0, %v1305
    %v1307 = vpop.f32.mrf.mxu0
    %v1308 = vpop.f32.mrf.mxu0
    %v1309 = vpop.f32.mrf.mxu0
    %1310 = vdwg.mxu0
    %v1311 = vmul.f32 %v1306, %v1107
    %1312 = vmatprep.subr.bf16.mxu0 0
    %1313 = vmatpush1.bf16.msra.mxu0 0
    %1314 = vmatprep.subr.bf16.mxu0 0
    %1315 = vmatpush1.bf16.msra.mxu0 0
    %1316 = vmatprep.subr.bf16.mxu0 0
    %1317 = vmatpush1.bf16.msra.mxu0 0
    %1318 = vmatprep.subr.bf16.mxu0 0
    %1319 = vmatpush1.bf16.msra.mxu0 0
    %1320 = vmatprep.subr.bf16.mxu0 0
    %1321 = vmatpush1.bf16.msra.mxu0 0
    %1322 = vmatprep.subr.bf16.mxu0 0
    %1323 = vmatpush1.bf16.msra.mxu0 0
    %1324 = vmatprep.subr.bf16.mxu0 0
    %1325 = vmatpush1.bf16.msra.mxu0 0
    %1326 = vmatprep.subr.bf16.mxu0 0
    %1327 = vmatpush1.bf16.msra.mxu0 %v1270
    %1328 = vmatprep.subr.bf16.mxu0 0
    %1329 = vmatpush2.bf16.msra.mxu0 0
    %1330 = vmatprep.subr.bf16.mxu0 0
    %1331 = vmatpush2.bf16.msra.mxu0 0
    %1332 = vmatprep.subr.bf16.mxu0 0
    %1333 = vmatpush2.bf16.msra.mxu0 0
    %1334 = vmatprep.subr.bf16.mxu0 0
    %1335 = vmatpush2.bf16.msra.mxu0 0
    %1336 = vmatprep.subr.bf16.mxu0 0
    %1337 = vmatpush2.bf16.msra.mxu0 0
    %1338 = vmatprep.subr.bf16.mxu0 0
    %1339 = vmatpush2.bf16.msra.mxu0 0
    %1340 = vmatprep.subr.bf16.mxu0 0
    %1341 = vmatpush2.bf16.msra.mxu0 0
    %1342 = vmatprep.subr.bf16.mxu0 0
    %1343 = vmatpush2.bf16.msra.mxu0 0
    %1344 = vmatprep.mubr.bf16.mxu0 0
    %1345 = vmatmul.mubr.bf16.gmra.mxu0 %v923
    %v1346 = vpop.f32.mrf.mxu0
    %v1347 = vadd.f32 0.0, %v1346
    %v1348 = vpop.f32.mrf.mxu0
    %v1349 = vpop.f32.mrf.mxu0
    %v1350 = vpop.f32.mrf.mxu0
    %1351 = vdwg.mxu0
    %v1352 = vmul.f32 %v1347, %v1153
    %v1353 = vsel %vm1172, %v1263, -1e+30
    %v1354 = vsel %vm1173, %v1264, -1e+30
    %v1355 = vsel %vm1174, %v1263, -1e+30
    %v1356 = vsel %vm1175, %v1264, -1e+30
    %v1357 = vsel %vm93, %v1353, -inf
    %v1358 = vsel %vm93, %v1354, -inf
    %v1359 = vmax.f32 %v1357, %v1358
    %v1360 = vrot.slane %v1359, 4
    %v1361 = vmax.f32 %v1359, %v1360
    %v1362 = vrot.slane %v1361, 2
    %v1363 = vmax.f32 %v1361, %v1362
    %v1364 = vrot.slane %v1363, 1
    %v1365 = vmax.f32 %v1363, %v1364
    %v1366 = vsel %vm93, %v1355, -inf
    %v1367 = vsel %vm93, %v1356, -inf
    %v1368 = vmax.f32 %v1366, %v1367
    %v1369 = vrot.slane %v1368, 4
    %v1370 = vmax.f32 %v1368, %v1369
    %v1371 = vrot.slane %v1370, 2
    %v1372 = vmax.f32 %v1370, %v1371
    %v1373 = vrot.slane %v1372, 1
    %v1374 = vmax.f32 %v1372, %v1373
    %v1375 = vsel %vm1214, %v1263, -1e+30
    %v1376 = vsel %vm1215, %v1264, -1e+30
    %v1377 = vsel %vm1216, %v1263, -1e+30
    %v1378 = vsel %vm1217, %v1264, -1e+30
    %v1379 = vsel %vm93, %v1375, -inf
    %v1380 = vsel %vm93, %v1376, -inf
    %v1381 = vmax.f32 %v1379, %v1380
    %v1382 = vrot.slane %v1381, 4
    %v1383 = vmax.f32 %v1381, %v1382
    %v1384 = vrot.slane %v1383, 2
    %v1385 = vmax.f32 %v1383, %v1384
    %v1386 = vrot.slane %v1385, 1
    %v1387 = vmax.f32 %v1385, %v1386
    %v1388 = vsel %vm93, %v1377, -inf
    %v1389 = vsel %vm93, %v1378, -inf
    %v1390 = vmax.f32 %v1388, %v1389
    %v1391 = vrot.slane %v1390, 4
    %v1392 = vmax.f32 %v1390, %v1391
    %v1393 = vrot.slane %v1392, 2
    %v1394 = vmax.f32 %v1392, %v1393
    %v1395 = vrot.slane %v1394, 1
    %v1396 = vmax.f32 %v1394, %v1395
    %v1399 = vsel %vm1248, %v1374, %v1365
    %v1401 = vsel %vm1245, %v1399, 0.0
    %v1404 = vsel %vm1248, %v1396, %v1387
    %v1406 = vsel %vm1257, %v1404, 0.0
    %v1407 = vmul.f32 %v403, %v1029
    %v1408 = vmul.f32 %v404, %v1034
    %v1409 = vmul.f32 %v1407, %v1041
    %v1410 = vmul.f32 %v1408, %v1046
    %v1411 = vpack.c.bf16 %v1410, %v1409
    %v1412 = vmul.f32 %v1407, %v1054
    %v1413 = vmul.f32 %v1408, %v1059
    %v1414 = vpack.c.bf16 %v1413, %v1412
    %1415 = vmatprep.subr.bf16.mxu0 0
    %1416 = vmatpush1.bf16.msra.mxu0 0
    %1417 = vmatprep.subr.bf16.mxu0 0
    %1418 = vmatpush1.bf16.msra.mxu0 0
    %1419 = vmatprep.subr.bf16.mxu0 0
    %1420 = vmatpush1.bf16.msra.mxu0 0
    %1421 = vmatprep.subr.bf16.mxu0 0
    %1422 = vmatpush1.bf16.msra.mxu0 0
    %1423 = vmatprep.subr.bf16.mxu0 0
    %1424 = vmatpush1.bf16.msra.mxu0 0
    %1425 = vmatprep.subr.bf16.mxu0 0
    %1426 = vmatpush1.bf16.msra.mxu0 0
    %1427 = vmatprep.subr.bf16.mxu0 0
    %1428 = vmatpush1.bf16.msra.mxu0 0
    %1429 = vmatprep.subr.bf16.mxu0 0
    %1430 = vmatpush1.bf16.msra.mxu0 %v1411
    %1431 = vmatprep.subr.bf16.mxu0 0
    %1432 = vmatpush2.bf16.msra.mxu0 0
    %1433 = vmatprep.subr.bf16.mxu0 0
    %1434 = vmatpush2.bf16.msra.mxu0 0
    %1435 = vmatprep.subr.bf16.mxu0 0
    %1436 = vmatpush2.bf16.msra.mxu0 0
    %1437 = vmatprep.subr.bf16.mxu0 0
    %1438 = vmatpush2.bf16.msra.mxu0 0
    %1439 = vmatprep.subr.bf16.mxu0 0
    %1440 = vmatpush2.bf16.msra.mxu0 0
    %1441 = vmatprep.subr.bf16.mxu0 0
    %1442 = vmatpush2.bf16.msra.mxu0 0
    %1443 = vmatprep.subr.bf16.mxu0 0
    %1444 = vmatpush2.bf16.msra.mxu0 0
    %1445 = vmatprep.subr.bf16.mxu0 0
    %1446 = vmatpush2.bf16.msra.mxu0 0
    %1447 = vmatprep.mubr.bf16.mxu0 0
    %1448 = vmatmul.mubr.bf16.gmra.mxu0 %v923
    %v1449 = vpop.f32.mrf.mxu0
    %v1450 = vadd.f32 0.0, %v1449
    %v1451 = vpop.f32.mrf.mxu0
    %v1452 = vpop.f32.mrf.mxu0
    %v1453 = vpop.f32.mrf.mxu0
    %1454 = vdwg.mxu0
    %v1455 = vmul.f32 %v1450, %v1107
    %1456 = vmatprep.subr.bf16.mxu0 0
    %1457 = vmatpush1.bf16.msra.mxu0 0
    %1458 = vmatprep.subr.bf16.mxu0 0
    %1459 = vmatpush1.bf16.msra.mxu0 0
    %1460 = vmatprep.subr.bf16.mxu0 0
    %1461 = vmatpush1.bf16.msra.mxu0 0
    %1462 = vmatprep.subr.bf16.mxu0 0
    %1463 = vmatpush1.bf16.msra.mxu0 0
    %1464 = vmatprep.subr.bf16.mxu0 0
    %1465 = vmatpush1.bf16.msra.mxu0 0
    %1466 = vmatprep.subr.bf16.mxu0 0
    %1467 = vmatpush1.bf16.msra.mxu0 0
    %1468 = vmatprep.subr.bf16.mxu0 0
    %1469 = vmatpush1.bf16.msra.mxu0 0
    %1470 = vmatprep.subr.bf16.mxu0 0
    %1471 = vmatpush1.bf16.msra.mxu0 %v1414
    %1472 = vmatprep.subr.bf16.mxu0 0
    %1473 = vmatpush2.bf16.msra.mxu0 0
    %1474 = vmatprep.subr.bf16.mxu0 0
    %1475 = vmatpush2.bf16.msra.mxu0 0
    %1476 = vmatprep.subr.bf16.mxu0 0
    %1477 = vmatpush2.bf16.msra.mxu0 0
    %1478 = vmatprep.subr.bf16.mxu0 0
    %1479 = vmatpush2.bf16.msra.mxu0 0
    %1480 = vmatprep.subr.bf16.mxu0 0
    %1481 = vmatpush2.bf16.msra.mxu0 0
    %1482 = vmatprep.subr.bf16.mxu0 0
    %1483 = vmatpush2.bf16.msra.mxu0 0
    %1484 = vmatprep.subr.bf16.mxu0 0
    %1485 = vmatpush2.bf16.msra.mxu0 0
    %1486 = vmatprep.subr.bf16.mxu0 0
    %1487 = vmatpush2.bf16.msra.mxu0 0
    %1488 = vmatprep.mubr.bf16.mxu0 0
    %1489 = vmatmul.mubr.bf16.gmra.mxu0 %v923
    %v1490 = vpop.f32.mrf.mxu0
    %v1491 = vadd.f32 0.0, %v1490
    %v1492 = vpop.f32.mrf.mxu0
    %v1493 = vpop.f32.mrf.mxu0
    %v1494 = vpop.f32.mrf.mxu0
    %1495 = vdwg.mxu0
    %v1496 = vmul.f32 %v1491, %v1153
    %v1497 = vsel %vm1172, %v1407, -1e+30
    %v1498 = vsel %vm1173, %v1408, -1e+30
    %v1499 = vsel %vm1174, %v1407, -1e+30
    %v1500 = vsel %vm1175, %v1408, -1e+30
    %v1501 = vsel %vm93, %v1497, -inf
    %v1502 = vsel %vm93, %v1498, -inf
    %v1503 = vmax.f32 %v1501, %v1502
    %v1504 = vrot.slane %v1503, 4
    %v1505 = vmax.f32 %v1503, %v1504
    %v1506 = vrot.slane %v1505, 2
    %v1507 = vmax.f32 %v1505, %v1506
    %v1508 = vrot.slane %v1507, 1
    %v1509 = vmax.f32 %v1507, %v1508
    %v1510 = vsel %vm93, %v1499, -inf
    %v1511 = vsel %vm93, %v1500, -inf
    %v1512 = vmax.f32 %v1510, %v1511
    %v1513 = vrot.slane %v1512, 4
    %v1514 = vmax.f32 %v1512, %v1513
    %v1515 = vrot.slane %v1514, 2
    %v1516 = vmax.f32 %v1514, %v1515
    %v1517 = vrot.slane %v1516, 1
    %v1518 = vmax.f32 %v1516, %v1517
    %v1519 = vsel %vm1214, %v1407, -1e+30
    %v1520 = vsel %vm1215, %v1408, -1e+30
    %v1521 = vsel %vm1216, %v1407, -1e+30
    %v1522 = vsel %vm1217, %v1408, -1e+30
    %v1523 = vsel %vm93, %v1519, -inf
    %v1524 = vsel %vm93, %v1520, -inf
    %v1525 = vmax.f32 %v1523, %v1524
    %v1526 = vrot.slane %v1525, 4
    %v1527 = vmax.f32 %v1525, %v1526
    %v1528 = vrot.slane %v1527, 2
    %v1529 = vmax.f32 %v1527, %v1528
    %v1530 = vrot.slane %v1529, 1
    %v1531 = vmax.f32 %v1529, %v1530
    %v1532 = vsel %vm93, %v1521, -inf
    %v1533 = vsel %vm93, %v1522, -inf
    %v1534 = vmax.f32 %v1532, %v1533
    %v1535 = vrot.slane %v1534, 4
    %v1536 = vmax.f32 %v1534, %v1535
    %v1537 = vrot.slane %v1536, 2
    %v1538 = vmax.f32 %v1536, %v1537
    %v1539 = vrot.slane %v1538, 1
    %v1540 = vmax.f32 %v1538, %v1539
    %v1543 = vsel %vm1248, %v1518, %v1509
    %v1545 = vsel %vm1245, %v1543, 0.0
    %v1548 = vsel %vm1248, %v1540, %v1531
    %v1550 = vsel %vm1257, %v1548, 0.0
    %v1551 = vld [vmem:[%s13] sm:$0xf]
    %v1552 = vld [vmem:[%s13 + $0x4] sm:$0xf]
    %v1553 = vld [vmem:[%s13 + $0x8] sm:$0xf]
    %v1554 = vld [vmem:[%s13 + $0xc] sm:$0xf]
    %v1555 = vld [vmem:[%s13 + $0x10] sm:$0xf]
    %v1556 = vld [vmem:[%s13 + $0x14] sm:$0xf]
    %v1557 = vld [vmem:[%s13 + $0x18] sm:$0xf]
    %v1558 = vld [vmem:[%s13 + $0x1c] sm:$0xf]
    %v1559 = vld [vmem:[%s13 + $0x20] sm:$0xf]
    %v1560 = vld [vmem:[%s13 + $0x24] sm:$0xf]
    %v1561 = vld [vmem:[%s13 + $0x28] sm:$0xf]
    %v1562 = vld [vmem:[%s13 + $0x2c] sm:$0xf]
    %v1563 = vpack.c.bf16 %v1109, %v1109
    %v1564 = vpack.c.bf16 %v1311, %v1311
    %v1567 = vunpack.c.l.b16 %v1553
    %v1568 = vunpack.c.l.b16 %v1554
    %v1569 = vpack.c.b16 %v1568, %v1567
    %v1572 = vsel %vm93, %v1564, 0
    %1574 = vmatprep.subr.bf16.mxu0 0
    %1575 = vmatpush1.bf16.msra.mxu0 0
    %1576 = vmatprep.subr.bf16.mxu0 0
    %1577 = vmatpush1.bf16.msra.mxu0 0
    %1578 = vmatprep.subr.bf16.mxu0 0
    %1579 = vmatpush1.bf16.msra.mxu0 0
    %1580 = vmatprep.subr.bf16.mxu0 0
    %1581 = vmatpush1.bf16.msra.mxu0 0
    %1582 = vmatprep.subr.bf16.mxu0 0
    %1583 = vmatpush1.bf16.msra.mxu0 0
    %1584 = vmatprep.subr.bf16.mxu0 0
    %1585 = vmatpush1.bf16.msra.mxu0 0
    %1586 = vmatprep.subr.bf16.mxu0 0
    %1587 = vmatpush1.bf16.msra.mxu0 0
    %1588 = vmatprep.subr.bf16.mxu0 0
    %1589 = vmatpush1.bf16.msra.mxu0 %v1569
    %1590 = vmatprep.subr.bf16.mxu0 0
    %1591 = vmatpush2.bf16.msra.mxu0 0
    %1592 = vmatprep.subr.bf16.mxu0 0
    %1593 = vmatpush2.bf16.msra.mxu0 0
    %1594 = vmatprep.subr.bf16.mxu0 0
    %1595 = vmatpush2.bf16.msra.mxu0 0
    %1596 = vmatprep.subr.bf16.mxu0 0
    %1597 = vmatpush2.bf16.msra.mxu0 0
    %1598 = vmatprep.subr.bf16.mxu0 0
    %1599 = vmatpush2.bf16.msra.mxu0 0
    %1600 = vmatprep.subr.bf16.mxu0 0
    %1601 = vmatpush2.bf16.msra.mxu0 0
    %1602 = vmatprep.subr.bf16.mxu0 0
    %1603 = vmatpush2.bf16.msra.mxu0 0
    %1604 = vmatprep.subr.bf16.mxu0 0
    %1605 = vmatpush2.bf16.msra.mxu0 0
    %1606 = vmatprep.mubr.bf16.mxu0 0
    %1607 = vmatmul.mubr.bf16.gmra.mxu0 %v1572
    %v1608 = vpop.f32.mrf.mxu0
    %v1609 = vadd.f32 0.0, %v1608
    %v1610 = vpop.f32.mrf.mxu0
    %v1611 = vpop.f32.mrf.mxu0
    %v1612 = vpop.f32.mrf.mxu0
    %1613 = vdwg.mxu0
    %v1616 = vunpack.c.l.b16 %v1551
    %v1617 = vunpack.c.l.b16 %v1552
    %v1618 = vpack.c.b16 %v1617, %v1616
    %v1621 = vsel %vm93, %v1563, 0
    %1623 = vmatprep.subr.bf16.mxu0 0
    %1624 = vmatpush1.bf16.msra.mxu0 0
    %1625 = vmatprep.subr.bf16.mxu0 0
    %1626 = vmatpush1.bf16.msra.mxu0 0
    %1627 = vmatprep.subr.bf16.mxu0 0
    %1628 = vmatpush1.bf16.msra.mxu0 0
    %1629 = vmatprep.subr.bf16.mxu0 0
    %1630 = vmatpush1.bf16.msra.mxu0 0
    %1631 = vmatprep.subr.bf16.mxu0 0
    %1632 = vmatpush1.bf16.msra.mxu0 0
    %1633 = vmatprep.subr.bf16.mxu0 0
    %1634 = vmatpush1.bf16.msra.mxu0 0
    %1635 = vmatprep.subr.bf16.mxu0 0
    %1636 = vmatpush1.bf16.msra.mxu0 0
    %1637 = vmatprep.subr.bf16.mxu0 0
    %1638 = vmatpush1.bf16.msra.mxu0 %v1618
    %1639 = vmatprep.subr.bf16.mxu0 0
    %1640 = vmatpush2.bf16.msra.mxu0 0
    %1641 = vmatprep.subr.bf16.mxu0 0
    %1642 = vmatpush2.bf16.msra.mxu0 0
    %1643 = vmatprep.subr.bf16.mxu0 0
    %1644 = vmatpush2.bf16.msra.mxu0 0
    %1645 = vmatprep.subr.bf16.mxu0 0
    %1646 = vmatpush2.bf16.msra.mxu0 0
    %1647 = vmatprep.subr.bf16.mxu0 0
    %1648 = vmatpush2.bf16.msra.mxu0 0
    %1649 = vmatprep.subr.bf16.mxu0 0
    %1650 = vmatpush2.bf16.msra.mxu0 0
    %1651 = vmatprep.subr.bf16.mxu0 0
    %1652 = vmatpush2.bf16.msra.mxu0 0
    %1653 = vmatprep.subr.bf16.mxu0 0
    %1654 = vmatpush2.bf16.msra.mxu0 0
    %1655 = vmatprep.mubr.bf16.mxu0 0
    %1656 = vmatmul.mubr.bf16.gmra.mxu0 %v1621
    %v1657 = vpop.f32.mrf.mxu0
    %v1658 = vadd.f32 %v1609, %v1657
    %v1659 = vpop.f32.mrf.mxu0
    %v1660 = vpop.f32.mrf.mxu0
    %v1661 = vpop.f32.mrf.mxu0
    %1662 = vdwg.mxu0
    %v1663 = vpack.c.bf16 %v1455, %v1455
    %v1666 = vunpack.c.l.b16 %v1555
    %v1667 = vunpack.c.l.b16 %v1556
    %v1668 = vpack.c.b16 %v1667, %v1666
    %v1671 = vsel %vm93, %v1663, 0
    %1673 = vmatprep.subr.bf16.mxu0 0
    %1674 = vmatpush1.bf16.msra.mxu0 0
    %1675 = vmatprep.subr.bf16.mxu0 0
    %1676 = vmatpush1.bf16.msra.mxu0 0
    %1677 = vmatprep.subr.bf16.mxu0 0
    %1678 = vmatpush1.bf16.msra.mxu0 0
    %1679 = vmatprep.subr.bf16.mxu0 0
    %1680 = vmatpush1.bf16.msra.mxu0 0
    %1681 = vmatprep.subr.bf16.mxu0 0
    %1682 = vmatpush1.bf16.msra.mxu0 0
    %1683 = vmatprep.subr.bf16.mxu0 0
    %1684 = vmatpush1.bf16.msra.mxu0 0
    %1685 = vmatprep.subr.bf16.mxu0 0
    %1686 = vmatpush1.bf16.msra.mxu0 0
    %1687 = vmatprep.subr.bf16.mxu0 0
    %1688 = vmatpush1.bf16.msra.mxu0 %v1668
    %1689 = vmatprep.subr.bf16.mxu0 0
    %1690 = vmatpush2.bf16.msra.mxu0 0
    %1691 = vmatprep.subr.bf16.mxu0 0
    %1692 = vmatpush2.bf16.msra.mxu0 0
    %1693 = vmatprep.subr.bf16.mxu0 0
    %1694 = vmatpush2.bf16.msra.mxu0 0
    %1695 = vmatprep.subr.bf16.mxu0 0
    %1696 = vmatpush2.bf16.msra.mxu0 0
    %1697 = vmatprep.subr.bf16.mxu0 0
    %1698 = vmatpush2.bf16.msra.mxu0 0
    %1699 = vmatprep.subr.bf16.mxu0 0
    %1700 = vmatpush2.bf16.msra.mxu0 0
    %1701 = vmatprep.subr.bf16.mxu0 0
    %1702 = vmatpush2.bf16.msra.mxu0 0
    %1703 = vmatprep.subr.bf16.mxu0 0
    %1704 = vmatpush2.bf16.msra.mxu0 0
    %1705 = vmatprep.mubr.bf16.mxu0 0
    %1706 = vmatmul.mubr.bf16.gmra.mxu0 %v1671
    %v1707 = vpop.f32.mrf.mxu0
    %v1708 = vadd.f32 0.0, %v1707
    %v1709 = vpop.f32.mrf.mxu0
    %v1710 = vpop.f32.mrf.mxu0
    %v1711 = vpop.f32.mrf.mxu0
    %1712 = vdwg.mxu0
    %v1713 = vadd.f32 %v1658, %v1708
    %v1714 = vpack.c.bf16 %v1251, %v1251
    %v1717 = vunpack.c.l.b16 %v1557
    %v1718 = vunpack.c.l.b16 %v1558
    %v1719 = vpack.c.b16 %v1718, %v1717
    %v1722 = vsel %vm93, %v1714, 0
    %1724 = vmatprep.subr.bf16.mxu0 0
    %1725 = vmatpush1.bf16.msra.mxu0 0
    %1726 = vmatprep.subr.bf16.mxu0 0
    %1727 = vmatpush1.bf16.msra.mxu0 0
    %1728 = vmatprep.subr.bf16.mxu0 0
    %1729 = vmatpush1.bf16.msra.mxu0 0
    %1730 = vmatprep.subr.bf16.mxu0 0
    %1731 = vmatpush1.bf16.msra.mxu0 0
    %1732 = vmatprep.subr.bf16.mxu0 0
    %1733 = vmatpush1.bf16.msra.mxu0 0
    %1734 = vmatprep.subr.bf16.mxu0 0
    %1735 = vmatpush1.bf16.msra.mxu0 0
    %1736 = vmatprep.subr.bf16.mxu0 0
    %1737 = vmatpush1.bf16.msra.mxu0 0
    %1738 = vmatprep.subr.bf16.mxu0 0
    %1739 = vmatpush1.bf16.msra.mxu0 %v1719
    %1740 = vmatprep.subr.bf16.mxu0 0
    %1741 = vmatpush2.bf16.msra.mxu0 0
    %1742 = vmatprep.subr.bf16.mxu0 0
    %1743 = vmatpush2.bf16.msra.mxu0 0
    %1744 = vmatprep.subr.bf16.mxu0 0
    %1745 = vmatpush2.bf16.msra.mxu0 0
    %1746 = vmatprep.subr.bf16.mxu0 0
    %1747 = vmatpush2.bf16.msra.mxu0 0
    %1748 = vmatprep.subr.bf16.mxu0 0
    %1749 = vmatpush2.bf16.msra.mxu0 0
    %1750 = vmatprep.subr.bf16.mxu0 0
    %1751 = vmatpush2.bf16.msra.mxu0 0
    %1752 = vmatprep.subr.bf16.mxu0 0
    %1753 = vmatpush2.bf16.msra.mxu0 0
    %1754 = vmatprep.subr.bf16.mxu0 0
    %1755 = vmatpush2.bf16.msra.mxu0 0
    %1756 = vmatprep.mubr.bf16.mxu0 0
    %1757 = vmatmul.mubr.bf16.gmra.mxu0 %v1722
    %v1758 = vpop.f32.mrf.mxu0
    %v1759 = vadd.f32 0.0, %v1758
    %v1760 = vpop.f32.mrf.mxu0
    %v1761 = vpop.f32.mrf.mxu0
    %v1762 = vpop.f32.mrf.mxu0
    %1763 = vdwg.mxu0
    %v1764 = vadd.f32 %v1713, %v1759
    %v1765 = vpack.c.bf16 %v1401, %v1401
    %v1768 = vunpack.c.l.b16 %v1559
    %v1769 = vunpack.c.l.b16 %v1560
    %v1770 = vpack.c.b16 %v1769, %v1768
    %v1773 = vsel %vm93, %v1765, 0
    %1775 = vmatprep.subr.bf16.mxu0 0
    %1776 = vmatpush1.bf16.msra.mxu0 0
    %1777 = vmatprep.subr.bf16.mxu0 0
    %1778 = vmatpush1.bf16.msra.mxu0 0
    %1779 = vmatprep.subr.bf16.mxu0 0
    %1780 = vmatpush1.bf16.msra.mxu0 0
    %1781 = vmatprep.subr.bf16.mxu0 0
    %1782 = vmatpush1.bf16.msra.mxu0 0
    %1783 = vmatprep.subr.bf16.mxu0 0
    %1784 = vmatpush1.bf16.msra.mxu0 0
    %1785 = vmatprep.subr.bf16.mxu0 0
    %1786 = vmatpush1.bf16.msra.mxu0 0
    %1787 = vmatprep.subr.bf16.mxu0 0
    %1788 = vmatpush1.bf16.msra.mxu0 0
    %1789 = vmatprep.subr.bf16.mxu0 0
    %1790 = vmatpush1.bf16.msra.mxu0 %v1770
    %1791 = vmatprep.subr.bf16.mxu0 0
    %1792 = vmatpush2.bf16.msra.mxu0 0
    %1793 = vmatprep.subr.bf16.mxu0 0
    %1794 = vmatpush2.bf16.msra.mxu0 0
    %1795 = vmatprep.subr.bf16.mxu0 0
    %1796 = vmatpush2.bf16.msra.mxu0 0
    %1797 = vmatprep.subr.bf16.mxu0 0
    %1798 = vmatpush2.bf16.msra.mxu0 0
    %1799 = vmatprep.subr.bf16.mxu0 0
    %1800 = vmatpush2.bf16.msra.mxu0 0
    %1801 = vmatprep.subr.bf16.mxu0 0
    %1802 = vmatpush2.bf16.msra.mxu0 0
    %1803 = vmatprep.subr.bf16.mxu0 0
    %1804 = vmatpush2.bf16.msra.mxu0 0
    %1805 = vmatprep.subr.bf16.mxu0 0
    %1806 = vmatpush2.bf16.msra.mxu0 0
    %1807 = vmatprep.mubr.bf16.mxu0 0
    %1808 = vmatmul.mubr.bf16.gmra.mxu0 %v1773
    %v1809 = vpop.f32.mrf.mxu0
    %v1810 = vadd.f32 0.0, %v1809
    %v1811 = vpop.f32.mrf.mxu0
    %v1812 = vpop.f32.mrf.mxu0
    %v1813 = vpop.f32.mrf.mxu0
    %1814 = vdwg.mxu0
    %v1815 = vadd.f32 %v1764, %v1810
    %v1816 = vpack.c.bf16 %v1545, %v1545
    %v1819 = vunpack.c.l.b16 %v1561
    %v1820 = vunpack.c.l.b16 %v1562
    %v1821 = vpack.c.b16 %v1820, %v1819
    %v1824 = vsel %vm93, %v1816, 0
    %1826 = vmatprep.subr.bf16.mxu0 0
    %1827 = vmatpush1.bf16.msra.mxu0 0
    %1828 = vmatprep.subr.bf16.mxu0 0
    %1829 = vmatpush1.bf16.msra.mxu0 0
    %1830 = vmatprep.subr.bf16.mxu0 0
    %1831 = vmatpush1.bf16.msra.mxu0 0
    %1832 = vmatprep.subr.bf16.mxu0 0
    %1833 = vmatpush1.bf16.msra.mxu0 0
    %1834 = vmatprep.subr.bf16.mxu0 0
    %1835 = vmatpush1.bf16.msra.mxu0 0
    %1836 = vmatprep.subr.bf16.mxu0 0
    %1837 = vmatpush1.bf16.msra.mxu0 0
    %1838 = vmatprep.subr.bf16.mxu0 0
    %1839 = vmatpush1.bf16.msra.mxu0 0
    %1840 = vmatprep.subr.bf16.mxu0 0
    %1841 = vmatpush1.bf16.msra.mxu0 %v1821
    %1842 = vmatprep.subr.bf16.mxu0 0
    %1843 = vmatpush2.bf16.msra.mxu0 0
    %1844 = vmatprep.subr.bf16.mxu0 0
    %1845 = vmatpush2.bf16.msra.mxu0 0
    %1846 = vmatprep.subr.bf16.mxu0 0
    %1847 = vmatpush2.bf16.msra.mxu0 0
    %1848 = vmatprep.subr.bf16.mxu0 0
    %1849 = vmatpush2.bf16.msra.mxu0 0
    %1850 = vmatprep.subr.bf16.mxu0 0
    %1851 = vmatpush2.bf16.msra.mxu0 0
    %1852 = vmatprep.subr.bf16.mxu0 0
    %1853 = vmatpush2.bf16.msra.mxu0 0
    %1854 = vmatprep.subr.bf16.mxu0 0
    %1855 = vmatpush2.bf16.msra.mxu0 0
    %1856 = vmatprep.subr.bf16.mxu0 0
    %1857 = vmatpush2.bf16.msra.mxu0 0
    %1858 = vmatprep.mubr.bf16.mxu0 0
    %1859 = vmatmul.mubr.bf16.gmra.mxu0 %v1824
    %v1860 = vpop.f32.mrf.mxu0
    %v1861 = vadd.f32 0.0, %v1860
    %v1862 = vpop.f32.mrf.mxu0
    %v1863 = vpop.f32.mrf.mxu0
    %v1864 = vpop.f32.mrf.mxu0
    %1865 = vdwg.mxu0
    %v1866 = vadd.f32 %v1815, %v1861
    %v1867 = vld [vmem:[%s14] sm:$0x1]
    %v1869 = vlaneseq
    %v1870 = vshrl.u32 %v1869, 7
    %v1871 = vsub.s32 0, %v1870
    %v1872 = vrot.slane %v1867, %v1871
    %v1874 = vadd.f32 %v1866, %v1872
    %v1875 = vmax.f32 %v1874, 0.0
    %v1876 = vpack.c.bf16 %v1875, %v1875
    %v1877 = vld [vmem:[%s15] sm:$0xf]
    %v1878 = vld [vmem:[%s15 + $0x4] sm:$0xf]
    %v1879 = vld [vmem:[%s15 + $0x8] sm:$0xf]
    %v1880 = vld [vmem:[%s15 + $0xc] sm:$0xf]
    %v1881 = vld [vmem:[%s15 + $0x10] sm:$0xf]
    %v1882 = vld [vmem:[%s15 + $0x14] sm:$0xf]
    %v1883 = vld [vmem:[%s16] sm:$0x1]
    %v1885 = vlaneseq
    %v1886 = vshrl.u32 %v1885, 7
    %v1887 = vsub.s32 0, %v1886
    %v1888 = vrot.slane %v1883, %v1887
    %v1896 = vunpack.c.l.b16 %v1877
    %v1897 = vunpack.c.l.b16 %v1878
    %v1898 = vunpack.c.l.b16 %v1879
    %v1899 = vunpack.c.l.b16 %v1880
    %v1900 = vunpack.c.l.b16 %v1881
    %v1901 = vunpack.c.l.b16 %v1882
    %v1902 = vpack.c.b16 %v1897, %v1896
    %v1903 = vpack.c.b16 %v1899, %v1898
    %v1904 = vpack.c.b16 %v1901, %v1900
    %vm1908 = vcmask 392192
    %v1910 = vsel %vm1908, %v1876, 0
    %1912 = vmatprep.subr.bf16.mxu0 0
    %1913 = vmatpush1.bf16.msra.mxu0 0
    %1914 = vmatprep.subr.bf16.mxu0 0
    %1915 = vmatpush1.bf16.msra.mxu0 0
    %1916 = vmatprep.subr.bf16.mxu0 0
    %1917 = vmatpush1.bf16.msra.mxu0 0
    %1918 = vmatprep.subr.bf16.mxu0 0
    %1919 = vmatpush1.bf16.msra.mxu0 0
    %1920 = vmatprep.subr.bf16.mxu0 0
    %1921 = vmatpush1.bf16.msra.mxu0 0
    %1922 = vmatprep.subr.bf16.mxu0 0
    %1923 = vmatpush1.bf16.msra.mxu0 %v1904
    %1924 = vmatprep.subr.bf16.mxu0 0
    %1925 = vmatpush1.bf16.msra.mxu0 %v1903
    %1926 = vmatprep.subr.bf16.mxu0 0
    %1927 = vmatpush1.bf16.msra.mxu0 %v1902
    %1928 = vmatprep.subr.bf16.mxu0 0
    %1929 = vmatpush2.bf16.msra.mxu0 0
    %1930 = vmatprep.subr.bf16.mxu0 0
    %1931 = vmatpush2.bf16.msra.mxu0 0
    %1932 = vmatprep.subr.bf16.mxu0 0
    %1933 = vmatpush2.bf16.msra.mxu0 0
    %1934 = vmatprep.subr.bf16.mxu0 0
    %1935 = vmatpush2.bf16.msra.mxu0 0
    %1936 = vmatprep.subr.bf16.mxu0 0
    %1937 = vmatpush2.bf16.msra.mxu0 0
    %1938 = vmatprep.subr.bf16.mxu0 0
    %1939 = vmatpush2.bf16.msra.mxu0 0
    %1940 = vmatprep.subr.bf16.mxu0 0
    %1941 = vmatpush2.bf16.msra.mxu0 0
    %1942 = vmatprep.subr.bf16.mxu0 0
    %1943 = vmatpush2.bf16.msra.mxu0 0
    %1944 = vmatprep.mubr.bf16.mxu0 0
    %1945 = vmatmul.mubr.bf16.gmra.mxu0 %v1910
    %v1946 = vpop.f32.mrf.mxu0
    %v1947 = vadd.f32 %v1888, %v1946
    %v1948 = vpop.f32.mrf.mxu0
    %v1949 = vpop.f32.mrf.mxu0
    %v1950 = vpop.f32.mrf.mxu0
    %1951 = vdwg.mxu0
    %v1952 = vmax.f32 %v1947, 0.0
    %v1953 = vpack.c.bf16 %v1952, %v1952
    %v1954 = vld [vmem:[%s17] sm:$0xf]
    %v1955 = vld [vmem:[%s17 + $0x4] sm:$0xf]
    %v1956 = vld [vmem:[%s17 + $0x8] sm:$0xf]
    %v1957 = vld [vmem:[%s18] sm:$0x1]
    %v1959 = vlaneseq
    %v1960 = vshrl.u32 %v1959, 7
    %v1961 = vsub.s32 0, %v1960
    %v1962 = vrot.slane %v1957, %v1961
    %v1967 = vunpack.c.l.b16 %v1954
    %v1968 = vunpack.c.l.b16 %v1955
    %v1969 = vunpack.c.l.b16 %v1956
    %v1970 = vpack.c.b16 %v1968, %v1967
    %v1971 = vpack.c.b16 %v1969, %v1969
    %vm1973 = vcmask 195584
    %v1975 = vsel %vm1973, %v1953, 0
    %vm1977 = vcmask 1043456
    %v1979 = vsel %vm1977, %v1971, 0
    %1981 = vmatprep.subr.bf16.mxu0 0
    %1982 = vmatpush1.bf16.msra.mxu0 0
    %1983 = vmatprep.subr.bf16.mxu0 0
    %1984 = vmatpush1.bf16.msra.mxu0 0
    %1985 = vmatprep.subr.bf16.mxu0 0
    %1986 = vmatpush1.bf16.msra.mxu0 0
    %1987 = vmatprep.subr.bf16.mxu0 0
    %1988 = vmatpush1.bf16.msra.mxu0 0
    %1989 = vmatprep.subr.bf16.mxu0 0
    %1990 = vmatpush1.bf16.msra.mxu0 0
    %1991 = vmatprep.subr.bf16.mxu0 0
    %1992 = vmatpush1.bf16.msra.mxu0 0
    %1993 = vmatprep.subr.bf16.mxu0 0
    %1994 = vmatpush1.bf16.msra.mxu0 %v1979
    %1995 = vmatprep.subr.bf16.mxu0 0
    %1996 = vmatpush1.bf16.msra.mxu0 %v1970
    %1997 = vmatprep.subr.bf16.mxu0 0
    %1998 = vmatpush2.bf16.msra.mxu0 0
    %1999 = vmatprep.subr.bf16.mxu0 0
    %2000 = vmatpush2.bf16.msra.mxu0 0
    %2001 = vmatprep.subr.bf16.mxu0 0
    %2002 = vmatpush2.bf16.msra.mxu0 0
    %2003 = vmatprep.subr.bf16.mxu0 0
    %2004 = vmatpush2.bf16.msra.mxu0 0
    %2005 = vmatprep.subr.bf16.mxu0 0
    %2006 = vmatpush2.bf16.msra.mxu0 0
    %2007 = vmatprep.subr.bf16.mxu0 0
    %2008 = vmatpush2.bf16.msra.mxu0 0
    %2009 = vmatprep.subr.bf16.mxu0 0
    %2010 = vmatpush2.bf16.msra.mxu0 0
    %2011 = vmatprep.subr.bf16.mxu0 0
    %2012 = vmatpush2.bf16.msra.mxu0 0
    %2013 = vmatprep.mubr.bf16.mxu0 0
    %2014 = vmatmul.mubr.bf16.gmra.mxu0 %v1975
    %v2015 = vpop.f32.mrf.mxu0
    %v2016 = vadd.f32 %v1962, %v2015
    %v2017 = vpop.f32.mrf.mxu0
    %v2018 = vpop.f32.mrf.mxu0
    %v2019 = vpop.f32.mrf.mxu0
    %2020 = vdwg.mxu0
    %v2021 = vpack.c.bf16 %v1155, %v1155
    %v2022 = vpack.c.bf16 %v1352, %v1352
    %v2024 = vsel %vm93, %v2022, 0
    %2026 = vmatprep.subr.bf16.mxu0 0
    %2027 = vmatpush1.bf16.msra.mxu0 0
    %2028 = vmatprep.subr.bf16.mxu0 0
    %2029 = vmatpush1.bf16.msra.mxu0 0
    %2030 = vmatprep.subr.bf16.mxu0 0
    %2031 = vmatpush1.bf16.msra.mxu0 0
    %2032 = vmatprep.subr.bf16.mxu0 0
    %2033 = vmatpush1.bf16.msra.mxu0 0
    %2034 = vmatprep.subr.bf16.mxu0 0
    %2035 = vmatpush1.bf16.msra.mxu0 0
    %2036 = vmatprep.subr.bf16.mxu0 0
    %2037 = vmatpush1.bf16.msra.mxu0 0
    %2038 = vmatprep.subr.bf16.mxu0 0
    %2039 = vmatpush1.bf16.msra.mxu0 0
    %2040 = vmatprep.subr.bf16.mxu0 0
    %2041 = vmatpush1.bf16.msra.mxu0 %v1569
    %2042 = vmatprep.subr.bf16.mxu0 0
    %2043 = vmatpush2.bf16.msra.mxu0 0
    %2044 = vmatprep.subr.bf16.mxu0 0
    %2045 = vmatpush2.bf16.msra.mxu0 0
    %2046 = vmatprep.subr.bf16.mxu0 0
    %2047 = vmatpush2.bf16.msra.mxu0 0
    %2048 = vmatprep.subr.bf16.mxu0 0
    %2049 = vmatpush2.bf16.msra.mxu0 0
    %2050 = vmatprep.subr.bf16.mxu0 0
    %2051 = vmatpush2.bf16.msra.mxu0 0
    %2052 = vmatprep.subr.bf16.mxu0 0
    %2053 = vmatpush2.bf16.msra.mxu0 0
    %2054 = vmatprep.subr.bf16.mxu0 0
    %2055 = vmatpush2.bf16.msra.mxu0 0
    %2056 = vmatprep.subr.bf16.mxu0 0
    %2057 = vmatpush2.bf16.msra.mxu0 0
    %2058 = vmatprep.mubr.bf16.mxu0 0
    %2059 = vmatmul.mubr.bf16.gmra.mxu0 %v2024
    %v2060 = vpop.f32.mrf.mxu0
    %v2061 = vadd.f32 0.0, %v2060
    %v2062 = vpop.f32.mrf.mxu0
    %v2063 = vpop.f32.mrf.mxu0
    %v2064 = vpop.f32.mrf.mxu0
    %2065 = vdwg.mxu0
    %v2067 = vsel %vm93, %v2021, 0
    %2069 = vmatprep.subr.bf16.mxu0 0
    %2070 = vmatpush1.bf16.msra.mxu0 0
    %2071 = vmatprep.subr.bf16.mxu0 0
    %2072 = vmatpush1.bf16.msra.mxu0 0
    %2073 = vmatprep.subr.bf16.mxu0 0
    %2074 = vmatpush1.bf16.msra.mxu0 0
    %2075 = vmatprep.subr.bf16.mxu0 0
    %2076 = vmatpush1.bf16.msra.mxu0 0
    %2077 = vmatprep.subr.bf16.mxu0 0
    %2078 = vmatpush1.bf16.msra.mxu0 0
    %2079 = vmatprep.subr.bf16.mxu0 0
    %2080 = vmatpush1.bf16.msra.mxu0 0
    %2081 = vmatprep.subr.bf16.mxu0 0
    %2082 = vmatpush1.bf16.msra.mxu0 0
    %2083 = vmatprep.subr.bf16.mxu0 0
    %2084 = vmatpush1.bf16.msra.mxu0 %v1618
    %2085 = vmatprep.subr.bf16.mxu0 0
    %2086 = vmatpush2.bf16.msra.mxu0 0
    %2087 = vmatprep.subr.bf16.mxu0 0
    %2088 = vmatpush2.bf16.msra.mxu0 0
    %2089 = vmatprep.subr.bf16.mxu0 0
    %2090 = vmatpush2.bf16.msra.mxu0 0
    %2091 = vmatprep.subr.bf16.mxu0 0
    %2092 = vmatpush2.bf16.msra.mxu0 0
    %2093 = vmatprep.subr.bf16.mxu0 0
    %2094 = vmatpush2.bf16.msra.mxu0 0
    %2095 = vmatprep.subr.bf16.mxu0 0
    %2096 = vmatpush2.bf16.msra.mxu0 0
    %2097 = vmatprep.subr.bf16.mxu0 0
    %2098 = vmatpush2.bf16.msra.mxu0 0
    %2099 = vmatprep.subr.bf16.mxu0 0
    %2100 = vmatpush2.bf16.msra.mxu0 0
    %2101 = vmatprep.mubr.bf16.mxu0 0
    %2102 = vmatmul.mubr.bf16.gmra.mxu0 %v2067
    %v2103 = vpop.f32.mrf.mxu0
    %v2104 = vadd.f32 %v2061, %v2103
    %v2105 = vpop.f32.mrf.mxu0
    %v2106 = vpop.f32.mrf.mxu0
    %v2107 = vpop.f32.mrf.mxu0
    %2108 = vdwg.mxu0
    %v2109 = vpack.c.bf16 %v1496, %v1496
    %v2111 = vsel %vm93, %v2109, 0
    %2113 = vmatprep.subr.bf16.mxu0 0
    %2114 = vmatpush1.bf16.msra.mxu0 0
    %2115 = vmatprep.subr.bf16.mxu0 0
    %2116 = vmatpush1.bf16.msra.mxu0 0
    %2117 = vmatprep.subr.bf16.mxu0 0
    %2118 = vmatpush1.bf16.msra.mxu0 0
    %2119 = vmatprep.subr.bf16.mxu0 0
    %2120 = vmatpush1.bf16.msra.mxu0 0
    %2121 = vmatprep.subr.bf16.mxu0 0
    %2122 = vmatpush1.bf16.msra.mxu0 0
    %2123 = vmatprep.subr.bf16.mxu0 0
    %2124 = vmatpush1.bf16.msra.mxu0 0
    %2125 = vmatprep.subr.bf16.mxu0 0
    %2126 = vmatpush1.bf16.msra.mxu0 0
    %2127 = vmatprep.subr.bf16.mxu0 0
    %2128 = vmatpush1.bf16.msra.mxu0 %v1668
    %2129 = vmatprep.subr.bf16.mxu0 0
    %2130 = vmatpush2.bf16.msra.mxu0 0
    %2131 = vmatprep.subr.bf16.mxu0 0
    %2132 = vmatpush2.bf16.msra.mxu0 0
    %2133 = vmatprep.subr.bf16.mxu0 0
    %2134 = vmatpush2.bf16.msra.mxu0 0
    %2135 = vmatprep.subr.bf16.mxu0 0
    %2136 = vmatpush2.bf16.msra.mxu0 0
    %2137 = vmatprep.subr.bf16.mxu0 0
    %2138 = vmatpush2.bf16.msra.mxu0 0
    %2139 = vmatprep.subr.bf16.mxu0 0
    %2140 = vmatpush2.bf16.msra.mxu0 0
    %2141 = vmatprep.subr.bf16.mxu0 0
    %2142 = vmatpush2.bf16.msra.mxu0 0
    %2143 = vmatprep.subr.bf16.mxu0 0
    %2144 = vmatpush2.bf16.msra.mxu0 0
    %2145 = vmatprep.mubr.bf16.mxu0 0
    %2146 = vmatmul.mubr.bf16.gmra.mxu0 %v2111
    %v2147 = vpop.f32.mrf.mxu0
    %v2148 = vadd.f32 0.0, %v2147
    %v2149 = vpop.f32.mrf.mxu0
    %v2150 = vpop.f32.mrf.mxu0
    %v2151 = vpop.f32.mrf.mxu0
    %2152 = vdwg.mxu0
    %v2153 = vadd.f32 %v2104, %v2148
    %v2154 = vpack.c.bf16 %v1262, %v1262
    %v2156 = vsel %vm93, %v2154, 0
    %2158 = vmatprep.subr.bf16.mxu0 0
    %2159 = vmatpush1.bf16.msra.mxu0 0
    %2160 = vmatprep.subr.bf16.mxu0 0
    %2161 = vmatpush1.bf16.msra.mxu0 0
    %2162 = vmatprep.subr.bf16.mxu0 0
    %2163 = vmatpush1.bf16.msra.mxu0 0
    %2164 = vmatprep.subr.bf16.mxu0 0
    %2165 = vmatpush1.bf16.msra.mxu0 0
    %2166 = vmatprep.subr.bf16.mxu0 0
    %2167 = vmatpush1.bf16.msra.mxu0 0
    %2168 = vmatprep.subr.bf16.mxu0 0
    %2169 = vmatpush1.bf16.msra.mxu0 0
    %2170 = vmatprep.subr.bf16.mxu0 0
    %2171 = vmatpush1.bf16.msra.mxu0 0
    %2172 = vmatprep.subr.bf16.mxu0 0
    %2173 = vmatpush1.bf16.msra.mxu0 %v1719
    %2174 = vmatprep.subr.bf16.mxu0 0
    %2175 = vmatpush2.bf16.msra.mxu0 0
    %2176 = vmatprep.subr.bf16.mxu0 0
    %2177 = vmatpush2.bf16.msra.mxu0 0
    %2178 = vmatprep.subr.bf16.mxu0 0
    %2179 = vmatpush2.bf16.msra.mxu0 0
    %2180 = vmatprep.subr.bf16.mxu0 0
    %2181 = vmatpush2.bf16.msra.mxu0 0
    %2182 = vmatprep.subr.bf16.mxu0 0
    %2183 = vmatpush2.bf16.msra.mxu0 0
    %2184 = vmatprep.subr.bf16.mxu0 0
    %2185 = vmatpush2.bf16.msra.mxu0 0
    %2186 = vmatprep.subr.bf16.mxu0 0
    %2187 = vmatpush2.bf16.msra.mxu0 0
    %2188 = vmatprep.subr.bf16.mxu0 0
    %2189 = vmatpush2.bf16.msra.mxu0 0
    %2190 = vmatprep.mubr.bf16.mxu0 0
    %2191 = vmatmul.mubr.bf16.gmra.mxu0 %v2156
    %v2192 = vpop.f32.mrf.mxu0
    %v2193 = vadd.f32 0.0, %v2192
    %v2194 = vpop.f32.mrf.mxu0
    %v2195 = vpop.f32.mrf.mxu0
    %v2196 = vpop.f32.mrf.mxu0
    %2197 = vdwg.mxu0
    %v2198 = vadd.f32 %v2153, %v2193
    %v2199 = vpack.c.bf16 %v1406, %v1406
    %v2201 = vsel %vm93, %v2199, 0
    %2203 = vmatprep.subr.bf16.mxu0 0
    %2204 = vmatpush1.bf16.msra.mxu0 0
    %2205 = vmatprep.subr.bf16.mxu0 0
    %2206 = vmatpush1.bf16.msra.mxu0 0
    %2207 = vmatprep.subr.bf16.mxu0 0
    %2208 = vmatpush1.bf16.msra.mxu0 0
    %2209 = vmatprep.subr.bf16.mxu0 0
    %2210 = vmatpush1.bf16.msra.mxu0 0
    %2211 = vmatprep.subr.bf16.mxu0 0
    %2212 = vmatpush1.bf16.msra.mxu0 0
    %2213 = vmatprep.subr.bf16.mxu0 0
    %2214 = vmatpush1.bf16.msra.mxu0 0
    %2215 = vmatprep.subr.bf16.mxu0 0
    %2216 = vmatpush1.bf16.msra.mxu0 0
    %2217 = vmatprep.subr.bf16.mxu0 0
    %2218 = vmatpush1.bf16.msra.mxu0 %v1770
    %2219 = vmatprep.subr.bf16.mxu0 0
    %2220 = vmatpush2.bf16.msra.mxu0 0
    %2221 = vmatprep.subr.bf16.mxu0 0
    %2222 = vmatpush2.bf16.msra.mxu0 0
    %2223 = vmatprep.subr.bf16.mxu0 0
    %2224 = vmatpush2.bf16.msra.mxu0 0
    %2225 = vmatprep.subr.bf16.mxu0 0
    %2226 = vmatpush2.bf16.msra.mxu0 0
    %2227 = vmatprep.subr.bf16.mxu0 0
    %2228 = vmatpush2.bf16.msra.mxu0 0
    %2229 = vmatprep.subr.bf16.mxu0 0
    %2230 = vmatpush2.bf16.msra.mxu0 0
    %2231 = vmatprep.subr.bf16.mxu0 0
    %2232 = vmatpush2.bf16.msra.mxu0 0
    %2233 = vmatprep.subr.bf16.mxu0 0
    %2234 = vmatpush2.bf16.msra.mxu0 0
    %2235 = vmatprep.mubr.bf16.mxu0 0
    %2236 = vmatmul.mubr.bf16.gmra.mxu0 %v2201
    %v2237 = vpop.f32.mrf.mxu0
    %v2238 = vadd.f32 0.0, %v2237
    %v2239 = vpop.f32.mrf.mxu0
    %v2240 = vpop.f32.mrf.mxu0
    %v2241 = vpop.f32.mrf.mxu0
    %2242 = vdwg.mxu0
    %v2243 = vadd.f32 %v2198, %v2238
    %v2244 = vpack.c.bf16 %v1550, %v1550
    %v2246 = vsel %vm93, %v2244, 0
    %2248 = vmatprep.subr.bf16.mxu0 0
    %2249 = vmatpush1.bf16.msra.mxu0 0
    %2250 = vmatprep.subr.bf16.mxu0 0
    %2251 = vmatpush1.bf16.msra.mxu0 0
    %2252 = vmatprep.subr.bf16.mxu0 0
    %2253 = vmatpush1.bf16.msra.mxu0 0
    %2254 = vmatprep.subr.bf16.mxu0 0
    %2255 = vmatpush1.bf16.msra.mxu0 0
    %2256 = vmatprep.subr.bf16.mxu0 0
    %2257 = vmatpush1.bf16.msra.mxu0 0
    %2258 = vmatprep.subr.bf16.mxu0 0
    %2259 = vmatpush1.bf16.msra.mxu0 0
    %2260 = vmatprep.subr.bf16.mxu0 0
    %2261 = vmatpush1.bf16.msra.mxu0 0
    %2262 = vmatprep.subr.bf16.mxu0 0
    %2263 = vmatpush1.bf16.msra.mxu0 %v1821
    %2264 = vmatprep.subr.bf16.mxu0 0
    %2265 = vmatpush2.bf16.msra.mxu0 0
    %2266 = vmatprep.subr.bf16.mxu0 0
    %2267 = vmatpush2.bf16.msra.mxu0 0
    %2268 = vmatprep.subr.bf16.mxu0 0
    %2269 = vmatpush2.bf16.msra.mxu0 0
    %2270 = vmatprep.subr.bf16.mxu0 0
    %2271 = vmatpush2.bf16.msra.mxu0 0
    %2272 = vmatprep.subr.bf16.mxu0 0
    %2273 = vmatpush2.bf16.msra.mxu0 0
    %2274 = vmatprep.subr.bf16.mxu0 0
    %2275 = vmatpush2.bf16.msra.mxu0 0
    %2276 = vmatprep.subr.bf16.mxu0 0
    %2277 = vmatpush2.bf16.msra.mxu0 0
    %2278 = vmatprep.subr.bf16.mxu0 0
    %2279 = vmatpush2.bf16.msra.mxu0 0
    %2280 = vmatprep.mubr.bf16.mxu0 0
    %2281 = vmatmul.mubr.bf16.gmra.mxu0 %v2246
    %v2282 = vpop.f32.mrf.mxu0
    %v2283 = vadd.f32 0.0, %v2282
    %v2284 = vpop.f32.mrf.mxu0
    %v2285 = vpop.f32.mrf.mxu0
    %v2286 = vpop.f32.mrf.mxu0
    %2287 = vdwg.mxu0
    %v2288 = vadd.f32 %v2243, %v2283
    %v2289 = vadd.f32 %v2288, %v1872
    %v2290 = vmax.f32 %v2289, 0.0
    %v2291 = vpack.c.bf16 %v2290, %v2290
    %v2293 = vsel %vm1908, %v2291, 0
    %2295 = vmatprep.subr.bf16.mxu0 0
    %2296 = vmatpush1.bf16.msra.mxu0 0
    %2297 = vmatprep.subr.bf16.mxu0 0
    %2298 = vmatpush1.bf16.msra.mxu0 0
    %2299 = vmatprep.subr.bf16.mxu0 0
    %2300 = vmatpush1.bf16.msra.mxu0 0
    %2301 = vmatprep.subr.bf16.mxu0 0
    %2302 = vmatpush1.bf16.msra.mxu0 0
    %2303 = vmatprep.subr.bf16.mxu0 0
    %2304 = vmatpush1.bf16.msra.mxu0 0
    %2305 = vmatprep.subr.bf16.mxu0 0
    %2306 = vmatpush1.bf16.msra.mxu0 %v1904
    %2307 = vmatprep.subr.bf16.mxu0 0
    %2308 = vmatpush1.bf16.msra.mxu0 %v1903
    %2309 = vmatprep.subr.bf16.mxu0 0
    %2310 = vmatpush1.bf16.msra.mxu0 %v1902
    %2311 = vmatprep.subr.bf16.mxu0 0
    %2312 = vmatpush2.bf16.msra.mxu0 0
    %2313 = vmatprep.subr.bf16.mxu0 0
    %2314 = vmatpush2.bf16.msra.mxu0 0
    %2315 = vmatprep.subr.bf16.mxu0 0
    %2316 = vmatpush2.bf16.msra.mxu0 0
    %2317 = vmatprep.subr.bf16.mxu0 0
    %2318 = vmatpush2.bf16.msra.mxu0 0
    %2319 = vmatprep.subr.bf16.mxu0 0
    %2320 = vmatpush2.bf16.msra.mxu0 0
    %2321 = vmatprep.subr.bf16.mxu0 0
    %2322 = vmatpush2.bf16.msra.mxu0 0
    %2323 = vmatprep.subr.bf16.mxu0 0
    %2324 = vmatpush2.bf16.msra.mxu0 0
    %2325 = vmatprep.subr.bf16.mxu0 0
    %2326 = vmatpush2.bf16.msra.mxu0 0
    %2327 = vmatprep.mubr.bf16.mxu0 0
    %2328 = vmatmul.mubr.bf16.gmra.mxu0 %v2293
    %v2329 = vpop.f32.mrf.mxu0
    %v2330 = vadd.f32 %v1888, %v2329
    %v2331 = vpop.f32.mrf.mxu0
    %v2332 = vpop.f32.mrf.mxu0
    %v2333 = vpop.f32.mrf.mxu0
    %2334 = vdwg.mxu0
    %v2335 = vmax.f32 %v2330, 0.0
    %v2336 = vpack.c.bf16 %v2335, %v2335
    %v2338 = vsel %vm1973, %v2336, 0
    %2340 = vmatprep.subr.bf16.mxu0 0
    %2341 = vmatpush1.bf16.msra.mxu0 0
    %2342 = vmatprep.subr.bf16.mxu0 0
    %2343 = vmatpush1.bf16.msra.mxu0 0
    %2344 = vmatprep.subr.bf16.mxu0 0
    %2345 = vmatpush1.bf16.msra.mxu0 0
    %2346 = vmatprep.subr.bf16.mxu0 0
    %2347 = vmatpush1.bf16.msra.mxu0 0
    %2348 = vmatprep.subr.bf16.mxu0 0
    %2349 = vmatpush1.bf16.msra.mxu0 0
    %2350 = vmatprep.subr.bf16.mxu0 0
    %2351 = vmatpush1.bf16.msra.mxu0 0
    %2352 = vmatprep.subr.bf16.mxu0 0
    %2353 = vmatpush1.bf16.msra.mxu0 %v1979
    %2354 = vmatprep.subr.bf16.mxu0 0
    %2355 = vmatpush1.bf16.msra.mxu0 %v1970
    %2356 = vmatprep.subr.bf16.mxu0 0
    %2357 = vmatpush2.bf16.msra.mxu0 0
    %2358 = vmatprep.subr.bf16.mxu0 0
    %2359 = vmatpush2.bf16.msra.mxu0 0
    %2360 = vmatprep.subr.bf16.mxu0 0
    %2361 = vmatpush2.bf16.msra.mxu0 0
    %2362 = vmatprep.subr.bf16.mxu0 0
    %2363 = vmatpush2.bf16.msra.mxu0 0
    %2364 = vmatprep.subr.bf16.mxu0 0
    %2365 = vmatpush2.bf16.msra.mxu0 0
    %2366 = vmatprep.subr.bf16.mxu0 0
    %2367 = vmatpush2.bf16.msra.mxu0 0
    %2368 = vmatprep.subr.bf16.mxu0 0
    %2369 = vmatpush2.bf16.msra.mxu0 0
    %2370 = vmatprep.subr.bf16.mxu0 0
    %2371 = vmatpush2.bf16.msra.mxu0 0
    %2372 = vmatprep.mubr.bf16.mxu0 0
    %2373 = vmatmul.mubr.bf16.gmra.mxu0 %v2338
    %v2374 = vpop.f32.mrf.mxu0
    %v2375 = vadd.f32 %v1962, %v2374
    %v2376 = vpop.f32.mrf.mxu0
    %v2377 = vpop.f32.mrf.mxu0
    %v2378 = vpop.f32.mrf.mxu0
    %2379 = vdwg.mxu0
    %vm2380 = vcmask 17408
    %2381 = vst.msk [vmem:[#allocation3] sm:$0x3] %vm2380, %v2016
    %v2382 = vsel %vm2380, %v2375, 0.0
    %v2383 = vrot.slane %v2382, 4
    %v2384 = vadd.f32 %v2382, %v2383
    %v2385 = vrot.slane %v2384, 2
    %v2386 = vadd.f32 %v2384, %v2385
    %v2387 = vrot.slane %v2386, 1
    %v2388 = vadd.f32 %v2386, %v2387
    %v2389 = vrcp.pop 2.0
    %v2390 = vmul.f32 %v2388, %v2389
    %v2391 = vsub.f32 %v2390, %v2375
    %v2392 = vmul.f32 %v2391, %v2391
    %v2393 = vsel %vm2380, %v2392, 0.0
    %2394 = vadd.xlane.f32.xlu0 %v2393
    %v2395 = vpop.xlane.xlu0 %2394
    %vm2396 = vcmask 1041408
    %v2397 = vsel %vm2396, %v2395, 0.0
    %v2398 = vrot.slane %v2397, 4
    %v2399 = vadd.f32 %v2397, %v2398
    %v2400 = vrot.slane %v2399, 2
    %v2401 = vadd.f32 %v2399, %v2400
    %v2402 = vrot.slane %v2401, 1
    %v2403 = vadd.f32 %v2401, %v2402
    %v2404 = vrcp.pop 6.0
    %v2405 = vmul.f32 %v2403, %v2404
    %vm2406 = vcmask 0
    %2407 = vst.msk [vmem:[#allocation5] sm:$0x1] %vm2406, %v2405
    // Predicated region
    $region78: #{sagpool_readout_b.1} parent=1 // pred_check
      _
    $region79: #{sagpool_readout_b.1} parent=1 // pred_check_branch
      %2409 = sbr.rel (0) target = $region81
    $region80: #{sagpool_readout_b.1} parent=1 // pred_region
      %s2411 = ssub.s32 32, 32
      %2412 = vsyncadd [#allocation4], %s2411
      %s2414 = sshll.u32 [#allocation3], 4
      %s2415 = int_to_ptr.vmem [resolvable:$true] %s2414
      %2417 = dma.vmem_to_hbm [thread:$0]  %s2415, 32, %s19, [#allocation4]
    $region81: #{sagpool_readout_b.1} parent=1 // pred_fallthru
      _
    // Predicated region
    $region82: #{sagpool_readout_b.1} parent=1 // pred_check
      _
    $region83: #{sagpool_readout_b.1} parent=1 // pred_check_branch
      %2419 = sbr.rel (0) target = $region85
    $region84: #{sagpool_readout_b.1} parent=1 // pred_region
      %s2421 = ssub.s32 16, 16
      %2422 = vsyncadd [#allocation6], %s2421
      %s2424 = sshll.u32 [#allocation5], 4
      %s2425 = int_to_ptr.vmem [resolvable:$true] %s2424
      %2427 = dma.vmem_to_hbm [thread:$0]  %s2425, 16, %s20, [#allocation6]
    $region85: #{sagpool_readout_b.1} parent=1 // pred_fallthru
      _
    // Predicated region
    $region86: #{sagpool_readout_b.1} parent=1 // pred_check
      _
    $region87: #{sagpool_readout_b.1} parent=1 // pred_check_branch
      %2429 = sbr.rel (0) target = $region89
    $region88: #{sagpool_readout_b.1} parent=1 // pred_region
      %2430 = dma.done [#allocation4], 32
    $region89: #{sagpool_readout_b.1} parent=1 // pred_fallthru
      _
    // Predicated region
    $region90: #{sagpool_readout_b.1} parent=1 // pred_check
      _
    $region91: #{sagpool_readout_b.1} parent=1 // pred_check_branch
      %2432 = sbr.rel (0) target = $region93
    $region92: #{sagpool_readout_b.1} parent=1 // pred_region
      %2433 = dma.done [#allocation6], 16
    $region93: #{sagpool_readout_b.1} parent=1 // pred_fallthru
      _
    %2434 = vsyncpa [#allocation4], 1
    %2435 = vsyncpa [#allocation6], 1

</llo_original>
